<compile_context>
chip_gen: v7x
topology: tpu7x:2x2x1
jax: 0.10.0
libtpu: 0.0.40
codegen_flags: <defaults>
</compile_context>

<pallas_src>
import math

import jax
import jax.numpy as jnp
from jax import lax
from jax.experimental import pallas as pl
from jax.experimental.pallas import tpu as pltpu

# ----------------------- small synthetic BART config -----------------------
VOCAB = 50
VOCAB_PAD = pl.cdiv(VOCAB, 8) * 8      # pad vocab rows to a sublane multiple
D_MODEL = 32
N_HEADS = 4
HEAD_DIM = D_MODEL // N_HEADS
FFN_DIM = 64
N_LAYERS = 2
MAX_POS = 64
POS_OFFSET = 2          # BART learned-position-embedding offset
LN_EPS = 1e-5
NEG_INF = -1e9


# --------------------------- in-kernel helpers -----------------------------
def _layernorm(x, gamma, beta):
    # One-pass stats: independent sum and sum-of-squares reductions (the two
    # XLU pushes overlap instead of serializing mean -> centered-variance).
    inv_n = 1.0 / x.shape[-1]
    s1 = jnp.sum(x, axis=-1, keepdims=True)
    s2 = jnp.sum(x * x, axis=-1, keepdims=True)
    mu = s1 * inv_n
    var = s2 * inv_n - mu * mu
    return (x - mu) * lax.rsqrt(var + LN_EPS) * gamma + beta


def _gelu(x):
    # TODO(synk): HF BART uses exact (erf) GELU; tanh approximation kept so
    # the lowering stays on VPU/EUP ops only.
    c = math.sqrt(2.0 / math.pi)
    return 0.5 * x * (1.0 + jnp.tanh(c * (x + 0.044715 * x * x * x)))


def _bmm(a, b):
    """Leading-batch matmul (G,M,K)x(G,K,N)->(G,M,N), f32 accumulation."""
    return lax.dot_general(a, b, (((2,), (1,)), ((0,), (0,))),
                           preferred_element_type=jnp.float32)


def _bmm_nt(a, b):
    """Leading-batch matmul (G,M,K)x(G,N,K)->(G,M,N), f32 accumulation."""
    return lax.dot_general(a, b, (((2,), (2,)), ((0,), (0,))),
                           preferred_element_type=jnp.float32)


# --------------------------- gridded Pallas kernel --------------------------
def _encoder_kernel(lens_ref,                                   # SMEM (B,) i32
                    tok_ids_ref, tok_emb_ref, pos_ref, embg_ref, embb_ref,
                    wq_ref, wk_ref, wv_ref, bq_ref, bk_ref, bv_ref,
                    wo_ref, bo_ref, ln1g_ref, ln1b_ref,
                    w1_ref, b1_ref, w2_ref, b2_ref, ln2g_ref, ln2b_ref,
                    out_ref,
                    h_ref):                                     # VMEM (S, D) f32
    """Grid = (batch, N_LAYERS + 1); step 0 = embedding + LN, step l = layer l-1."""
    b = pl.program_id(0)
    l = pl.program_id(1)
    S, D = h_ref.shape
    H = N_HEADS

    @pl.when(l == 0)
    def _embed():
        # token gather as a one-hot MXU matmul (no XLA gather, no host take)
        toks = tok_ids_ref[0]                                   # (S, 1) i32
        V = tok_emb_ref.shape[0]
        onehot = (toks == lax.broadcasted_iota(jnp.int32, (S, V), 1)
                  ).astype(jnp.float32)                         # (S, V)
        tok_e = jnp.dot(onehot, tok_emb_ref[...],
                        preferred_element_type=jnp.float32)     # (S, D)
        h_ref[...] = _layernorm(tok_e + pos_ref[...],
                                embg_ref[...], embb_ref[...])

    @pl.when(l > 0)
    def _layer():
        x = h_ref[...]                                          # (S, D) f32
        x_bh = jnp.broadcast_to(x.astype(jnp.bfloat16)[None], (H, S, D))

        # head-major projections (attention scale folded into wq/bq host-side)
        qh = _bmm(x_bh, wq_ref[0]) + bq_ref[0]                  # (H, S, hd)
        kh = _bmm(x_bh, wk_ref[0]) + bk_ref[0]
        vh = _bmm(x_bh, wv_ref[0]) + bv_ref[0]

        # additive key bias built from src_lengths (scalar prefetch, SMEM)
        kpos = lax.broadcasted_iota(jnp.int32, (1, 1, S), 2)
        bias = jnp.where(kpos < lens_ref[b], 0.0, NEG_INF)      # (1, 1, S)

        scores = _bmm_nt(qh.astype(jnp.bfloat16),
                         kh.astype(jnp.bfloat16)) + bias        # (H, S, S)
        m = jnp.max(scores, axis=-1, keepdims=True)
        p = jnp.exp(scores - m)
        # denom >= 1 after max-subtraction, so the approximate reciprocal is
        # safe even for fully padded rows (src_length == 0).
        denom = jnp.sum(p, axis=-1, keepdims=True)
        p = p * pl.reciprocal(denom, approx=True)

        ctx = _bmm(p.astype(jnp.bfloat16), vh.astype(jnp.bfloat16))   # (H,S,hd)
        attn = jnp.sum(_bmm(ctx.astype(jnp.bfloat16), wo_ref[0]),
                       axis=0) + bo_ref[0]                            # (S, D)

        # residual + self_attn_layer_norm (post-LN)
        h1 = _layernorm(x + attn, ln1g_ref[0], ln1b_ref[0])

        # feed-forward
        f = jnp.dot(h1.astype(jnp.bfloat16), w1_ref[0],
                    preferred_element_type=jnp.float32) + b1_ref[0]
        f = _gelu(f)
        f = jnp.dot(f.astype(jnp.bfloat16), w2_ref[0],
                    preferred_element_type=jnp.float32) + b2_ref[0]

        # residual + final_layer_norm
        h_ref[...] = _layernorm(h1 + f, ln2g_ref[0], ln2b_ref[0])

    # hidden state l for batch b (distinct output block per grid step)
    out_ref[0, 0] = h_ref[...]


# ------------------------------ host wrappers -------------------------------
def init_params(key):
    """Deterministic synthetic BartEncoder parameters (layer-stacked, head-major)."""
    def nrm(k, shape, scale=0.02):
        return scale * jax.random.normal(k, shape, dtype=jnp.float32)

    keys = jax.random.split(key, 2 + N_LAYERS)
    tok_emb = nrm(keys[0], (VOCAB, D_MODEL))
    params = {
        # vocab rows padded to a sublane multiple; padded rows are never hit
        'tok_emb': jnp.zeros((VOCAB_PAD, D_MODEL), jnp.float32).at[:VOCAB].set(tok_emb),
        'pos_emb': nrm(keys[1], (MAX_POS + POS_OFFSET, D_MODEL)),
        'emb_ln_g': jnp.ones((1, D_MODEL), jnp.float32),
        'emb_ln_b': jnp.zeros((1, D_MODEL), jnp.float32),
    }

    scale = 1.0 / math.sqrt(HEAD_DIM)

    def in_heads(w):   # (D, D) -> (H, D, hd): head-major input projection
        return jnp.transpose(w.reshape(D_MODEL, N_HEADS, HEAD_DIM), (1, 0, 2))

    wq, wk, wv, wo, w1, w2 = [], [], [], [], [], []
    for li in range(N_LAYERS):
        lk = jax.random.split(keys[2 + li], 6)
        # 1/sqrt(head_dim) folded into the Q projection (one-time weight fold)
        wq.append(in_heads(nrm(lk[0], (D_MODEL, D_MODEL))) * scale)
        wk.append(in_heads(nrm(lk[1], (D_MODEL, D_MODEL))))
        wv.append(in_heads(nrm(lk[2], (D_MODEL, D_MODEL))))
        wo.append(nrm(lk[3], (D_MODEL, D_MODEL)).reshape(N_HEADS, HEAD_DIM, D_MODEL))
        w1.append(nrm(lk[4], (D_MODEL, FFN_DIM)))
        w2.append(nrm(lk[5], (FFN_DIM, D_MODEL)))

    # matmul slabs in bf16 (MXU-native); biases & LN params stay f32
    params['wq'] = jnp.stack(wq).astype(jnp.bfloat16)   # (L, H, D, hd)
    params['wk'] = jnp.stack(wk).astype(jnp.bfloat16)
    params['wv'] = jnp.stack(wv).astype(jnp.bfloat16)
    params['bq'] = jnp.zeros((N_LAYERS, N_HEADS, 1, HEAD_DIM), jnp.float32)  # scale-folded
    params['bk'] = jnp.zeros((N_LAYERS, N_HEADS, 1, HEAD_DIM), jnp.float32)
    params['bv'] = jnp.zeros((N_LAYERS, N_HEADS, 1, HEAD_DIM), jnp.float32)
    params['wo'] = jnp.stack(wo).astype(jnp.bfloat16)   # (L, H, hd, D)
    params['bo'] = jnp.zeros((N_LAYERS, 1, D_MODEL), jnp.float32)
    params['ln1_g'] = jnp.ones((N_LAYERS, 1, D_MODEL), jnp.float32)
    params['ln1_b'] = jnp.zeros((N_LAYERS, 1, D_MODEL), jnp.float32)
    params['w1'] = jnp.stack(w1).astype(jnp.bfloat16)   # (L, D, F)
    params['b1'] = jnp.zeros((N_LAYERS, 1, FFN_DIM), jnp.float32)
    params['w2'] = jnp.stack(w2).astype(jnp.bfloat16)   # (L, F, D)
    params['b2'] = jnp.zeros((N_LAYERS, 1, D_MODEL), jnp.float32)
    params['ln2_g'] = jnp.ones((N_LAYERS, 1, D_MODEL), jnp.float32)
    params['ln2_b'] = jnp.zeros((N_LAYERS, 1, D_MODEL), jnp.float32)
    return params


def copy_bart_encoder_forward(params, src_tokens, src_lengths):
    """Equivalent of CopyBartEncoder.forward.

    Returns (encoder_output, mask, hidden_states) with hidden_states =
    (embedding_output, layer_1_out, ..., layer_N_out).
    """
    B, S = src_tokens.shape
    H, HD, D, F, L = N_HEADS, HEAD_DIM, D_MODEL, FFN_DIM, N_LAYERS

    # seq_len_to_mask: (B, S) bool, True = valid position (returned to caller)
    mask = jnp.arange(S, dtype=src_lengths.dtype)[None, :] < src_lengths[:, None]

    tok_ids = src_tokens.astype(jnp.int32).reshape(B, S, 1)
    # TODO(synk): at real MAX_POS select pos rows via a BlockSpec index_map
    # instead of a host slice; at this size the static slice is free.
    pos_emb = params['pos_emb'][POS_OFFSET:POS_OFFSET + S]      # (S, D)

    args = (tok_ids, params['tok_emb'], pos_emb,
            params['emb_ln_g'], params['emb_ln_b'],
            params['wq'], params['wk'], params['wv'],
            params['bq'], params['bk'], params['bv'],
            params['wo'], params['bo'],
            params['ln1_g'], params['ln1_b'],
            params['w1'], params['b1'], params['w2'], params['b2'],
            params['ln2_g'], params['ln2_b'])

    fixed2 = lambda b, l, lens: (0, 0)
    per_layer3 = lambda b, l, lens: (jnp.maximum(l - 1, 0), 0, 0)
    per_layer4 = lambda b, l, lens: (jnp.maximum(l - 1, 0), 0, 0, 0)

    in_specs = [
        pl.BlockSpec((1, S, 1), lambda b, l, lens: (b, 0, 0)),   # tok_ids
        pl.BlockSpec((VOCAB_PAD, D), fixed2),                    # tok_emb table
        pl.BlockSpec((S, D), fixed2),                            # pos_emb
        pl.BlockSpec((1, D), fixed2),                            # emb_ln_g
        pl.BlockSpec((1, D), fixed2),                            # emb_ln_b
        pl.BlockSpec((1, H, D, HD), per_layer4),                 # wq (streamed/layer)
        pl.BlockSpec((1, H, D, HD), per_layer4),                 # wk
        pl.BlockSpec((1, H, D, HD), per_layer4),                 # wv
        pl.BlockSpec((1, H, 1, HD), per_layer4),                 # bq
        pl.BlockSpec((1, H, 1, HD), per_layer4),                 # bk
        pl.BlockSpec((1, H, 1, HD), per_layer4),                 # bv
        pl.BlockSpec((1, H, HD, D), per_layer4),                 # wo
        pl.BlockSpec((1, 1, D), per_layer3),                     # bo
        pl.BlockSpec((1, 1, D), per_layer3),                     # ln1_g
        pl.BlockSpec((1, 1, D), per_layer3),                     # ln1_b
        pl.BlockSpec((1, D, F), per_layer3),                     # w1
        pl.BlockSpec((1, 1, F), per_layer3),                     # b1
        pl.BlockSpec((1, F, D), per_layer3),                     # w2
        pl.BlockSpec((1, 1, D), per_layer3),                     # b2
        pl.BlockSpec((1, 1, D), per_layer3),                     # ln2_g
        pl.BlockSpec((1, 1, D), per_layer3),                     # ln2_b
    ]
    out_spec = pl.BlockSpec((1, 1, S, D), lambda b, l, lens: (l, b, 0, 0))

    # advisory cost hint for the XLA scheduler
    in_bytes = sum(int(a.size) * a.dtype.itemsize for a in args) + B * 4
    out_bytes = (L + 1) * B * S * D * 4
    flops = 2 * B * (S * VOCAB_PAD * D + L * (S * D * (4 * D + 2 * F) + 2 * S * S * D))
    transcendentals = B * (S + L * (H * S * S + S * F + 2 * S))

    out = pl.pallas_call(
        _encoder_kernel,
        out_shape=jax.ShapeDtypeStruct((L + 1, B, S, D), jnp.float32),
        grid_spec=pltpu.PrefetchScalarGridSpec(
            num_scalar_prefetch=1,
            grid=(B, L + 1),                       # batch parallel, layers arbitrary
            in_specs=in_specs,
            out_specs=out_spec,
            scratch_shapes=[pltpu.VMEM((S, D), jnp.float32)]),   # residual h carry
        compiler_params=pltpu.CompilerParams(
            dimension_semantics=("parallel", "arbitrary"),
            vmem_limit_bytes=32 * 1024 * 1024),
        cost_estimate=pl.CostEstimate(
            flops=flops, transcendentals=transcendentals,
            bytes_accessed=in_bytes + out_bytes),
    )(src_lengths.astype(jnp.int32), *args)

    hidden_states = tuple(out[i] for i in range(L + 1))
    encoder_output = hidden_states[-1]
    return encoder_output, mask, hidden_states


if __name__ == "__main__":
    key = jax.random.PRNGKey(0)
    pkey, tkey = jax.random.split(key)
    params = init_params(pkey)

    B, S = 2, 8
    src_tokens = jax.random.randint(tkey, (B, S), 1, VOCAB, dtype=jnp.int32)
    src_lengths = jnp.array([8, 5], dtype=jnp.int32)

    enc_out, mask, hidden_states = copy_bart_encoder_forward(
        params, src_tokens, src_lengths)

    jax.block_until_ready(enc_out)
    jax.block_until_ready(mask)
    jax.block_until_ready(hidden_states)

    assert enc_out.shape == (B, S, D_MODEL)
    assert mask.shape == (B, S) and mask.dtype == jnp.bool_
    assert len(hidden_states) == N_LAYERS + 1
    assert all(h.shape == (B, S, D_MODEL) for h in hidden_states)
    assert bool(jnp.all(jnp.isfinite(enc_out)))
    print("KERNEL_OK")
</pallas_src>

<mosaic_0001>
module attributes {stable_mosaic.version = 11 : i64} {
  func.func @_encoder_kernel(%arg0: i32, %arg1: i32, %arg2: memref<2xi32, #tpu.memory_space<smem>>, %arg3: memref<1x8x1xi32, #tpu.memory_space<vmem>>, %arg4: memref<56x32xf32, #tpu.memory_space<vmem>>, %arg5: memref<8x32xf32, #tpu.memory_space<vmem>>, %arg6: memref<1x32xf32, #tpu.memory_space<vmem>>, %arg7: memref<1x32xf32, #tpu.memory_space<vmem>>, %arg8: memref<1x4x32x8xbf16, #tpu.memory_space<vmem>>, %arg9: memref<1x4x32x8xbf16, #tpu.memory_space<vmem>>, %arg10: memref<1x4x32x8xbf16, #tpu.memory_space<vmem>>, %arg11: memref<1x4x1x8xf32, #tpu.memory_space<vmem>>, %arg12: memref<1x4x1x8xf32, #tpu.memory_space<vmem>>, %arg13: memref<1x4x1x8xf32, #tpu.memory_space<vmem>>, %arg14: memref<1x4x8x32xbf16, #tpu.memory_space<vmem>>, %arg15: memref<1x1x32xf32, #tpu.memory_space<vmem>>, %arg16: memref<1x1x32xf32, #tpu.memory_space<vmem>>, %arg17: memref<1x1x32xf32, #tpu.memory_space<vmem>>, %arg18: memref<1x32x64xbf16, #tpu.memory_space<vmem>>, %arg19: memref<1x1x64xf32, #tpu.memory_space<vmem>>, %arg20: memref<1x64x32xbf16, #tpu.memory_space<vmem>>, %arg21: memref<1x1x32xf32, #tpu.memory_space<vmem>>, %arg22: memref<1x1x32xf32, #tpu.memory_space<vmem>>, %arg23: memref<1x1x32xf32, #tpu.memory_space<vmem>>, %arg24: memref<1x1x8x32xf32, #tpu.memory_space<vmem>>, %arg25: memref<8x32xf32, #tpu.memory_space<vmem>>) attributes {dimension_semantics = [#tpu.dimension_semantics<parallel>, #tpu.dimension_semantics<arbitrary>], iteration_bounds = array<i64: 2, 3>, scalar_prefetch = 1 : i64, scratch_operands = 1 : i64, tpu.core_type = #tpu.core_type<tc>, window_params = [{transform_indices = @transform_0, window_bounds = array<i64: 1, 8, 1>}, {pipeline_mode = #tpu.pipeline_mode<synchronous>, transform_indices = @transform_1, window_bounds = array<i64: 56, 32>}, {pipeline_mode = #tpu.pipeline_mode<synchronous>, transform_indices = @transform_2, window_bounds = array<i64: 8, 32>}, {pipeline_mode = #tpu.pipeline_mode<synchronous>, transform_indices = @transform_3, window_bounds = array<i64: 1, 32>}, {pipeline_mode = #tpu.pipeline_mode<synchronous>, transform_indices = @transform_4, window_bounds = array<i64: 1, 32>}, {transform_indices = @transform_5, window_bounds = array<i64: 1, 4, 32, 8>}, {transform_indices = @transform_6, window_bounds = array<i64: 1, 4, 32, 8>}, {transform_indices = @transform_7, window_bounds = array<i64: 1, 4, 32, 8>}, {transform_indices = @transform_8, window_bounds = array<i64: 1, 4, 1, 8>}, {transform_indices = @transform_9, window_bounds = array<i64: 1, 4, 1, 8>}, {transform_indices = @transform_10, window_bounds = array<i64: 1, 4, 1, 8>}, {transform_indices = @transform_11, window_bounds = array<i64: 1, 4, 8, 32>}, {transform_indices = @transform_12, window_bounds = array<i64: 1, 1, 32>}, {transform_indices = @transform_13, window_bounds = array<i64: 1, 1, 32>}, {transform_indices = @transform_14, window_bounds = array<i64: 1, 1, 32>}, {transform_indices = @transform_15, window_bounds = array<i64: 1, 32, 64>}, {transform_indices = @transform_16, window_bounds = array<i64: 1, 1, 64>}, {transform_indices = @transform_17, window_bounds = array<i64: 1, 64, 32>}, {transform_indices = @transform_18, window_bounds = array<i64: 1, 1, 32>}, {transform_indices = @transform_19, window_bounds = array<i64: 1, 1, 32>}, {transform_indices = @transform_20, window_bounds = array<i64: 1, 1, 32>}, {transform_indices = @transform_21, window_bounds = array<i64: 1, 1, 8, 32>}]} {
    %c0_i32 = arith.constant 0 : i32
    %0 = arith.cmpi eq, %arg1, %c0_i32 : i32
    %1 = arith.extui %0 : i1 to i32
    %c0_i32_0 = arith.constant 0 : i32
    %2 = arith.cmpi ne, %1, %c0_i32_0 : i32
    scf.if %2 {
      %c0_8 = arith.constant 0 : index
      %c0_9 = arith.constant 0 : index
      %c0_10 = arith.constant 0 : index
      %10 = vector.load %arg3[%c0_8, %c0_9, %c0_10] : memref<1x8x1xi32, #tpu.memory_space<vmem>>, vector<1x8x1xi32>
      %11 = vector.shape_cast %10 : vector<1x8x1xi32> to vector<8x1xi32>
      %12 = tpu.iota {dimensions = array<i32: 1>} : vector<8x56xi32>
      %13 = vector.broadcast %11 : vector<8x1xi32> to vector<8x56xi32>
      %14 = arith.cmpi eq, %13, %12 : vector<8x56xi32>
      %15 = arith.extui %14 : vector<8x56xi1> to vector<8x56xi32>
      %16 = arith.sitofp %15 : vector<8x56xi32> to vector<8x56xf32>
      %c0_11 = arith.constant 0 : index
      %c0_12 = arith.constant 0 : index
      %17 = vector.load %arg4[%c0_11, %c0_12] : memref<56x32xf32, #tpu.memory_space<vmem>>, vector<56x32xf32>
      %cst = arith.constant dense<0.000000e+00> : vector<8x32xf32>
      %18 = tpu.matmul %16, %17, %cst {dimension_numbers = #tpu.dot_dimension_numbers<[1], [0], [0], [1], [0, 0, 1, 1], [], []>} : vector<8x56xf32>, vector<56x32xf32>, vector<8x32xf32> -> vector<8x32xf32>
      %c0_13 = arith.constant 0 : index
      %c0_14 = arith.constant 0 : index
      %19 = vector.load %arg5[%c0_13, %c0_14] : memref<8x32xf32, #tpu.memory_space<vmem>>, vector<8x32xf32>
      %20 = arith.addf %18, %19 : vector<8x32xf32>
      %c0_15 = arith.constant 0 : index
      %c0_16 = arith.constant 0 : index
      %21 = vector.load %arg6[%c0_15, %c0_16] : memref<1x32xf32, #tpu.memory_space<vmem>>, vector<1x32xf32>
      %c0_17 = arith.constant 0 : index
      %c0_18 = arith.constant 0 : index
      %22 = vector.load %arg7[%c0_17, %c0_18] : memref<1x32xf32, #tpu.memory_space<vmem>>, vector<1x32xf32>
      %cst_19 = arith.constant dense<0.000000e+00> : vector<8xf32>
      %23 = vector.multi_reduction <add>, %20, %cst_19 [1] : vector<8x32xf32> to vector<8xf32>
      %24 = vector.shape_cast %23 : vector<8xf32> to vector<8x1xf32>
      %25 = arith.mulf %20, %20 : vector<8x32xf32>
      %cst_20 = arith.constant dense<0.000000e+00> : vector<8xf32>
      %26 = vector.multi_reduction <add>, %25, %cst_20 [1] : vector<8x32xf32> to vector<8xf32>
      %27 = vector.shape_cast %26 : vector<8xf32> to vector<8x1xf32>
      %cst_21 = arith.constant 3.125000e-02 : f32
      %28 = vector.broadcast %cst_21 : f32 to vector<8x1xf32>
      %29 = arith.mulf %24, %28 : vector<8x1xf32>
      %cst_22 = arith.constant 3.125000e-02 : f32
      %30 = vector.broadcast %cst_22 : f32 to vector<8x1xf32>
      %31 = arith.mulf %27, %30 : vector<8x1xf32>
      %32 = arith.mulf %29, %29 : vector<8x1xf32>
      %33 = arith.subf %31, %32 : vector<8x1xf32>
      %34 = vector.broadcast %29 : vector<8x1xf32> to vector<8x32xf32>
      %35 = arith.subf %20, %34 : vector<8x32xf32>
      %cst_23 = arith.constant 9.99999974E-6 : f32
      %36 = vector.broadcast %cst_23 : f32 to vector<8x1xf32>
      %37 = arith.addf %33, %36 : vector<8x1xf32>
      %38 = math.rsqrt %37 : vector<8x1xf32>
      %39 = vector.broadcast %38 : vector<8x1xf32> to vector<8x32xf32>
      %40 = arith.mulf %35, %39 : vector<8x32xf32>
      %41 = vector.broadcast %21 : vector<1x32xf32> to vector<8x32xf32>
      %42 = arith.mulf %40, %41 : vector<8x32xf32>
      %43 = vector.broadcast %22 : vector<1x32xf32> to vector<8x32xf32>
      %44 = arith.addf %42, %43 : vector<8x32xf32>
      %c0_24 = arith.constant 0 : index
      %c0_25 = arith.constant 0 : index
      %45 = vector.load %arg25[%c0_24, %c0_25] : memref<8x32xf32, #tpu.memory_space<vmem>>, vector<8x32xf32>
      tpu.vector_store %arg25[%c0_24, %c0_25], %44 {strides = array<i32>} : memref<8x32xf32, #tpu.memory_space<vmem>>, vector<8x32xf32>,
    } else {
    }
    %c0_i32_1 = arith.constant 0 : i32
    %3 = arith.cmpi sgt, %arg1, %c0_i32_1 : i32
    %4 = arith.extui %3 : i1 to i32
    %c0_i32_2 = arith.constant 0 : i32
    %5 = arith.cmpi ne, %4, %c0_i32_2 : i32
    scf.if %5 {
      %c0_8 = arith.constant 0 : index
      %c0_9 = arith.constant 0 : index
      %10 = vector.load %arg25[%c0_8, %c0_9] : memref<8x32xf32, #tpu.memory_space<vmem>>, vector<8x32xf32>
      %11 = arith.truncf %10 : vector<8x32xf32> to vector<8x32xbf16>
      %12 = vector.shape_cast %11 : vector<8x32xbf16> to vector<1x8x32xbf16>
      %13 = vector.shape_cast %12 : vector<1x8x32xbf16> to vector<1x8x32xbf16>
      %14 = vector.broadcast %13 : vector<1x8x32xbf16> to vector<4x8x32xbf16>
      %c0_10 = arith.constant 0 : index
      %c0_11 = arith.constant 0 : index
      %c0_12 = arith.constant 0 : index
      %c0_13 = arith.constant 0 : index
      %15 = vector.load %arg8[%c0_10, %c0_11, %c0_12, %c0_13] : memref<1x4x32x8xbf16, #tpu.memory_space<vmem>>, vector<1x4x32x8xbf16>
      %16 = vector.shape_cast %15 : vector<1x4x32x8xbf16> to vector<4x32x8xbf16>
      %cst = arith.constant dense<0.000000e+00> : vector<4x8x8xf32>
      %17 = tpu.matmul %14, %16, %cst {dimension_numbers = #tpu.dot_dimension_numbers<[2], [1], [1], [2], [0, 0, 0, 1, 1, 2], [0], [0]>} : vector<4x8x32xbf16>, vector<4x32x8xbf16>, vector<4x8x8xf32> -> vector<4x8x8xf32>
      %c0_14 = arith.constant 0 : index
      %c0_15 = arith.constant 0 : index
      %c0_16 = arith.constant 0 : index
      %c0_17 = arith.constant 0 : index
      %18 = vector.load %arg11[%c0_14, %c0_15, %c0_16, %c0_17] : memref<1x4x1x8xf32, #tpu.memory_space<vmem>>, vector<1x4x1x8xf32>
      %19 = vector.shape_cast %18 : vector<1x4x1x8xf32> to vector<4x1x8xf32>
      %20 = vector.broadcast %19 : vector<4x1x8xf32> to vector<4x8x8xf32>
      %21 = arith.addf %17, %20 : vector<4x8x8xf32>
      %c0_18 = arith.constant 0 : index
      %c0_19 = arith.constant 0 : index
      %c0_20 = arith.constant 0 : index
      %c0_21 = arith.constant 0 : index
      %22 = vector.load %arg9[%c0_18, %c0_19, %c0_20, %c0_21] : memref<1x4x32x8xbf16, #tpu.memory_space<vmem>>, vector<1x4x32x8xbf16>
      %23 = vector.shape_cast %22 : vector<1x4x32x8xbf16> to vector<4x32x8xbf16>
      %cst_22 = arith.constant dense<0.000000e+00> : vector<4x8x8xf32>
      %24 = tpu.matmul %14, %23, %cst_22 {dimension_numbers = #tpu.dot_dimension_numbers<[2], [1], [1], [2], [0, 0, 0, 1, 1, 2], [0], [0]>} : vector<4x8x32xbf16>, vector<4x32x8xbf16>, vector<4x8x8xf32> -> vector<4x8x8xf32>
      %c0_23 = arith.constant 0 : index
      %c0_24 = arith.constant 0 : index
      %c0_25 = arith.constant 0 : index
      %c0_26 = arith.constant 0 : index
      %25 = vector.load %arg12[%c0_23, %c0_24, %c0_25, %c0_26] : memref<1x4x1x8xf32, #tpu.memory_space<vmem>>, vector<1x4x1x8xf32>
      %26 = vector.shape_cast %25 : vector<1x4x1x8xf32> to vector<4x1x8xf32>
      %27 = vector.broadcast %26 : vector<4x1x8xf32> to vector<4x8x8xf32>
      %28 = arith.addf %24, %27 : vector<4x8x8xf32>
      %c0_27 = arith.constant 0 : index
      %c0_28 = arith.constant 0 : index
      %c0_29 = arith.constant 0 : index
      %c0_30 = arith.constant 0 : index
      %29 = vector.load %arg10[%c0_27, %c0_28, %c0_29, %c0_30] : memref<1x4x32x8xbf16, #tpu.memory_space<vmem>>, vector<1x4x32x8xbf16>
      %30 = vector.shape_cast %29 : vector<1x4x32x8xbf16> to vector<4x32x8xbf16>
      %cst_31 = arith.constant dense<0.000000e+00> : vector<4x8x8xf32>
      %31 = tpu.matmul %14, %30, %cst_31 {dimension_numbers = #tpu.dot_dimension_numbers<[2], [1], [1], [2], [0, 0, 0, 1, 1, 2], [0], [0]>} : vector<4x8x32xbf16>, vector<4x32x8xbf16>, vector<4x8x8xf32> -> vector<4x8x8xf32>
      %c0_32 = arith.constant 0 : index
      %c0_33 = arith.constant 0 : index
      %c0_34 = arith.constant 0 : index
      %c0_35 = arith.constant 0 : index
      %32 = vector.load %arg13[%c0_32, %c0_33, %c0_34, %c0_35] : memref<1x4x1x8xf32, #tpu.memory_space<vmem>>, vector<1x4x1x8xf32>
      %33 = vector.shape_cast %32 : vector<1x4x1x8xf32> to vector<4x1x8xf32>
      %34 = vector.broadcast %33 : vector<4x1x8xf32> to vector<4x8x8xf32>
      %35 = arith.addf %31, %34 : vector<4x8x8xf32>
      %36 = tpu.iota {dimensions = array<i32: 2>} : vector<1x1x8xi32>
      %37 = arith.index_cast %arg0 : i32 to index
      %38 = memref.load %arg2[%37] : memref<2xi32, #tpu.memory_space<smem>>
      %39 = vector.broadcast %38 : i32 to vector<1x1x8xi32>
      %40 = arith.cmpi slt, %36, %39 : vector<1x1x8xi32>
      %cst_36 = arith.constant 0.000000e+00 : f32
      %cst_37 = arith.constant -1.000000e+09 : f32
      %41 = vector.broadcast %cst_36 : f32 to vector<1x1x8xf32>
      %42 = vector.broadcast %cst_37 : f32 to vector<1x1x8xf32>
      %43 = arith.select %40, %41, %42 : vector<1x1x8xi1>, vector<1x1x8xf32>
      %44 = arith.truncf %21 : vector<4x8x8xf32> to vector<4x8x8xbf16>
      %45 = arith.truncf %28 : vector<4x8x8xf32> to vector<4x8x8xbf16>
      %cst_38 = arith.constant dense<0.000000e+00> : vector<4x8x8xf32>
      %46 = tpu.matmul %44, %45, %cst_38 {dimension_numbers = #tpu.dot_dimension_numbers<[2], [2], [1], [1], [0, 0, 0, 1, 1, 1], [0], [0]>} : vector<4x8x8xbf16>, vector<4x8x8xbf16>, vector<4x8x8xf32> -> vector<4x8x8xf32>
      %47 = vector.broadcast %43 : vector<1x1x8xf32> to vector<4x8x8xf32>
      %48 = arith.addf %46, %47 : vector<4x8x8xf32>
      %cst_39 = arith.constant dense<0xFF800000> : vector<4x8xf32>
      %49 = vector.multi_reduction <maximumf>, %48, %cst_39 [2] : vector<4x8x8xf32> to vector<4x8xf32>
      %50 = vector.shape_cast %49 : vector<4x8xf32> to vector<4x8x1xf32>
      %51 = vector.broadcast %50 : vector<4x8x1xf32> to vector<4x8x8xf32>
      %52 = arith.subf %48, %51 : vector<4x8x8xf32>
      %53 = math.exp %52 : vector<4x8x8xf32>
      %cst_40 = arith.constant dense<0.000000e+00> : vector<4x8xf32>
      %54 = vector.multi_reduction <add>, %53, %cst_40 [2] : vector<4x8x8xf32> to vector<4x8xf32>
      %55 = vector.shape_cast %54 : vector<4x8xf32> to vector<4x8x1xf32>
      %56 = tpu.reciprocal %55 {approx = true} : vector<4x8x1xf32> -> vector<4x8x1xf32>
      %57 = vector.broadcast %56 : vector<4x8x1xf32> to vector<4x8x8xf32>
      %58 = arith.mulf %53, %57 : vector<4x8x8xf32>
      %59 = arith.truncf %58 : vector<4x8x8xf32> to vector<4x8x8xbf16>
      %60 = arith.truncf %35 : vector<4x8x8xf32> to vector<4x8x8xbf16>
      %cst_41 = arith.constant dense<0.000000e+00> : vector<4x8x8xf32>
      %61 = tpu.matmul %59, %60, %cst_41 {dimension_numbers = #tpu.dot_dimension_numbers<[2], [1], [1], [2], [0, 0, 0, 1, 1, 2], [0], [0]>} : vector<4x8x8xbf16>, vector<4x8x8xbf16>, vector<4x8x8xf32> -> vector<4x8x8xf32>
      %62 = arith.truncf %61 : vector<4x8x8xf32> to vector<4x8x8xbf16>
      %c0_42 = arith.constant 0 : index
      %c0_43 = arith.constant 0 : index
      %c0_44 = arith.constant 0 : index
      %c0_45 = arith.constant 0 : index
      %63 = vector.load %arg14[%c0_42, %c0_43, %c0_44, %c0_45] : memref<1x4x8x32xbf16, #tpu.memory_space<vmem>>, vector<1x4x8x32xbf16>
      %64 = vector.shape_cast %63 : vector<1x4x8x32xbf16> to vector<4x8x32xbf16>
      %cst_46 = arith.constant dense<0.000000e+00> : vector<4x8x32xf32>
      %65 = tpu.matmul %62, %64, %cst_46 {dimension_numbers = #tpu.dot_dimension_numbers<[2], [1], [1], [2], [0, 0, 0, 1, 1, 2], [0], [0]>} : vector<4x8x8xbf16>, vector<4x8x32xbf16>, vector<4x8x32xf32> -> vector<4x8x32xf32>
      %cst_47 = arith.constant dense<0.000000e+00> : vector<8x32xf32>
      %66 = vector.multi_reduction <add>, %65, %cst_47 [0] : vector<4x8x32xf32> to vector<8x32xf32>
      %c0_48 = arith.constant 0 : index
      %c0_49 = arith.constant 0 : index
      %c0_50 = arith.constant 0 : index
      %67 = vector.load %arg15[%c0_48, %c0_49, %c0_50] : memref<1x1x32xf32, #tpu.memory_space<vmem>>, vector<1x1x32xf32>
      %68 = vector.shape_cast %67 : vector<1x1x32xf32> to vector<1x32xf32>
      %69 = vector.broadcast %68 : vector<1x32xf32> to vector<8x32xf32>
      %70 = arith.addf %66, %69 : vector<8x32xf32>
      %71 = arith.addf %10, %70 : vector<8x32xf32>
      %c0_51 = arith.constant 0 : index
      %c0_52 = arith.constant 0 : index
      %c0_53 = arith.constant 0 : index
      %72 = vector.load %arg16[%c0_51, %c0_52, %c0_53] : memref<1x1x32xf32, #tpu.memory_space<vmem>>, vector<1x1x32xf32>
      %73 = vector.shape_cast %72 : vector<1x1x32xf32> to vector<1x32xf32>
      %c0_54 = arith.constant 0 : index
      %c0_55 = arith.constant 0 : index
      %c0_56 = arith.constant 0 : index
      %74 = vector.load %arg17[%c0_54, %c0_55, %c0_56] : memref<1x1x32xf32, #tpu.memory_space<vmem>>, vector<1x1x32xf32>
      %75 = vector.shape_cast %74 : vector<1x1x32xf32> to vector<1x32xf32>
      %cst_57 = arith.constant dense<0.000000e+00> : vector<8xf32>
      %76 = vector.multi_reduction <add>, %71, %cst_57 [1] : vector<8x32xf32> to vector<8xf32>
      %77 = vector.shape_cast %76 : vector<8xf32> to vector<8x1xf32>
      %78 = arith.mulf %71, %71 : vector<8x32xf32>
      %cst_58 = arith.constant dense<0.000000e+00> : vector<8xf32>
      %79 = vector.multi_reduction <add>, %78, %cst_58 [1] : vector<8x32xf32> to vector<8xf32>
      %80 = vector.shape_cast %79 : vector<8xf32> to vector<8x1xf32>
      %cst_59 = arith.constant 3.125000e-02 : f32
      %81 = vector.broadcast %cst_59 : f32 to vector<8x1xf32>
      %82 = arith.mulf %77, %81 : vector<8x1xf32>
      %cst_60 = arith.constant 3.125000e-02 : f32
      %83 = vector.broadcast %cst_60 : f32 to vector<8x1xf32>
      %84 = arith.mulf %80, %83 : vector<8x1xf32>
      %85 = arith.mulf %82, %82 : vector<8x1xf32>
      %86 = arith.subf %84, %85 : vector<8x1xf32>
      %87 = vector.broadcast %82 : vector<8x1xf32> to vector<8x32xf32>
      %88 = arith.subf %71, %87 : vector<8x32xf32>
      %cst_61 = arith.constant 9.99999974E-6 : f32
      %89 = vector.broadcast %cst_61 : f32 to vector<8x1xf32>
      %90 = arith.addf %86, %89 : vector<8x1xf32>
      %91 = math.rsqrt %90 : vector<8x1xf32>
      %92 = vector.broadcast %91 : vector<8x1xf32> to vector<8x32xf32>
      %93 = arith.mulf %88, %92 : vector<8x32xf32>
      %94 = vector.broadcast %73 : vector<1x32xf32> to vector<8x32xf32>
      %95 = arith.mulf %93, %94 : vector<8x32xf32>
      %96 = vector.broadcast %75 : vector<1x32xf32> to vector<8x32xf32>
      %97 = arith.addf %95, %96 : vector<8x32xf32>
      %98 = arith.truncf %97 : vector<8x32xf32> to vector<8x32xbf16>
      %c0_62 = arith.constant 0 : index
      %c0_63 = arith.constant 0 : index
      %c0_64 = arith.constant 0 : index
      %99 = vector.load %arg18[%c0_62, %c0_63, %c0_64] : memref<1x32x64xbf16, #tpu.memory_space<vmem>>, vector<1x32x64xbf16>
      %100 = vector.shape_cast %99 : vector<1x32x64xbf16> to vector<32x64xbf16>
      %cst_65 = arith.constant dense<0.000000e+00> : vector<8x64xf32>
      %101 = tpu.matmul %98, %100, %cst_65 {dimension_numbers = #tpu.dot_dimension_numbers<[1], [0], [0], [1], [0, 0, 1, 1], [], []>} : vector<8x32xbf16>, vector<32x64xbf16>, vector<8x64xf32> -> vector<8x64xf32>
      %c0_66 = arith.constant 0 : index
      %c0_67 = arith.constant 0 : index
      %c0_68 = arith.constant 0 : index
      %102 = vector.load %arg19[%c0_66, %c0_67, %c0_68] : memref<1x1x64xf32, #tpu.memory_space<vmem>>, vector<1x1x64xf32>
      %103 = vector.shape_cast %102 : vector<1x1x64xf32> to vector<1x64xf32>
      %104 = vector.broadcast %103 : vector<1x64xf32> to vector<8x64xf32>
      %105 = arith.addf %101, %104 : vector<8x64xf32>
      %cst_69 = arith.constant 5.000000e-01 : f32
      %106 = vector.broadcast %cst_69 : f32 to vector<8x64xf32>
      %107 = arith.mulf %106, %105 : vector<8x64xf32>
      %cst_70 = arith.constant 4.471500e-02 : f32
      %108 = vector.broadcast %cst_70 : f32 to vector<8x64xf32>
      %109 = arith.mulf %108, %105 : vector<8x64xf32>
      %110 = arith.mulf %109, %105 : vector<8x64xf32>
      %111 = arith.mulf %110, %105 : vector<8x64xf32>
      %112 = arith.addf %105, %111 : vector<8x64xf32>
      %cst_71 = arith.constant 0.797884583 : f32
      %113 = vector.broadcast %cst_71 : f32 to vector<8x64xf32>
      %114 = arith.mulf %113, %112 : vector<8x64xf32>
      %115 = math.tanh %114 : vector<8x64xf32>
      %cst_72 = arith.constant 1.000000e+00 : f32
      %116 = vector.broadcast %cst_72 : f32 to vector<8x64xf32>
      %117 = arith.addf %116, %115 : vector<8x64xf32>
      %118 = arith.mulf %107, %117 : vector<8x64xf32>
      %119 = arith.truncf %118 : vector<8x64xf32> to vector<8x64xbf16>
      %c0_73 = arith.constant 0 : index
      %c0_74 = arith.constant 0 : index
      %c0_75 = arith.constant 0 : index
      %120 = vector.load %arg20[%c0_73, %c0_74, %c0_75] : memref<1x64x32xbf16, #tpu.memory_space<vmem>>, vector<1x64x32xbf16>
      %121 = vector.shape_cast %120 : vector<1x64x32xbf16> to vector<64x32xbf16>
      %cst_76 = arith.constant dense<0.000000e+00> : vector<8x32xf32>
      %122 = tpu.matmul %119, %121, %cst_76 {dimension_numbers = #tpu.dot_dimension_numbers<[1], [0], [0], [1], [0, 0, 1, 1], [], []>} : vector<8x64xbf16>, vector<64x32xbf16>, vector<8x32xf32> -> vector<8x32xf32>
      %c0_77 = arith.constant 0 : index
      %c0_78 = arith.constant 0 : index
      %c0_79 = arith.constant 0 : index
      %123 = vector.load %arg21[%c0_77, %c0_78, %c0_79] : memref<1x1x32xf32, #tpu.memory_space<vmem>>, vector<1x1x32xf32>
      %124 = vector.shape_cast %123 : vector<1x1x32xf32> to vector<1x32xf32>
      %125 = vector.broadcast %124 : vector<1x32xf32> to vector<8x32xf32>
      %126 = arith.addf %122, %125 : vector<8x32xf32>
      %127 = arith.addf %97, %126 : vector<8x32xf32>
      %c0_80 = arith.constant 0 : index
      %c0_81 = arith.constant 0 : index
      %c0_82 = arith.constant 0 : index
      %128 = vector.load %arg22[%c0_80, %c0_81, %c0_82] : memref<1x1x32xf32, #tpu.memory_space<vmem>>, vector<1x1x32xf32>
      %129 = vector.shape_cast %128 : vector<1x1x32xf32> to vector<1x32xf32>
      %c0_83 = arith.constant 0 : index
      %c0_84 = arith.constant 0 : index
      %c0_85 = arith.constant 0 : index
      %130 = vector.load %arg23[%c0_83, %c0_84, %c0_85] : memref<1x1x32xf32, #tpu.memory_space<vmem>>, vector<1x1x32xf32>
      %131 = vector.shape_cast %130 : vector<1x1x32xf32> to vector<1x32xf32>
      %cst_86 = arith.constant dense<0.000000e+00> : vector<8xf32>
      %132 = vector.multi_reduction <add>, %127, %cst_86 [1] : vector<8x32xf32> to vector<8xf32>
      %133 = vector.shape_cast %132 : vector<8xf32> to vector<8x1xf32>
      %134 = arith.mulf %127, %127 : vector<8x32xf32>
      %cst_87 = arith.constant dense<0.000000e+00> : vector<8xf32>
      %135 = vector.multi_reduction <add>, %134, %cst_87 [1] : vector<8x32xf32> to vector<8xf32>
      %136 = vector.shape_cast %135 : vector<8xf32> to vector<8x1xf32>
      %cst_88 = arith.constant 3.125000e-02 : f32
      %137 = vector.broadcast %cst_88 : f32 to vector<8x1xf32>
      %138 = arith.mulf %133, %137 : vector<8x1xf32>
      %cst_89 = arith.constant 3.125000e-02 : f32
      %139 = vector.broadcast %cst_89 : f32 to vector<8x1xf32>
      %140 = arith.mulf %136, %139 : vector<8x1xf32>
      %141 = arith.mulf %138, %138 : vector<8x1xf32>
      %142 = arith.subf %140, %141 : vector<8x1xf32>
      %143 = vector.broadcast %138 : vector<8x1xf32> to vector<8x32xf32>
      %144 = arith.subf %127, %143 : vector<8x32xf32>
      %cst_90 = arith.constant 9.99999974E-6 : f32
      %145 = vector.broadcast %cst_90 : f32 to vector<8x1xf32>
      %146 = arith.addf %142, %145 : vector<8x1xf32>
      %147 = math.rsqrt %146 : vector<8x1xf32>
      %148 = vector.broadcast %147 : vector<8x1xf32> to vector<8x32xf32>
      %149 = arith.mulf %144, %148 : vector<8x32xf32>
      %150 = vector.broadcast %129 : vector<1x32xf32> to vector<8x32xf32>
      %151 = arith.mulf %149, %150 : vector<8x32xf32>
      %152 = vector.broadcast %131 : vector<1x32xf32> to vector<8x32xf32>
      %153 = arith.addf %151, %152 : vector<8x32xf32>
      %c0_91 = arith.constant 0 : index
      %c0_92 = arith.constant 0 : index
      %154 = vector.load %arg25[%c0_91, %c0_92] : memref<8x32xf32, #tpu.memory_space<vmem>>, vector<8x32xf32>
      tpu.vector_store %arg25[%c0_91, %c0_92], %153 {strides = array<i32>} : memref<8x32xf32, #tpu.memory_space<vmem>>, vector<8x32xf32>,
    } else {
    }
    %c0 = arith.constant 0 : index
    %c0_3 = arith.constant 0 : index
    %6 = vector.load %arg25[%c0, %c0_3] : memref<8x32xf32, #tpu.memory_space<vmem>>, vector<8x32xf32>
    %c0_4 = arith.constant 0 : index
    %c0_5 = arith.constant 0 : index
    %c0_6 = arith.constant 0 : index
    %c0_7 = arith.constant 0 : index
    %7 = vector.load %arg24[%c0_4, %c0_5, %c0_6, %c0_7] : memref<1x1x8x32xf32, #tpu.memory_space<vmem>>, vector<1x1x8x32xf32>
    %8 = vector.shape_cast %7 : vector<1x1x8x32xf32> to vector<8x32xf32>
    %9 = vector.shape_cast %6 : vector<8x32xf32> to vector<1x1x8x32xf32>
    tpu.vector_store %arg24[%c0_4, %c0_5, %c0_6, %c0_7], %9 {strides = array<i32>} : memref<1x1x8x32xf32, #tpu.memory_space<vmem>>, vector<1x1x8x32xf32>,
    return
  }
  func.func @transform_0(%arg0: i32, %arg1: i32, %arg2: memref<2xi32, #tpu.memory_space<smem>>) -> (i32, i32, i32) {
    %c0_i32 = arith.constant 0 : i32
    %c0_i32_0 = arith.constant 0 : i32
    %c0_i32_1 = arith.constant 0 : i32
    return %arg0, %c0_i32, %c0_i32_0 : i32, i32, i32
  }
  func.func @transform_1(%arg0: i32, %arg1: i32, %arg2: memref<2xi32, #tpu.memory_space<smem>>) -> (i32, i32) {
    %c0_i32 = arith.constant 0 : i32
    %c0_i32_0 = arith.constant 0 : i32
    %c0_i32_1 = arith.constant 0 : i32
    return %c0_i32, %c0_i32_0 : i32, i32
  }
  func.func @transform_2(%arg0: i32, %arg1: i32, %arg2: memref<2xi32, #tpu.memory_space<smem>>) -> (i32, i32) {
    %c0_i32 = arith.constant 0 : i32
    %c0_i32_0 = arith.constant 0 : i32
    %c0_i32_1 = arith.constant 0 : i32
    return %c0_i32, %c0_i32_0 : i32, i32
  }
  func.func @transform_3(%arg0: i32, %arg1: i32, %arg2: memref<2xi32, #tpu.memory_space<smem>>) -> (i32, i32) {
    %c0_i32 = arith.constant 0 : i32
    %c0_i32_0 = arith.constant 0 : i32
    %c0_i32_1 = arith.constant 0 : i32
    return %c0_i32, %c0_i32_0 : i32, i32
  }
  func.func @transform_4(%arg0: i32, %arg1: i32, %arg2: memref<2xi32, #tpu.memory_space<smem>>) -> (i32, i32) {
    %c0_i32 = arith.constant 0 : i32
    %c0_i32_0 = arith.constant 0 : i32
    %c0_i32_1 = arith.constant 0 : i32
    return %c0_i32, %c0_i32_0 : i32, i32
  }
  func.func @transform_5(%arg0: i32, %arg1: i32, %arg2: memref<2xi32, #tpu.memory_space<smem>>) -> (i32, i32, i32, i32) {
    %c1_i32 = arith.constant 1 : i32
    %0 = arith.subi %arg1, %c1_i32 : i32
    %c0_i32 = arith.constant 0 : i32
    %1 = arith.maxsi %0, %c0_i32 : i32
    %c0_i32_0 = arith.constant 0 : i32
    %c0_i32_1 = arith.constant 0 : i32
    %c0_i32_2 = arith.constant 0 : i32
    %c0_i32_3 = arith.constant 0 : i32
    return %1, %c0_i32_0, %c0_i32_1, %c0_i32_2 : i32, i32, i32, i32
  }
  func.func @transform_6(%arg0: i32, %arg1: i32, %arg2: memref<2xi32, #tpu.memory_space<smem>>) -> (i32, i32, i32, i32) {
    %c1_i32 = arith.constant 1 : i32
    %0 = arith.subi %arg1, %c1_i32 : i32
    %c0_i32 = arith.constant 0 : i32
    %1 = arith.maxsi %0, %c0_i32 : i32
    %c0_i32_0 = arith.constant 0 : i32
    %c0_i32_1 = arith.constant 0 : i32
    %c0_i32_2 = arith.constant 0 : i32
    %c0_i32_3 = arith.constant 0 : i32
    return %1, %c0_i32_0, %c0_i32_1, %c0_i32_2 : i32, i32, i32, i32
  }
  func.func @transform_7(%arg0: i32, %arg1: i32, %arg2: memref<2xi32, #tpu.memory_space<smem>>) -> (i32, i32, i32, i32) {
    %c1_i32 = arith.constant 1 : i32
    %0 = arith.subi %arg1, %c1_i32 : i32
    %c0_i32 = arith.constant 0 : i32
    %1 = arith.maxsi %0, %c0_i32 : i32
    %c0_i32_0 = arith.constant 0 : i32
    %c0_i32_1 = arith.constant 0 : i32
    %c0_i32_2 = arith.constant 0 : i32
    %c0_i32_3 = arith.constant 0 : i32
    return %1, %c0_i32_0, %c0_i32_1, %c0_i32_2 : i32, i32, i32, i32
  }
  func.func @transform_8(%arg0: i32, %arg1: i32, %arg2: memref<2xi32, #tpu.memory_space<smem>>) -> (i32, i32, i32, i32) {
    %c1_i32 = arith.constant 1 : i32
    %0 = arith.subi %arg1, %c1_i32 : i32
    %c0_i32 = arith.constant 0 : i32
    %1 = arith.maxsi %0, %c0_i32 : i32
    %c0_i32_0 = arith.constant 0 : i32
    %c0_i32_1 = arith.constant 0 : i32
    %c0_i32_2 = arith.constant 0 : i32
    %c0_i32_3 = arith.constant 0 : i32
    return %1, %c0_i32_0, %c0_i32_1, %c0_i32_2 : i32, i32, i32, i32
  }
  func.func @transform_9(%arg0: i32, %arg1: i32, %arg2: memref<2xi32, #tpu.memory_space<smem>>) -> (i32, i32, i32, i32) {
    %c1_i32 = arith.constant 1 : i32
    %0 = arith.subi %arg1, %c1_i32 : i32
    %c0_i32 = arith.constant 0 : i32
    %1 = arith.maxsi %0, %c0_i32 : i32
    %c0_i32_0 = arith.constant 0 : i32
    %c0_i32_1 = arith.constant 0 : i32
    %c0_i32_2 = arith.constant 0 : i32
    %c0_i32_3 = arith.constant 0 : i32
    return %1, %c0_i32_0, %c0_i32_1, %c0_i32_2 : i32, i32, i32, i32
  }
  func.func @transform_10(%arg0: i32, %arg1: i32, %arg2: memref<2xi32, #tpu.memory_space<smem>>) -> (i32, i32, i32, i32) {
    %c1_i32 = arith.constant 1 : i32
    %0 = arith.subi %arg1, %c1_i32 : i32
    %c0_i32 = arith.constant 0 : i32
    %1 = arith.maxsi %0, %c0_i32 : i32
    %c0_i32_0 = arith.constant 0 : i32
    %c0_i32_1 = arith.constant 0 : i32
    %c0_i32_2 = arith.constant 0 : i32
    %c0_i32_3 = arith.constant 0 : i32
    return %1, %c0_i32_0, %c0_i32_1, %c0_i32_2 : i32, i32, i32, i32
  }
  func.func @transform_11(%arg0: i32, %arg1: i32, %arg2: memref<2xi32, #tpu.memory_space<smem>>) -> (i32, i32, i32, i32) {
    %c1_i32 = arith.constant 1 : i32
    %0 = arith.subi %arg1, %c1_i32 : i32
    %c0_i32 = arith.constant 0 : i32
    %1 = arith.maxsi %0, %c0_i32 : i32
    %c0_i32_0 = arith.constant 0 : i32
    %c0_i32_1 = arith.constant 0 : i32
    %c0_i32_2 = arith.constant 0 : i32
    %c0_i32_3 = arith.constant 0 : i32
    return %1, %c0_i32_0, %c0_i32_1, %c0_i32_2 : i32, i32, i32, i32
  }
  func.func @transform_12(%arg0: i32, %arg1: i32, %arg2: memref<2xi32, #tpu.memory_space<smem>>) -> (i32, i32, i32) {
    %c1_i32 = arith.constant 1 : i32
    %0 = arith.subi %arg1, %c1_i32 : i32
    %c0_i32 = arith.constant 0 : i32
    %1 = arith.maxsi %0, %c0_i32 : i32
    %c0_i32_0 = arith.constant 0 : i32
    %c0_i32_1 = arith.constant 0 : i32
    %c0_i32_2 = arith.constant 0 : i32
    return %1, %c0_i32_0, %c0_i32_1 : i32, i32, i32
  }
  func.func @transform_13(%arg0: i32, %arg1: i32, %arg2: memref<2xi32, #tpu.memory_space<smem>>) -> (i32, i32, i32) {
    %c1_i32 = arith.constant 1 : i32
    %0 = arith.subi %arg1, %c1_i32 : i32
    %c0_i32 = arith.constant 0 : i32
    %1 = arith.maxsi %0, %c0_i32 : i32
    %c0_i32_0 = arith.constant 0 : i32
    %c0_i32_1 = arith.constant 0 : i32
    %c0_i32_2 = arith.constant 0 : i32
    return %1, %c0_i32_0, %c0_i32_1 : i32, i32, i32
  }
  func.func @transform_14(%arg0: i32, %arg1: i32, %arg2: memref<2xi32, #tpu.memory_space<smem>>) -> (i32, i32, i32) {
    %c1_i32 = arith.constant 1 : i32
    %0 = arith.subi %arg1, %c1_i32 : i32
    %c0_i32 = arith.constant 0 : i32
    %1 = arith.maxsi %0, %c0_i32 : i32
    %c0_i32_0 = arith.constant 0 : i32
    %c0_i32_1 = arith.constant 0 : i32
    %c0_i32_2 = arith.constant 0 : i32
    return %1, %c0_i32_0, %c0_i32_1 : i32, i32, i32
  }
  func.func @transform_15(%arg0: i32, %arg1: i32, %arg2: memref<2xi32, #tpu.memory_space<smem>>) -> (i32, i32, i32) {
    %c1_i32 = arith.constant 1 : i32
    %0 = arith.subi %arg1, %c1_i32 : i32
    %c0_i32 = arith.constant 0 : i32
    %1 = arith.maxsi %0, %c0_i32 : i32
    %c0_i32_0 = arith.constant 0 : i32
    %c0_i32_1 = arith.constant 0 : i32
    %c0_i32_2 = arith.constant 0 : i32
    return %1, %c0_i32_0, %c0_i32_1 : i32, i32, i32
  }
  func.func @transform_16(%arg0: i32, %arg1: i32, %arg2: memref<2xi32, #tpu.memory_space<smem>>) -> (i32, i32, i32) {
    %c1_i32 = arith.constant 1 : i32
    %0 = arith.subi %arg1, %c1_i32 : i32
    %c0_i32 = arith.constant 0 : i32
    %1 = arith.maxsi %0, %c0_i32 : i32
    %c0_i32_0 = arith.constant 0 : i32
    %c0_i32_1 = arith.constant 0 : i32
    %c0_i32_2 = arith.constant 0 : i32
    return %1, %c0_i32_0, %c0_i32_1 : i32, i32, i32
  }
  func.func @transform_17(%arg0: i32, %arg1: i32, %arg2: memref<2xi32, #tpu.memory_space<smem>>) -> (i32, i32, i32) {
    %c1_i32 = arith.constant 1 : i32
    %0 = arith.subi %arg1, %c1_i32 : i32
    %c0_i32 = arith.constant 0 : i32
    %1 = arith.maxsi %0, %c0_i32 : i32
    %c0_i32_0 = arith.constant 0 : i32
    %c0_i32_1 = arith.constant 0 : i32
    %c0_i32_2 = arith.constant 0 : i32
    return %1, %c0_i32_0, %c0_i32_1 : i32, i32, i32
  }
  func.func @transform_18(%arg0: i32, %arg1: i32, %arg2: memref<2xi32, #tpu.memory_space<smem>>) -> (i32, i32, i32) {
    %c1_i32 = arith.constant 1 : i32
    %0 = arith.subi %arg1, %c1_i32 : i32
    %c0_i32 = arith.constant 0 : i32
    %1 = arith.maxsi %0, %c0_i32 : i32
    %c0_i32_0 = arith.constant 0 : i32
    %c0_i32_1 = arith.constant 0 : i32
    %c0_i32_2 = arith.constant 0 : i32
    return %1, %c0_i32_0, %c0_i32_1 : i32, i32, i32
  }
  func.func @transform_19(%arg0: i32, %arg1: i32, %arg2: memref<2xi32, #tpu.memory_space<smem>>) -> (i32, i32, i32) {
    %c1_i32 = arith.constant 1 : i32
    %0 = arith.subi %arg1, %c1_i32 : i32
    %c0_i32 = arith.constant 0 : i32
    %1 = arith.maxsi %0, %c0_i32 : i32
    %c0_i32_0 = arith.constant 0 : i32
    %c0_i32_1 = arith.constant 0 : i32
    %c0_i32_2 = arith.constant 0 : i32
    return %1, %c0_i32_0, %c0_i32_1 : i32, i32, i32
  }
  func.func @transform_20(%arg0: i32, %arg1: i32, %arg2: memref<2xi32, #tpu.memory_space<smem>>) -> (i32, i32, i32) {
    %c1_i32 = arith.constant 1 : i32
    %0 = arith.subi %arg1, %c1_i32 : i32
    %c0_i32 = arith.constant 0 : i32
    %1 = arith.maxsi %0, %c0_i32 : i32
    %c0_i32_0 = arith.constant 0 : i32
    %c0_i32_1 = arith.constant 0 : i32
    %c0_i32_2 = arith.constant 0 : i32
    return %1, %c0_i32_0, %c0_i32_1 : i32, i32, i32
  }
  func.func @transform_21(%arg0: i32, %arg1: i32, %arg2: memref<2xi32, #tpu.memory_space<smem>>) -> (i32, i32, i32, i32) {
    %c0_i32 = arith.constant 0 : i32
    %c0_i32_0 = arith.constant 0 : i32
    %c0_i32_1 = arith.constant 0 : i32
    return %arg1, %arg0, %c0_i32, %c0_i32_0 : i32, i32, i32, i32
  }
}

</mosaic_0001>

<llo_original>
// kernel: tpu_custom_call.1
$region0: #{tpu_custom_call.1}
  #allocation0 [shape = 'u32[]', space=smem, size = 0x4, offset = 0x4, fixed_abs, tag = 'smem constant byte address 0x4 - core index']
  #allocation1 [shape = 'u32[144,128]{1,0:T(1,128)}', space=vmem, size = 0x12000, scoped, tag = 'internal scratch']
  #allocation2 [shape = 'f32[8,32]{1,0:T(8,128)}', space=vmem, size = 0x1000, scoped, tag = 'scratch operand']
  #allocation3 [shape = 's32[1]{0}', space=sflag, size = 0x4, scoped, tag = 'scoped memory for tpu_custom_call.1']
  #allocation4 [shape = 'u8[512]{0}', space=smem, size = 0x200, scoped, tag = 'prefetched SMEM operand 0']
  %s0 = inlined_call_operand.vmem [shape: s32[2], index: 0, kind: input, shape index: {}]
  %s1 = inlined_call_operand.vmem [shape: s32[2,8,1], index: 1, kind: input, shape index: {}]
  %s2 = inlined_call_operand.vmem [shape: f32[56,32], index: 2, kind: input, shape index: {}]
  %s3 = inlined_call_operand.vmem [shape: f32[8,32], index: 3, kind: input, shape index: {}]
  %s4 = inlined_call_operand.vmem [shape: f32[1,32], index: 4, kind: input, shape index: {}]
  %s5 = inlined_call_operand.vmem [shape: f32[1,32], index: 5, kind: input, shape index: {}]
  %s6 = inlined_call_operand.vmem [shape: bf16[2,4,32,8], index: 6, kind: input, shape index: {}]
  %s7 = inlined_call_operand.vmem [shape: bf16[2,4,32,8], index: 7, kind: input, shape index: {}]
  %s8 = inlined_call_operand.vmem [shape: bf16[2,4,32,8], index: 8, kind: input, shape index: {}]
  %s9 = inlined_call_operand.vmem [shape: f32[2,4,1,8], index: 9, kind: input, shape index: {}]
  %s10 = inlined_call_operand.vmem [shape: f32[2,4,1,8], index: 10, kind: input, shape index: {}]
  %s11 = inlined_call_operand.vmem [shape: f32[2,4,1,8], index: 11, kind: input, shape index: {}]
  %s12 = inlined_call_operand.vmem [shape: bf16[2,4,8,32], index: 12, kind: input, shape index: {}]
  %s13 = inlined_call_operand.vmem [shape: f32[2,1,32], index: 13, kind: input, shape index: {}]
  %s14 = inlined_call_operand.vmem [shape: f32[2,1,32], index: 14, kind: input, shape index: {}]
  %s15 = inlined_call_operand.vmem [shape: f32[2,1,32], index: 15, kind: input, shape index: {}]
  %s16 = inlined_call_operand.vmem [shape: bf16[2,32,64], index: 16, kind: input, shape index: {}]
  %s17 = inlined_call_operand.vmem [shape: f32[2,1,64], index: 17, kind: input, shape index: {}]
  %s18 = inlined_call_operand.vmem [shape: bf16[2,64,32], index: 18, kind: input, shape index: {}]
  %s19 = inlined_call_operand.vmem [shape: f32[2,1,32], index: 19, kind: input, shape index: {}]
  %s20 = inlined_call_operand.vmem [shape: f32[2,1,32], index: 20, kind: input, shape index: {}]
  %s21 = inlined_call_operand.vmem [shape: f32[2,1,32], index: 21, kind: input, shape index: {}]
  %s22 = inlined_call_operand.hbm [shape: f32[3,2,8,32], index: 22, kind: output, shape index: {}]
  %s23 = sld [smem:[#allocation0]]
  $region125: #{tpu_custom_call.1} parent=0
    _
  %s25 = ssub.s32 1, %s23
  %s26 = scalar_select 0, %s25, %s23
  %s27 = sshll.u32 %s0, 4
  %s28 = int_to_ptr.vmem [resolvable:$true] %s27
  %30 = dma.vmem_to_smem %s28, 16, [#allocation4], [#allocation3]
  %31 = dma.done [#allocation3], 16
  %32 = sfence
  $region1: #{tpu_custom_call.1} parent=0
    #allocation5 [shape = 'u8[8192]{0}', space=vmem, size = 0x2000, scoped, tag = 'output window, operand 0']
    #allocation6 [shape = 's32[2]{0}', space=sflag, size = 0x8, scoped, tag = 'scoped memory for tpu_custom_call.1']
    %33 = vsyncpa [#allocation6], 0
    %s34 = scalar_lea.sflag [#allocation6], 1
    %35 = vsyncpa %s34, 0
    loop: start=0, step=1, limit=8
    $region2: #{tpu_custom_call.1} parent=1 // loop_pre_header
      _
    $region3: #{tpu_custom_call.1} parent=1 // loop_header
      %s37 = sphi 0, %s41
      %p38 = scmp.ge.s32.totalorder %s37, 8
      %s44 = sphi 0, %s56
      %s45 = sphi 0, %s52
      %s46 = sphi 0, %s44
      %s47 = sphi 0, %s45
      %s48 = sphi 0, %s46
      %s49 = sphi 0, %s47
      %s59 = sphi 0, %s61
      %s62 = sphi 0, %s59
      %s63 = sphi 0, %s62
      %s79 = sphi 0, %s63
      %s83 = sphi 0, %s83
      %s85 = sphi 0, %s83
      %s86 = sphi 0, %s85
      %s100 = sphi 0, %s86
      %s104 = sphi 0, %s104
      %s106 = sphi 0, %s104
      %s107 = sphi 0, %s106
      %s121 = sphi 0, %s107
      %s125 = sphi 0, %s125
      %s127 = sphi 0, %s125
      %s128 = sphi 0, %s127
      %s142 = sphi 0, %s128
      %s146 = sphi 0, %s146
      %s148 = sphi 0, %s146
      %s149 = sphi 0, %s148
      %s163 = sphi 0, %s149
      %s175 = sphi 0, %s177
      %s178 = sphi 0, %s175
      %s179 = sphi 0, %s178
      %s195 = sphi 0, %s179
      %s207 = sphi 0, %s209
      %s210 = sphi 0, %s207
      %s211 = sphi 0, %s210
      %s227 = sphi 0, %s211
      %s239 = sphi 0, %s241
      %s242 = sphi 0, %s239
      %s243 = sphi 0, %s242
      %s259 = sphi 0, %s243
      %s271 = sphi 0, %s273
      %s274 = sphi 0, %s271
      %s275 = sphi 0, %s274
      %s291 = sphi 0, %s275
      %s303 = sphi 0, %s305
      %s306 = sphi 0, %s303
      %s307 = sphi 0, %s306
      %s323 = sphi 0, %s307
      %s335 = sphi 0, %s337
      %s338 = sphi 0, %s335
      %s339 = sphi 0, %s338
      %s355 = sphi 0, %s339
      %s367 = sphi 0, %s369
      %s370 = sphi 0, %s367
      %s371 = sphi 0, %s370
      %s387 = sphi 0, %s371
      %s399 = sphi 0, %s401
      %s402 = sphi 0, %s399
      %s403 = sphi 0, %s402
      %s419 = sphi 0, %s403
      %s431 = sphi 0, %s433
      %s434 = sphi 0, %s431
      %s435 = sphi 0, %s434
      %s451 = sphi 0, %s435
      %s463 = sphi 0, %s465
      %s466 = sphi 0, %s463
      %s467 = sphi 0, %s466
      %s483 = sphi 0, %s467
      %s495 = sphi 0, %s497
      %s498 = sphi 0, %s495
      %s499 = sphi 0, %s498
      %s515 = sphi 0, %s499
      %s527 = sphi 0, %s529
      %s530 = sphi 0, %s527
      %s531 = sphi 0, %s530
      %s547 = sphi 0, %s531
      %s559 = sphi 0, %s561
      %s562 = sphi 0, %s559
      %s563 = sphi 0, %s562
      %s579 = sphi 0, %s563
      %s591 = sphi 0, %s593
      %s594 = sphi 0, %s591
      %s595 = sphi 0, %s594
      %s611 = sphi 0, %s595
      %s623 = sphi 0, %s625
      %s626 = sphi 0, %s623
      %s627 = sphi 0, %s626
      %s643 = sphi 0, %s627
      %s655 = sphi 0, %s657
      %s658 = sphi 0, %s655
      %s659 = sphi 0, %s658
      %s675 = sphi 0, %s659
      %s683 = sphi 0, %s685
      %s686 = sphi 0, %s683
      %s687 = sphi 0, %s686
      %s703 = sphi 0, %s687
    $region4: #{tpu_custom_call.1} parent=1 // loop_header_branch
      %40 = sbr.rel (%p38) target = $region8
    $region5: #{tpu_custom_call.1} parent=1 // loop_body
      %s42 = ssub.s32 %s37, 1
      %s43 = ssub.s32 %s37, 2
      %s50 = sadd.s32 1, %s45
      %p51 = scmp.ge.s32.totalorder %s50, 3
      %s52 = scalar_select %p51, 0, %s50
      %s53 = sadd.s32 1, %s44
      %s54 = scalar_select %p51, %s53, %s44
      %p55 = scmp.ge.s32.totalorder %s54, 2
      %s56 = scalar_select %p55, 0, %s54
      %s57 = ssub.s32 %s44, %s56
      %p58 = scmp.eq.s32.totalorder %s57, 0
      %s60 = sadd.s32 %s59, 1
      %s61 = scalar_select %p58, %s59, %s60
      %p64 = pneg %p58
      %p65 = scmp.eq.s32.totalorder %s37, 5
      %p66 = por %p64, %p65
      %p67 = scmp.ne.s32.totalorder %s59, %s62
      %p68 = scmp.eq.s32.totalorder %s37, 0
      %p69 = por %p67, %p68
      %p70 = scmp.ne.s32.totalorder %s59, %s62
      %p71 = scmp.eq.s32.totalorder %s42, 5
      %p72 = por %p70, %p71
      %p73 = scmp.ne.s32.totalorder %s62, %s63
      %p74 = scmp.eq.s32.totalorder %s42, 0
      %p75 = por %p73, %p74
      %p76 = scmp.ne.s32.totalorder %s62, %s63
      %p77 = scmp.eq.s32.totalorder %s43, 5
      %p78 = por %p76, %p77
      %p80 = scmp.ne.s32.totalorder %s63, %s79
      %p81 = scmp.eq.s32.totalorder %s43, 0
      %p82 = por %p80, %p81
      %s84 = sadd.s32 %s83, 1
      %p87 = scmp.eq.s32.totalorder %s37, 5
      %p88 = scmp.ne.s32.totalorder %s83, %s85
      %p89 = scmp.eq.s32.totalorder %s37, 0
      %p90 = por %p88, %p89
      %p91 = scmp.ne.s32.totalorder %s83, %s85
      %p92 = scmp.eq.s32.totalorder %s42, 5
      %p93 = por %p91, %p92
      %p94 = scmp.ne.s32.totalorder %s85, %s86
      %p95 = scmp.eq.s32.totalorder %s42, 0
      %p96 = por %p94, %p95
      %p97 = scmp.ne.s32.totalorder %s85, %s86
      %p98 = scmp.eq.s32.totalorder %s43, 5
      %p99 = por %p97, %p98
      %p101 = scmp.ne.s32.totalorder %s86, %s100
      %p102 = scmp.eq.s32.totalorder %s43, 0
      %p103 = por %p101, %p102
      %s105 = sadd.s32 %s104, 1
      %p108 = scmp.eq.s32.totalorder %s37, 5
      %p109 = scmp.ne.s32.totalorder %s104, %s106
      %p110 = scmp.eq.s32.totalorder %s37, 0
      %p111 = por %p109, %p110
      %p112 = scmp.ne.s32.totalorder %s104, %s106
      %p113 = scmp.eq.s32.totalorder %s42, 5
      %p114 = por %p112, %p113
      %p115 = scmp.ne.s32.totalorder %s106, %s107
      %p116 = scmp.eq.s32.totalorder %s42, 0
      %p117 = por %p115, %p116
      %p118 = scmp.ne.s32.totalorder %s106, %s107
      %p119 = scmp.eq.s32.totalorder %s43, 5
      %p120 = por %p118, %p119
      %p122 = scmp.ne.s32.totalorder %s107, %s121
      %p123 = scmp.eq.s32.totalorder %s43, 0
      %p124 = por %p122, %p123
      %s126 = sadd.s32 %s125, 1
      %p129 = scmp.eq.s32.totalorder %s37, 5
      %p130 = scmp.ne.s32.totalorder %s125, %s127
      %p131 = scmp.eq.s32.totalorder %s37, 0
      %p132 = por %p130, %p131
      %p133 = scmp.ne.s32.totalorder %s125, %s127
      %p134 = scmp.eq.s32.totalorder %s42, 5
      %p135 = por %p133, %p134
      %p136 = scmp.ne.s32.totalorder %s127, %s128
      %p137 = scmp.eq.s32.totalorder %s42, 0
      %p138 = por %p136, %p137
      %p139 = scmp.ne.s32.totalorder %s127, %s128
      %p140 = scmp.eq.s32.totalorder %s43, 5
      %p141 = por %p139, %p140
      %p143 = scmp.ne.s32.totalorder %s128, %s142
      %p144 = scmp.eq.s32.totalorder %s43, 0
      %p145 = por %p143, %p144
      %s147 = sadd.s32 %s146, 1
      %p150 = scmp.eq.s32.totalorder %s37, 5
      %p151 = scmp.ne.s32.totalorder %s146, %s148
      %p152 = scmp.eq.s32.totalorder %s37, 0
      %p153 = por %p151, %p152
      %p154 = scmp.ne.s32.totalorder %s146, %s148
      %p155 = scmp.eq.s32.totalorder %s42, 5
      %p156 = por %p154, %p155
      %p157 = scmp.ne.s32.totalorder %s148, %s149
      %p158 = scmp.eq.s32.totalorder %s42, 0
      %p159 = por %p157, %p158
      %p160 = scmp.ne.s32.totalorder %s148, %s149
      %p161 = scmp.eq.s32.totalorder %s43, 5
      %p162 = por %p160, %p161
      %p164 = scmp.ne.s32.totalorder %s149, %s163
      %p165 = scmp.eq.s32.totalorder %s43, 0
      %p166 = por %p164, %p165
      %s167 = ssub.s32 %s45, 1
      %p168 = scmp.gt.s32.totalorder %s167, 0
      %s169 = scalar_select %p168, %s167, 0
      %s170 = ssub.s32 %s52, 1
      %p171 = scmp.gt.s32.totalorder %s170, 0
      %s172 = scalar_select %p171, %s170, 0
      %s173 = ssub.s32 %s169, %s172
      %p174 = scmp.eq.s32.totalorder %s173, 0
      %s176 = sadd.s32 %s175, 1
      %s177 = scalar_select %p174, %s175, %s176
      %p180 = pneg %p174
      %p181 = scmp.eq.s32.totalorder %s37, 5
      %p182 = por %p180, %p181
      %p183 = scmp.ne.s32.totalorder %s175, %s178
      %p184 = scmp.eq.s32.totalorder %s37, 0
      %p185 = por %p183, %p184
      %p186 = scmp.ne.s32.totalorder %s175, %s178
      %p187 = scmp.eq.s32.totalorder %s42, 5
      %p188 = por %p186, %p187
      %p189 = scmp.ne.s32.totalorder %s178, %s179
      %p190 = scmp.eq.s32.totalorder %s42, 0
      %p191 = por %p189, %p190
      %p192 = scmp.ne.s32.totalorder %s178, %s179
      %p193 = scmp.eq.s32.totalorder %s43, 5
      %p194 = por %p192, %p193
      %p196 = scmp.ne.s32.totalorder %s179, %s195
      %p197 = scmp.eq.s32.totalorder %s43, 0
      %p198 = por %p196, %p197
      %s199 = ssub.s32 %s45, 1
      %p200 = scmp.gt.s32.totalorder %s199, 0
      %s201 = scalar_select %p200, %s199, 0
      %s202 = ssub.s32 %s52, 1
      %p203 = scmp.gt.s32.totalorder %s202, 0
      %s204 = scalar_select %p203, %s202, 0
      %s205 = ssub.s32 %s201, %s204
      %p206 = scmp.eq.s32.totalorder %s205, 0
      %s208 = sadd.s32 %s207, 1
      %s209 = scalar_select %p206, %s207, %s208
      %p212 = pneg %p206
      %p213 = scmp.eq.s32.totalorder %s37, 5
      %p214 = por %p212, %p213
      %p215 = scmp.ne.s32.totalorder %s207, %s210
      %p216 = scmp.eq.s32.totalorder %s37, 0
      %p217 = por %p215, %p216
      %p218 = scmp.ne.s32.totalorder %s207, %s210
      %p219 = scmp.eq.s32.totalorder %s42, 5
      %p220 = por %p218, %p219
      %p221 = scmp.ne.s32.totalorder %s210, %s211
      %p222 = scmp.eq.s32.totalorder %s42, 0
      %p223 = por %p221, %p222
      %p224 = scmp.ne.s32.totalorder %s210, %s211
      %p225 = scmp.eq.s32.totalorder %s43, 5
      %p226 = por %p224, %p225
      %p228 = scmp.ne.s32.totalorder %s211, %s227
      %p229 = scmp.eq.s32.totalorder %s43, 0
      %p230 = por %p228, %p229
      %s231 = ssub.s32 %s45, 1
      %p232 = scmp.gt.s32.totalorder %s231, 0
      %s233 = scalar_select %p232, %s231, 0
      %s234 = ssub.s32 %s52, 1
      %p235 = scmp.gt.s32.totalorder %s234, 0
      %s236 = scalar_select %p235, %s234, 0
      %s237 = ssub.s32 %s233, %s236
      %p238 = scmp.eq.s32.totalorder %s237, 0
      %s240 = sadd.s32 %s239, 1
      %s241 = scalar_select %p238, %s239, %s240
      %p244 = pneg %p238
      %p245 = scmp.eq.s32.totalorder %s37, 5
      %p246 = por %p244, %p245
      %p247 = scmp.ne.s32.totalorder %s239, %s242
      %p248 = scmp.eq.s32.totalorder %s37, 0
      %p249 = por %p247, %p248
      %p250 = scmp.ne.s32.totalorder %s239, %s242
      %p251 = scmp.eq.s32.totalorder %s42, 5
      %p252 = por %p250, %p251
      %p253 = scmp.ne.s32.totalorder %s242, %s243
      %p254 = scmp.eq.s32.totalorder %s42, 0
      %p255 = por %p253, %p254
      %p256 = scmp.ne.s32.totalorder %s242, %s243
      %p257 = scmp.eq.s32.totalorder %s43, 5
      %p258 = por %p256, %p257
      %p260 = scmp.ne.s32.totalorder %s243, %s259
      %p261 = scmp.eq.s32.totalorder %s43, 0
      %p262 = por %p260, %p261
      %s263 = ssub.s32 %s45, 1
      %p264 = scmp.gt.s32.totalorder %s263, 0
      %s265 = scalar_select %p264, %s263, 0
      %s266 = ssub.s32 %s52, 1
      %p267 = scmp.gt.s32.totalorder %s266, 0
      %s268 = scalar_select %p267, %s266, 0
      %s269 = ssub.s32 %s265, %s268
      %p270 = scmp.eq.s32.totalorder %s269, 0
      %s272 = sadd.s32 %s271, 1
      %s273 = scalar_select %p270, %s271, %s272
      %p276 = pneg %p270
      %p277 = scmp.eq.s32.totalorder %s37, 5
      %p278 = por %p276, %p277
      %p279 = scmp.ne.s32.totalorder %s271, %s274
      %p280 = scmp.eq.s32.totalorder %s37, 0
      %p281 = por %p279, %p280
      %p282 = scmp.ne.s32.totalorder %s271, %s274
      %p283 = scmp.eq.s32.totalorder %s42, 5
      %p284 = por %p282, %p283
      %p285 = scmp.ne.s32.totalorder %s274, %s275
      %p286 = scmp.eq.s32.totalorder %s42, 0
      %p287 = por %p285, %p286
      %p288 = scmp.ne.s32.totalorder %s274, %s275
      %p289 = scmp.eq.s32.totalorder %s43, 5
      %p290 = por %p288, %p289
      %p292 = scmp.ne.s32.totalorder %s275, %s291
      %p293 = scmp.eq.s32.totalorder %s43, 0
      %p294 = por %p292, %p293
      %s295 = ssub.s32 %s45, 1
      %p296 = scmp.gt.s32.totalorder %s295, 0
      %s297 = scalar_select %p296, %s295, 0
      %s298 = ssub.s32 %s52, 1
      %p299 = scmp.gt.s32.totalorder %s298, 0
      %s300 = scalar_select %p299, %s298, 0
      %s301 = ssub.s32 %s297, %s300
      %p302 = scmp.eq.s32.totalorder %s301, 0
      %s304 = sadd.s32 %s303, 1
      %s305 = scalar_select %p302, %s303, %s304
      %p308 = pneg %p302
      %p309 = scmp.eq.s32.totalorder %s37, 5
      %p310 = por %p308, %p309
      %p311 = scmp.ne.s32.totalorder %s303, %s306
      %p312 = scmp.eq.s32.totalorder %s37, 0
      %p313 = por %p311, %p312
      %p314 = scmp.ne.s32.totalorder %s303, %s306
      %p315 = scmp.eq.s32.totalorder %s42, 5
      %p316 = por %p314, %p315
      %p317 = scmp.ne.s32.totalorder %s306, %s307
      %p318 = scmp.eq.s32.totalorder %s42, 0
      %p319 = por %p317, %p318
      %p320 = scmp.ne.s32.totalorder %s306, %s307
      %p321 = scmp.eq.s32.totalorder %s43, 5
      %p322 = por %p320, %p321
      %p324 = scmp.ne.s32.totalorder %s307, %s323
      %p325 = scmp.eq.s32.totalorder %s43, 0
      %p326 = por %p324, %p325
      %s327 = ssub.s32 %s45, 1
      %p328 = scmp.gt.s32.totalorder %s327, 0
      %s329 = scalar_select %p328, %s327, 0
      %s330 = ssub.s32 %s52, 1
      %p331 = scmp.gt.s32.totalorder %s330, 0
      %s332 = scalar_select %p331, %s330, 0
      %s333 = ssub.s32 %s329, %s332
      %p334 = scmp.eq.s32.totalorder %s333, 0
      %s336 = sadd.s32 %s335, 1
      %s337 = scalar_select %p334, %s335, %s336
      %p340 = pneg %p334
      %p341 = scmp.eq.s32.totalorder %s37, 5
      %p342 = por %p340, %p341
      %p343 = scmp.ne.s32.totalorder %s335, %s338
      %p344 = scmp.eq.s32.totalorder %s37, 0
      %p345 = por %p343, %p344
      %p346 = scmp.ne.s32.totalorder %s335, %s338
      %p347 = scmp.eq.s32.totalorder %s42, 5
      %p348 = por %p346, %p347
      %p349 = scmp.ne.s32.totalorder %s338, %s339
      %p350 = scmp.eq.s32.totalorder %s42, 0
      %p351 = por %p349, %p350
      %p352 = scmp.ne.s32.totalorder %s338, %s339
      %p353 = scmp.eq.s32.totalorder %s43, 5
      %p354 = por %p352, %p353
      %p356 = scmp.ne.s32.totalorder %s339, %s355
      %p357 = scmp.eq.s32.totalorder %s43, 0
      %p358 = por %p356, %p357
      %s359 = ssub.s32 %s45, 1
      %p360 = scmp.gt.s32.totalorder %s359, 0
      %s361 = scalar_select %p360, %s359, 0
      %s362 = ssub.s32 %s52, 1
      %p363 = scmp.gt.s32.totalorder %s362, 0
      %s364 = scalar_select %p363, %s362, 0
      %s365 = ssub.s32 %s361, %s364
      %p366 = scmp.eq.s32.totalorder %s365, 0
      %s368 = sadd.s32 %s367, 1
      %s369 = scalar_select %p366, %s367, %s368
      %p372 = pneg %p366
      %p373 = scmp.eq.s32.totalorder %s37, 5
      %p374 = por %p372, %p373
      %p375 = scmp.ne.s32.totalorder %s367, %s370
      %p376 = scmp.eq.s32.totalorder %s37, 0
      %p377 = por %p375, %p376
      %p378 = scmp.ne.s32.totalorder %s367, %s370
      %p379 = scmp.eq.s32.totalorder %s42, 5
      %p380 = por %p378, %p379
      %p381 = scmp.ne.s32.totalorder %s370, %s371
      %p382 = scmp.eq.s32.totalorder %s42, 0
      %p383 = por %p381, %p382
      %p384 = scmp.ne.s32.totalorder %s370, %s371
      %p385 = scmp.eq.s32.totalorder %s43, 5
      %p386 = por %p384, %p385
      %p388 = scmp.ne.s32.totalorder %s371, %s387
      %p389 = scmp.eq.s32.totalorder %s43, 0
      %p390 = por %p388, %p389
      %s391 = ssub.s32 %s45, 1
      %p392 = scmp.gt.s32.totalorder %s391, 0
      %s393 = scalar_select %p392, %s391, 0
      %s394 = ssub.s32 %s52, 1
      %p395 = scmp.gt.s32.totalorder %s394, 0
      %s396 = scalar_select %p395, %s394, 0
      %s397 = ssub.s32 %s393, %s396
      %p398 = scmp.eq.s32.totalorder %s397, 0
      %s400 = sadd.s32 %s399, 1
      %s401 = scalar_select %p398, %s399, %s400
      %p404 = pneg %p398
      %p405 = scmp.eq.s32.totalorder %s37, 5
      %p406 = por %p404, %p405
      %p407 = scmp.ne.s32.totalorder %s399, %s402
      %p408 = scmp.eq.s32.totalorder %s37, 0
      %p409 = por %p407, %p408
      %p410 = scmp.ne.s32.totalorder %s399, %s402
      %p411 = scmp.eq.s32.totalorder %s42, 5
      %p412 = por %p410, %p411
      %p413 = scmp.ne.s32.totalorder %s402, %s403
      %p414 = scmp.eq.s32.totalorder %s42, 0
      %p415 = por %p413, %p414
      %p416 = scmp.ne.s32.totalorder %s402, %s403
      %p417 = scmp.eq.s32.totalorder %s43, 5
      %p418 = por %p416, %p417
      %p420 = scmp.ne.s32.totalorder %s403, %s419
      %p421 = scmp.eq.s32.totalorder %s43, 0
      %p422 = por %p420, %p421
      %s423 = ssub.s32 %s45, 1
      %p424 = scmp.gt.s32.totalorder %s423, 0
      %s425 = scalar_select %p424, %s423, 0
      %s426 = ssub.s32 %s52, 1
      %p427 = scmp.gt.s32.totalorder %s426, 0
      %s428 = scalar_select %p427, %s426, 0
      %s429 = ssub.s32 %s425, %s428
      %p430 = scmp.eq.s32.totalorder %s429, 0
      %s432 = sadd.s32 %s431, 1
      %s433 = scalar_select %p430, %s431, %s432
      %p436 = pneg %p430
      %p437 = scmp.eq.s32.totalorder %s37, 5
      %p438 = por %p436, %p437
      %p439 = scmp.ne.s32.totalorder %s431, %s434
      %p440 = scmp.eq.s32.totalorder %s37, 0
      %p441 = por %p439, %p440
      %p442 = scmp.ne.s32.totalorder %s431, %s434
      %p443 = scmp.eq.s32.totalorder %s42, 5
      %p444 = por %p442, %p443
      %p445 = scmp.ne.s32.totalorder %s434, %s435
      %p446 = scmp.eq.s32.totalorder %s42, 0
      %p447 = por %p445, %p446
      %p448 = scmp.ne.s32.totalorder %s434, %s435
      %p449 = scmp.eq.s32.totalorder %s43, 5
      %p450 = por %p448, %p449
      %p452 = scmp.ne.s32.totalorder %s435, %s451
      %p453 = scmp.eq.s32.totalorder %s43, 0
      %p454 = por %p452, %p453
      %s455 = ssub.s32 %s45, 1
      %p456 = scmp.gt.s32.totalorder %s455, 0
      %s457 = scalar_select %p456, %s455, 0
      %s458 = ssub.s32 %s52, 1
      %p459 = scmp.gt.s32.totalorder %s458, 0
      %s460 = scalar_select %p459, %s458, 0
      %s461 = ssub.s32 %s457, %s460
      %p462 = scmp.eq.s32.totalorder %s461, 0
      %s464 = sadd.s32 %s463, 1
      %s465 = scalar_select %p462, %s463, %s464
      %p468 = pneg %p462
      %p469 = scmp.eq.s32.totalorder %s37, 5
      %p470 = por %p468, %p469
      %p471 = scmp.ne.s32.totalorder %s463, %s466
      %p472 = scmp.eq.s32.totalorder %s37, 0
      %p473 = por %p471, %p472
      %p474 = scmp.ne.s32.totalorder %s463, %s466
      %p475 = scmp.eq.s32.totalorder %s42, 5
      %p476 = por %p474, %p475
      %p477 = scmp.ne.s32.totalorder %s466, %s467
      %p478 = scmp.eq.s32.totalorder %s42, 0
      %p479 = por %p477, %p478
      %p480 = scmp.ne.s32.totalorder %s466, %s467
      %p481 = scmp.eq.s32.totalorder %s43, 5
      %p482 = por %p480, %p481
      %p484 = scmp.ne.s32.totalorder %s467, %s483
      %p485 = scmp.eq.s32.totalorder %s43, 0
      %p486 = por %p484, %p485
      %s487 = ssub.s32 %s45, 1
      %p488 = scmp.gt.s32.totalorder %s487, 0
      %s489 = scalar_select %p488, %s487, 0
      %s490 = ssub.s32 %s52, 1
      %p491 = scmp.gt.s32.totalorder %s490, 0
      %s492 = scalar_select %p491, %s490, 0
      %s493 = ssub.s32 %s489, %s492
      %p494 = scmp.eq.s32.totalorder %s493, 0
      %s496 = sadd.s32 %s495, 1
      %s497 = scalar_select %p494, %s495, %s496
      %p500 = pneg %p494
      %p501 = scmp.eq.s32.totalorder %s37, 5
      %p502 = por %p500, %p501
      %p503 = scmp.ne.s32.totalorder %s495, %s498
      %p504 = scmp.eq.s32.totalorder %s37, 0
      %p505 = por %p503, %p504
      %p506 = scmp.ne.s32.totalorder %s495, %s498
      %p507 = scmp.eq.s32.totalorder %s42, 5
      %p508 = por %p506, %p507
      %p509 = scmp.ne.s32.totalorder %s498, %s499
      %p510 = scmp.eq.s32.totalorder %s42, 0
      %p511 = por %p509, %p510
      %p512 = scmp.ne.s32.totalorder %s498, %s499
      %p513 = scmp.eq.s32.totalorder %s43, 5
      %p514 = por %p512, %p513
      %p516 = scmp.ne.s32.totalorder %s499, %s515
      %p517 = scmp.eq.s32.totalorder %s43, 0
      %p518 = por %p516, %p517
      %s519 = ssub.s32 %s45, 1
      %p520 = scmp.gt.s32.totalorder %s519, 0
      %s521 = scalar_select %p520, %s519, 0
      %s522 = ssub.s32 %s52, 1
      %p523 = scmp.gt.s32.totalorder %s522, 0
      %s524 = scalar_select %p523, %s522, 0
      %s525 = ssub.s32 %s521, %s524
      %p526 = scmp.eq.s32.totalorder %s525, 0
      %s528 = sadd.s32 %s527, 1
      %s529 = scalar_select %p526, %s527, %s528
      %p532 = pneg %p526
      %p533 = scmp.eq.s32.totalorder %s37, 5
      %p534 = por %p532, %p533
      %p535 = scmp.ne.s32.totalorder %s527, %s530
      %p536 = scmp.eq.s32.totalorder %s37, 0
      %p537 = por %p535, %p536
      %p538 = scmp.ne.s32.totalorder %s527, %s530
      %p539 = scmp.eq.s32.totalorder %s42, 5
      %p540 = por %p538, %p539
      %p541 = scmp.ne.s32.totalorder %s530, %s531
      %p542 = scmp.eq.s32.totalorder %s42, 0
      %p543 = por %p541, %p542
      %p544 = scmp.ne.s32.totalorder %s530, %s531
      %p545 = scmp.eq.s32.totalorder %s43, 5
      %p546 = por %p544, %p545
      %p548 = scmp.ne.s32.totalorder %s531, %s547
      %p549 = scmp.eq.s32.totalorder %s43, 0
      %p550 = por %p548, %p549
      %s551 = ssub.s32 %s45, 1
      %p552 = scmp.gt.s32.totalorder %s551, 0
      %s553 = scalar_select %p552, %s551, 0
      %s554 = ssub.s32 %s52, 1
      %p555 = scmp.gt.s32.totalorder %s554, 0
      %s556 = scalar_select %p555, %s554, 0
      %s557 = ssub.s32 %s553, %s556
      %p558 = scmp.eq.s32.totalorder %s557, 0
      %s560 = sadd.s32 %s559, 1
      %s561 = scalar_select %p558, %s559, %s560
      %p564 = pneg %p558
      %p565 = scmp.eq.s32.totalorder %s37, 5
      %p566 = por %p564, %p565
      %p567 = scmp.ne.s32.totalorder %s559, %s562
      %p568 = scmp.eq.s32.totalorder %s37, 0
      %p569 = por %p567, %p568
      %p570 = scmp.ne.s32.totalorder %s559, %s562
      %p571 = scmp.eq.s32.totalorder %s42, 5
      %p572 = por %p570, %p571
      %p573 = scmp.ne.s32.totalorder %s562, %s563
      %p574 = scmp.eq.s32.totalorder %s42, 0
      %p575 = por %p573, %p574
      %p576 = scmp.ne.s32.totalorder %s562, %s563
      %p577 = scmp.eq.s32.totalorder %s43, 5
      %p578 = por %p576, %p577
      %p580 = scmp.ne.s32.totalorder %s563, %s579
      %p581 = scmp.eq.s32.totalorder %s43, 0
      %p582 = por %p580, %p581
      %s583 = ssub.s32 %s45, 1
      %p584 = scmp.gt.s32.totalorder %s583, 0
      %s585 = scalar_select %p584, %s583, 0
      %s586 = ssub.s32 %s52, 1
      %p587 = scmp.gt.s32.totalorder %s586, 0
      %s588 = scalar_select %p587, %s586, 0
      %s589 = ssub.s32 %s585, %s588
      %p590 = scmp.eq.s32.totalorder %s589, 0
      %s592 = sadd.s32 %s591, 1
      %s593 = scalar_select %p590, %s591, %s592
      %p596 = pneg %p590
      %p597 = scmp.eq.s32.totalorder %s37, 5
      %p598 = por %p596, %p597
      %p599 = scmp.ne.s32.totalorder %s591, %s594
      %p600 = scmp.eq.s32.totalorder %s37, 0
      %p601 = por %p599, %p600
      %p602 = scmp.ne.s32.totalorder %s591, %s594
      %p603 = scmp.eq.s32.totalorder %s42, 5
      %p604 = por %p602, %p603
      %p605 = scmp.ne.s32.totalorder %s594, %s595
      %p606 = scmp.eq.s32.totalorder %s42, 0
      %p607 = por %p605, %p606
      %p608 = scmp.ne.s32.totalorder %s594, %s595
      %p609 = scmp.eq.s32.totalorder %s43, 5
      %p610 = por %p608, %p609
      %p612 = scmp.ne.s32.totalorder %s595, %s611
      %p613 = scmp.eq.s32.totalorder %s43, 0
      %p614 = por %p612, %p613
      %s615 = ssub.s32 %s45, 1
      %p616 = scmp.gt.s32.totalorder %s615, 0
      %s617 = scalar_select %p616, %s615, 0
      %s618 = ssub.s32 %s52, 1
      %p619 = scmp.gt.s32.totalorder %s618, 0
      %s620 = scalar_select %p619, %s618, 0
      %s621 = ssub.s32 %s617, %s620
      %p622 = scmp.eq.s32.totalorder %s621, 0
      %s624 = sadd.s32 %s623, 1
      %s625 = scalar_select %p622, %s623, %s624
      %p628 = pneg %p622
      %p629 = scmp.eq.s32.totalorder %s37, 5
      %p630 = por %p628, %p629
      %p631 = scmp.ne.s32.totalorder %s623, %s626
      %p632 = scmp.eq.s32.totalorder %s37, 0
      %p633 = por %p631, %p632
      %p634 = scmp.ne.s32.totalorder %s623, %s626
      %p635 = scmp.eq.s32.totalorder %s42, 5
      %p636 = por %p634, %p635
      %p637 = scmp.ne.s32.totalorder %s626, %s627
      %p638 = scmp.eq.s32.totalorder %s42, 0
      %p639 = por %p637, %p638
      %p640 = scmp.ne.s32.totalorder %s626, %s627
      %p641 = scmp.eq.s32.totalorder %s43, 5
      %p642 = por %p640, %p641
      %p644 = scmp.ne.s32.totalorder %s627, %s643
      %p645 = scmp.eq.s32.totalorder %s43, 0
      %p646 = por %p644, %p645
      %s647 = ssub.s32 %s45, 1
      %p648 = scmp.gt.s32.totalorder %s647, 0
      %s649 = scalar_select %p648, %s647, 0
      %s650 = ssub.s32 %s52, 1
      %p651 = scmp.gt.s32.totalorder %s650, 0
      %s652 = scalar_select %p651, %s650, 0
      %s653 = ssub.s32 %s649, %s652
      %p654 = scmp.eq.s32.totalorder %s653, 0
      %s656 = sadd.s32 %s655, 1
      %s657 = scalar_select %p654, %s655, %s656
      %p660 = pneg %p654
      %p661 = scmp.eq.s32.totalorder %s37, 5
      %p662 = por %p660, %p661
      %p663 = scmp.ne.s32.totalorder %s655, %s658
      %p664 = scmp.eq.s32.totalorder %s37, 0
      %p665 = por %p663, %p664
      %p666 = scmp.ne.s32.totalorder %s655, %s658
      %p667 = scmp.eq.s32.totalorder %s42, 5
      %p668 = por %p666, %p667
      %p669 = scmp.ne.s32.totalorder %s658, %s659
      %p670 = scmp.eq.s32.totalorder %s42, 0
      %p671 = por %p669, %p670
      %p672 = scmp.ne.s32.totalorder %s658, %s659
      %p673 = scmp.eq.s32.totalorder %s43, 5
      %p674 = por %p672, %p673
      %p676 = scmp.ne.s32.totalorder %s659, %s675
      %p677 = scmp.eq.s32.totalorder %s43, 0
      %p678 = por %p676, %p677
      %s679 = ssub.s32 %s45, %s52
      %s680 = ssub.s32 %s44, %s56
      %s681 = sor.u32 %s679, %s680
      %p682 = scmp.eq.s32.totalorder %s681, 0
      %s684 = sadd.s32 %s683, 1
      %s685 = scalar_select %p682, %s683, %s684
      %p688 = pneg %p682
      %p689 = scmp.eq.s32.totalorder %s37, 5
      %p690 = por %p688, %p689
      %p691 = scmp.ne.s32.totalorder %s683, %s686
      %p692 = scmp.eq.s32.totalorder %s37, 0
      %p693 = por %p691, %p692
      %p694 = scmp.ne.s32.totalorder %s683, %s686
      %p695 = scmp.eq.s32.totalorder %s42, 5
      %p696 = por %p694, %p695
      %p697 = scmp.ne.s32.totalorder %s686, %s687
      %p698 = scmp.eq.s32.totalorder %s42, 0
      %p699 = por %p697, %p698
      %p700 = scmp.ne.s32.totalorder %s686, %s687
      %p701 = scmp.eq.s32.totalorder %s43, 5
      %p702 = por %p700, %p701
      %p704 = scmp.ne.s32.totalorder %s687, %s703
      %p705 = scmp.eq.s32.totalorder %s43, 0
      %p706 = por %p704, %p705
      %p707 = scmp.le.s32.totalorder 1, %s37
      %p708 = scmp.lt.s32.totalorder %s37, 7
      %p709 = pnand %p707, %p708
      %p710 = pneg %p709
      // Predicated region
      $region9: #{tpu_custom_call.1} parent=5 // pred_check
        _
      $region10: #{tpu_custom_call.1} parent=5 // pred_check_branch
        %712 = sbr.rel (%p709) target = $region12
      $region11: #{tpu_custom_call.1} parent=5 // pred_region
        %s713 = ssub.s32 %s37, 1
        // Predicated region
        $region13: #{tpu_custom_call.1} parent=11 // pred_check
          %p714 = pneg %p96
        $region14: #{tpu_custom_call.1} parent=11 // pred_check_branch
          %716 = sbr.rel (%p714) target = $region16
        $region15: #{tpu_custom_call.1} parent=11 // pred_region
          _
        $region16: #{tpu_custom_call.1} parent=11 // pred_fallthru
          _
        // Predicated region
        $region17: #{tpu_custom_call.1} parent=11 // pred_check
          %p717 = pneg %p117
        $region18: #{tpu_custom_call.1} parent=11 // pred_check_branch
          %719 = sbr.rel (%p717) target = $region20
        $region19: #{tpu_custom_call.1} parent=11 // pred_region
          _
        $region20: #{tpu_custom_call.1} parent=11 // pred_fallthru
          _
        // Predicated region
        $region21: #{tpu_custom_call.1} parent=11 // pred_check
          %p720 = pneg %p138
        $region22: #{tpu_custom_call.1} parent=11 // pred_check_branch
          %722 = sbr.rel (%p720) target = $region24
        $region23: #{tpu_custom_call.1} parent=11 // pred_region
          _
        $region24: #{tpu_custom_call.1} parent=11 // pred_fallthru
          _
        // Predicated region
        $region25: #{tpu_custom_call.1} parent=11 // pred_check
          %p723 = pneg %p159
        $region26: #{tpu_custom_call.1} parent=11 // pred_check_branch
          %725 = sbr.rel (%p723) target = $region28
        $region27: #{tpu_custom_call.1} parent=11 // pred_region
          _
        $region28: #{tpu_custom_call.1} parent=11 // pred_fallthru
          _
      $region12: #{tpu_custom_call.1} parent=5 // pred_fallthru
        _
      %p726 = scmp.lt.s32.totalorder %s37, 6
      // Predicated region
      $region29: #{tpu_custom_call.1} parent=5 // pred_check
        %p727 = pneg %p726
      $region30: #{tpu_custom_call.1} parent=5 // pred_check_branch
        %729 = sbr.rel (%p727) target = $region32
      $region31: #{tpu_custom_call.1} parent=5 // pred_region
        // Predicated region
        $region33: #{tpu_custom_call.1} parent=31 // pred_check
          %p730 = pneg %p69
        $region34: #{tpu_custom_call.1} parent=31 // pred_check_branch
          %732 = sbr.rel (%p730) target = $region36
        $region35: #{tpu_custom_call.1} parent=31 // pred_region
          %p733 = scmp.lt.s32.totalorder %s44, 1
          %s734 = scalar_select %p733, %s44, 1
          %s735 = smul.addr %s734, 8
          %s736 = scalar_lea.vmem %s1, %s735
        $region36: #{tpu_custom_call.1} parent=31 // pred_fallthru
          _
        // Predicated region
        $region37: #{tpu_custom_call.1} parent=31 // pred_check
          %p737 = pneg %p185
        $region38: #{tpu_custom_call.1} parent=31 // pred_check_branch
          %739 = sbr.rel (%p737) target = $region40
        $region39: #{tpu_custom_call.1} parent=31 // pred_region
          %s740 = ssub.s32 %s45, 1
          %p741 = scmp.gt.s32.totalorder %s740, 0
          %s742 = scalar_select %p741, %s740, 0
          %p743 = scmp.lt.s32.totalorder %s742, 1
          %s744 = scalar_select %p743, %s742, 1
          %s745 = smul.addr %s744, 16
          %s746 = smul.addr %s745, 4
          %s747 = scalar_lea.vmem %s6, %s746
          %s748 = ssub.s32 %s45, 1
          %p749 = scmp.gt.s32.totalorder %s748, 0
          %s750 = scalar_select %p749, %s748, 0
        $region40: #{tpu_custom_call.1} parent=31 // pred_fallthru
          _
        // Predicated region
        $region41: #{tpu_custom_call.1} parent=31 // pred_check
          %p751 = pneg %p217
        $region42: #{tpu_custom_call.1} parent=31 // pred_check_branch
          %753 = sbr.rel (%p751) target = $region44
        $region43: #{tpu_custom_call.1} parent=31 // pred_region
          %s754 = ssub.s32 %s45, 1
          %p755 = scmp.gt.s32.totalorder %s754, 0
          %s756 = scalar_select %p755, %s754, 0
          %p757 = scmp.lt.s32.totalorder %s756, 1
          %s758 = scalar_select %p757, %s756, 1
          %s759 = smul.addr %s758, 16
          %s760 = smul.addr %s759, 4
          %s761 = scalar_lea.vmem %s7, %s760
          %s762 = ssub.s32 %s45, 1
          %p763 = scmp.gt.s32.totalorder %s762, 0
          %s764 = scalar_select %p763, %s762, 0
        $region44: #{tpu_custom_call.1} parent=31 // pred_fallthru
          _
        // Predicated region
        $region45: #{tpu_custom_call.1} parent=31 // pred_check
          %p765 = pneg %p249
        $region46: #{tpu_custom_call.1} parent=31 // pred_check_branch
          %767 = sbr.rel (%p765) target = $region48
        $region47: #{tpu_custom_call.1} parent=31 // pred_region
          %s768 = ssub.s32 %s45, 1
          %p769 = scmp.gt.s32.totalorder %s768, 0
          %s770 = scalar_select %p769, %s768, 0
          %p771 = scmp.lt.s32.totalorder %s770, 1
          %s772 = scalar_select %p771, %s770, 1
          %s773 = smul.addr %s772, 16
          %s774 = smul.addr %s773, 4
          %s775 = scalar_lea.vmem %s8, %s774
          %s776 = ssub.s32 %s45, 1
          %p777 = scmp.gt.s32.totalorder %s776, 0
          %s778 = scalar_select %p777, %s776, 0
        $region48: #{tpu_custom_call.1} parent=31 // pred_fallthru
          _
        // Predicated region
        $region49: #{tpu_custom_call.1} parent=31 // pred_check
          %p779 = pneg %p281
        $region50: #{tpu_custom_call.1} parent=31 // pred_check_branch
          %781 = sbr.rel (%p779) target = $region52
        $region51: #{tpu_custom_call.1} parent=31 // pred_region
          %s782 = ssub.s32 %s45, 1
          %p783 = scmp.gt.s32.totalorder %s782, 0
          %s784 = scalar_select %p783, %s782, 0
          %p785 = scmp.lt.s32.totalorder %s784, 1
          %s786 = scalar_select %p785, %s784, 1
          %s787 = smul.addr %s786, 4
          %s788 = scalar_lea.vmem %s9, %s787
          %s789 = ssub.s32 %s45, 1
          %p790 = scmp.gt.s32.totalorder %s789, 0
          %s791 = scalar_select %p790, %s789, 0
        $region52: #{tpu_custom_call.1} parent=31 // pred_fallthru
          _
        // Predicated region
        $region53: #{tpu_custom_call.1} parent=31 // pred_check
          %p792 = pneg %p313
        $region54: #{tpu_custom_call.1} parent=31 // pred_check_branch
          %794 = sbr.rel (%p792) target = $region56
        $region55: #{tpu_custom_call.1} parent=31 // pred_region
          %s795 = ssub.s32 %s45, 1
          %p796 = scmp.gt.s32.totalorder %s795, 0
          %s797 = scalar_select %p796, %s795, 0
          %p798 = scmp.lt.s32.totalorder %s797, 1
          %s799 = scalar_select %p798, %s797, 1
          %s800 = smul.addr %s799, 4
          %s801 = scalar_lea.vmem %s10, %s800
          %s802 = ssub.s32 %s45, 1
          %p803 = scmp.gt.s32.totalorder %s802, 0
          %s804 = scalar_select %p803, %s802, 0
        $region56: #{tpu_custom_call.1} parent=31 // pred_fallthru
          _
        // Predicated region
        $region57: #{tpu_custom_call.1} parent=31 // pred_check
          %p805 = pneg %p345
        $region58: #{tpu_custom_call.1} parent=31 // pred_check_branch
          %807 = sbr.rel (%p805) target = $region60
        $region59: #{tpu_custom_call.1} parent=31 // pred_region
          %s808 = ssub.s32 %s45, 1
          %p809 = scmp.gt.s32.totalorder %s808, 0
          %s810 = scalar_select %p809, %s808, 0
          %p811 = scmp.lt.s32.totalorder %s810, 1
          %s812 = scalar_select %p811, %s810, 1
          %s813 = smul.addr %s812, 4
          %s814 = scalar_lea.vmem %s11, %s813
          %s815 = ssub.s32 %s45, 1
          %p816 = scmp.gt.s32.totalorder %s815, 0
          %s817 = scalar_select %p816, %s815, 0
        $region60: #{tpu_custom_call.1} parent=31 // pred_fallthru
          _
        // Predicated region
        $region61: #{tpu_custom_call.1} parent=31 // pred_check
          %p818 = pneg %p377
        $region62: #{tpu_custom_call.1} parent=31 // pred_check_branch
          %820 = sbr.rel (%p818) target = $region64
        $region63: #{tpu_custom_call.1} parent=31 // pred_region
          %s821 = ssub.s32 %s45, 1
          %p822 = scmp.gt.s32.totalorder %s821, 0
          %s823 = scalar_select %p822, %s821, 0
          %p824 = scmp.lt.s32.totalorder %s823, 1
          %s825 = scalar_select %p824, %s823, 1
          %s826 = smul.addr %s825, 4
          %s827 = smul.addr %s826, 4
          %s828 = scalar_lea.vmem %s12, %s827
          %s829 = ssub.s32 %s45, 1
          %p830 = scmp.gt.s32.totalorder %s829, 0
          %s831 = scalar_select %p830, %s829, 0
        $region64: #{tpu_custom_call.1} parent=31 // pred_fallthru
          _
        // Predicated region
        $region65: #{tpu_custom_call.1} parent=31 // pred_check
          %p832 = pneg %p409
        $region66: #{tpu_custom_call.1} parent=31 // pred_check_branch
          %834 = sbr.rel (%p832) target = $region68
        $region67: #{tpu_custom_call.1} parent=31 // pred_region
          %s835 = ssub.s32 %s45, 1
          %p836 = scmp.gt.s32.totalorder %s835, 0
          %s837 = scalar_select %p836, %s835, 0
          %p838 = scmp.lt.s32.totalorder %s837, 1
          %s839 = scalar_select %p838, %s837, 1
          %s840 = scalar_lea.vmem %s13, %s839
          %s841 = ssub.s32 %s45, 1
          %p842 = scmp.gt.s32.totalorder %s841, 0
          %s843 = scalar_select %p842, %s841, 0
        $region68: #{tpu_custom_call.1} parent=31 // pred_fallthru
          _
        // Predicated region
        $region69: #{tpu_custom_call.1} parent=31 // pred_check
          %p844 = pneg %p441
        $region70: #{tpu_custom_call.1} parent=31 // pred_check_branch
          %846 = sbr.rel (%p844) target = $region72
        $region71: #{tpu_custom_call.1} parent=31 // pred_region
          %s847 = ssub.s32 %s45, 1
          %p848 = scmp.gt.s32.totalorder %s847, 0
          %s849 = scalar_select %p848, %s847, 0
          %p850 = scmp.lt.s32.totalorder %s849, 1
          %s851 = scalar_select %p850, %s849, 1
          %s852 = scalar_lea.vmem %s14, %s851
          %s853 = ssub.s32 %s45, 1
          %p854 = scmp.gt.s32.totalorder %s853, 0
          %s855 = scalar_select %p854, %s853, 0
        $region72: #{tpu_custom_call.1} parent=31 // pred_fallthru
          _
        // Predicated region
        $region73: #{tpu_custom_call.1} parent=31 // pred_check
          %p856 = pneg %p473
        $region74: #{tpu_custom_call.1} parent=31 // pred_check_branch
          %858 = sbr.rel (%p856) target = $region76
        $region75: #{tpu_custom_call.1} parent=31 // pred_region
          %s859 = ssub.s32 %s45, 1
          %p860 = scmp.gt.s32.totalorder %s859, 0
          %s861 = scalar_select %p860, %s859, 0
          %p862 = scmp.lt.s32.totalorder %s861, 1
          %s863 = scalar_select %p862, %s861, 1
          %s864 = scalar_lea.vmem %s15, %s863
          %s865 = ssub.s32 %s45, 1
          %p866 = scmp.gt.s32.totalorder %s865, 0
          %s867 = scalar_select %p866, %s865, 0
        $region76: #{tpu_custom_call.1} parent=31 // pred_fallthru
          _
        // Predicated region
        $region77: #{tpu_custom_call.1} parent=31 // pred_check
          %p868 = pneg %p505
        $region78: #{tpu_custom_call.1} parent=31 // pred_check_branch
          %870 = sbr.rel (%p868) target = $region80
        $region79: #{tpu_custom_call.1} parent=31 // pred_region
          %s871 = ssub.s32 %s45, 1
          %p872 = scmp.gt.s32.totalorder %s871, 0
          %s873 = scalar_select %p872, %s871, 0
          %p874 = scmp.lt.s32.totalorder %s873, 1
          %s875 = scalar_select %p874, %s873, 1
          %s876 = smul.addr %s875, 4
          %s877 = smul.addr %s876, 4
          %s878 = scalar_lea.vmem %s16, %s877
          %s879 = ssub.s32 %s45, 1
          %p880 = scmp.gt.s32.totalorder %s879, 0
          %s881 = scalar_select %p880, %s879, 0
        $region80: #{tpu_custom_call.1} parent=31 // pred_fallthru
          _
        // Predicated region
        $region81: #{tpu_custom_call.1} parent=31 // pred_check
          %p882 = pneg %p537
        $region82: #{tpu_custom_call.1} parent=31 // pred_check_branch
          %884 = sbr.rel (%p882) target = $region84
        $region83: #{tpu_custom_call.1} parent=31 // pred_region
          %s885 = ssub.s32 %s45, 1
          %p886 = scmp.gt.s32.totalorder %s885, 0
          %s887 = scalar_select %p886, %s885, 0
          %p888 = scmp.lt.s32.totalorder %s887, 1
          %s889 = scalar_select %p888, %s887, 1
          %s890 = scalar_lea.vmem %s17, %s889
          %s891 = ssub.s32 %s45, 1
          %p892 = scmp.gt.s32.totalorder %s891, 0
          %s893 = scalar_select %p892, %s891, 0
        $region84: #{tpu_custom_call.1} parent=31 // pred_fallthru
          _
        // Predicated region
        $region85: #{tpu_custom_call.1} parent=31 // pred_check
          %p894 = pneg %p569
        $region86: #{tpu_custom_call.1} parent=31 // pred_check_branch
          %896 = sbr.rel (%p894) target = $region88
        $region87: #{tpu_custom_call.1} parent=31 // pred_region
          %s897 = ssub.s32 %s45, 1
          %p898 = scmp.gt.s32.totalorder %s897, 0
          %s899 = scalar_select %p898, %s897, 0
          %p900 = scmp.lt.s32.totalorder %s899, 1
          %s901 = scalar_select %p900, %s899, 1
          %s902 = smul.addr %s901, 8
          %s903 = smul.addr %s902, 4
          %s904 = scalar_lea.vmem %s18, %s903
          %s905 = ssub.s32 %s45, 1
          %p906 = scmp.gt.s32.totalorder %s905, 0
          %s907 = scalar_select %p906, %s905, 0
        $region88: #{tpu_custom_call.1} parent=31 // pred_fallthru
          _
        // Predicated region
        $region89: #{tpu_custom_call.1} parent=31 // pred_check
          %p908 = pneg %p601
        $region90: #{tpu_custom_call.1} parent=31 // pred_check_branch
          %910 = sbr.rel (%p908) target = $region92
        $region91: #{tpu_custom_call.1} parent=31 // pred_region
          %s911 = ssub.s32 %s45, 1
          %p912 = scmp.gt.s32.totalorder %s911, 0
          %s913 = scalar_select %p912, %s911, 0
          %p914 = scmp.lt.s32.totalorder %s913, 1
          %s915 = scalar_select %p914, %s913, 1
          %s916 = scalar_lea.vmem %s19, %s915
          %s917 = ssub.s32 %s45, 1
          %p918 = scmp.gt.s32.totalorder %s917, 0
          %s919 = scalar_select %p918, %s917, 0
        $region92: #{tpu_custom_call.1} parent=31 // pred_fallthru
          _
        // Predicated region
        $region93: #{tpu_custom_call.1} parent=31 // pred_check
          %p920 = pneg %p633
        $region94: #{tpu_custom_call.1} parent=31 // pred_check_branch
          %922 = sbr.rel (%p920) target = $region96
        $region95: #{tpu_custom_call.1} parent=31 // pred_region
          %s923 = ssub.s32 %s45, 1
          %p924 = scmp.gt.s32.totalorder %s923, 0
          %s925 = scalar_select %p924, %s923, 0
          %p926 = scmp.lt.s32.totalorder %s925, 1
          %s927 = scalar_select %p926, %s925, 1
          %s928 = scalar_lea.vmem %s20, %s927
          %s929 = ssub.s32 %s45, 1
          %p930 = scmp.gt.s32.totalorder %s929, 0
          %s931 = scalar_select %p930, %s929, 0
        $region96: #{tpu_custom_call.1} parent=31 // pred_fallthru
          _
        // Predicated region
        $region97: #{tpu_custom_call.1} parent=31 // pred_check
          %p932 = pneg %p665
        $region98: #{tpu_custom_call.1} parent=31 // pred_check_branch
          %934 = sbr.rel (%p932) target = $region100
        $region99: #{tpu_custom_call.1} parent=31 // pred_region
          %s935 = ssub.s32 %s45, 1
          %p936 = scmp.gt.s32.totalorder %s935, 0
          %s937 = scalar_select %p936, %s935, 0
          %p938 = scmp.lt.s32.totalorder %s937, 1
          %s939 = scalar_select %p938, %s937, 1
          %s940 = scalar_lea.vmem %s21, %s939
          %s941 = ssub.s32 %s45, 1
          %p942 = scmp.gt.s32.totalorder %s941, 0
          %s943 = scalar_select %p942, %s941, 0
        $region100: #{tpu_custom_call.1} parent=31 // pred_fallthru
          _
      $region32: #{tpu_custom_call.1} parent=5 // pred_fallthru
        _
      %p944 = scmp.le.s32.totalorder 1, %s37
      %p945 = scmp.lt.s32.totalorder %s37, 7
      %p946 = pnand %p944, %p945
      %p947 = pneg %p946
      // Predicated region
      $region101: #{tpu_custom_call.1} parent=5 // pred_check
        _
      $region102: #{tpu_custom_call.1} parent=5 // pred_check_branch
        %949 = sbr.rel (%p946) target = $region104
      $region103: #{tpu_custom_call.1} parent=5 // pred_region
        %s950 = ssub.s32 %s37, 1
        %p951 = scmp.lt.s32.totalorder %s46, 1
        %s952 = scalar_select %p951, %s46, 1
        %s953 = smul.addr %s952, 8
        %s954 = scalar_lea.vmem %s1, %s953
        %p955 = pneg %p75
        %p956 = pneg %p72
        %p957 = pneg %p96
        %p958 = pneg %p93
        %p959 = pneg %p117
        %p960 = pneg %p114
        %p961 = pneg %p138
        %p962 = pneg %p135
        %p963 = pneg %p159
        %p964 = pneg %p156
        %s965 = ssub.s32 %s47, 1
        %p966 = scmp.gt.s32.totalorder %s965, 0
        %s967 = scalar_select %p966, %s965, 0
        %p968 = scmp.lt.s32.totalorder %s967, 1
        %s969 = scalar_select %p968, %s967, 1
        %s970 = smul.addr %s969, 16
        %s971 = smul.addr %s970, 4
        %s972 = scalar_lea.vmem %s6, %s971
        %p973 = pneg %p191
        %p974 = pneg %p188
        %s975 = ssub.s32 %s47, 1
        %p976 = scmp.gt.s32.totalorder %s975, 0
        %s977 = scalar_select %p976, %s975, 0
        %p978 = scmp.lt.s32.totalorder %s977, 1
        %s979 = scalar_select %p978, %s977, 1
        %s980 = smul.addr %s979, 16
        %s981 = smul.addr %s980, 4
        %s982 = scalar_lea.vmem %s7, %s981
        %p983 = pneg %p223
        %p984 = pneg %p220
        %s985 = ssub.s32 %s47, 1
        %p986 = scmp.gt.s32.totalorder %s985, 0
        %s987 = scalar_select %p986, %s985, 0
        %p988 = scmp.lt.s32.totalorder %s987, 1
        %s989 = scalar_select %p988, %s987, 1
        %s990 = smul.addr %s989, 16
        %s991 = smul.addr %s990, 4
        %s992 = scalar_lea.vmem %s8, %s991
        %p993 = pneg %p255
        %p994 = pneg %p252
        %s995 = ssub.s32 %s47, 1
        %p996 = scmp.gt.s32.totalorder %s995, 0
        %s997 = scalar_select %p996, %s995, 0
        %p998 = scmp.lt.s32.totalorder %s997, 1
        %s999 = scalar_select %p998, %s997, 1
        %s1000 = smul.addr %s999, 4
        %s1001 = scalar_lea.vmem %s9, %s1000
        %p1002 = pneg %p287
        %p1003 = pneg %p284
        %s1004 = ssub.s32 %s47, 1
        %p1005 = scmp.gt.s32.totalorder %s1004, 0
        %s1006 = scalar_select %p1005, %s1004, 0
        %p1007 = scmp.lt.s32.totalorder %s1006, 1
        %s1008 = scalar_select %p1007, %s1006, 1
        %s1009 = smul.addr %s1008, 4
        %s1010 = scalar_lea.vmem %s10, %s1009
        %p1011 = pneg %p319
        %p1012 = pneg %p316
        %s1013 = ssub.s32 %s47, 1
        %p1014 = scmp.gt.s32.totalorder %s1013, 0
        %s1015 = scalar_select %p1014, %s1013, 0
        %p1016 = scmp.lt.s32.totalorder %s1015, 1
        %s1017 = scalar_select %p1016, %s1015, 1
        %s1018 = smul.addr %s1017, 4
        %s1019 = scalar_lea.vmem %s11, %s1018
        %p1020 = pneg %p351
        %p1021 = pneg %p348
        %s1022 = ssub.s32 %s47, 1
        %p1023 = scmp.gt.s32.totalorder %s1022, 0
        %s1024 = scalar_select %p1023, %s1022, 0
        %p1025 = scmp.lt.s32.totalorder %s1024, 1
        %s1026 = scalar_select %p1025, %s1024, 1
        %s1027 = smul.addr %s1026, 4
        %s1028 = smul.addr %s1027, 4
        %s1029 = scalar_lea.vmem %s12, %s1028
        %p1030 = pneg %p383
        %p1031 = pneg %p380
        %s1032 = ssub.s32 %s47, 1
        %p1033 = scmp.gt.s32.totalorder %s1032, 0
        %s1034 = scalar_select %p1033, %s1032, 0
        %p1035 = scmp.lt.s32.totalorder %s1034, 1
        %s1036 = scalar_select %p1035, %s1034, 1
        %s1037 = scalar_lea.vmem %s13, %s1036
        %p1038 = pneg %p415
        %p1039 = pneg %p412
        %s1040 = ssub.s32 %s47, 1
        %p1041 = scmp.gt.s32.totalorder %s1040, 0
        %s1042 = scalar_select %p1041, %s1040, 0
        %p1043 = scmp.lt.s32.totalorder %s1042, 1
        %s1044 = scalar_select %p1043, %s1042, 1
        %s1045 = scalar_lea.vmem %s14, %s1044
        %p1046 = pneg %p447
        %p1047 = pneg %p444
        %s1048 = ssub.s32 %s47, 1
        %p1049 = scmp.gt.s32.totalorder %s1048, 0
        %s1050 = scalar_select %p1049, %s1048, 0
        %p1051 = scmp.lt.s32.totalorder %s1050, 1
        %s1052 = scalar_select %p1051, %s1050, 1
        %s1053 = scalar_lea.vmem %s15, %s1052
        %p1054 = pneg %p479
        %p1055 = pneg %p476
        %s1056 = ssub.s32 %s47, 1
        %p1057 = scmp.gt.s32.totalorder %s1056, 0
        %s1058 = scalar_select %p1057, %s1056, 0
        %p1059 = scmp.lt.s32.totalorder %s1058, 1
        %s1060 = scalar_select %p1059, %s1058, 1
        %s1061 = smul.addr %s1060, 4
        %s1062 = smul.addr %s1061, 4
        %s1063 = scalar_lea.vmem %s16, %s1062
        %p1064 = pneg %p511
        %p1065 = pneg %p508
        %s1066 = ssub.s32 %s47, 1
        %p1067 = scmp.gt.s32.totalorder %s1066, 0
        %s1068 = scalar_select %p1067, %s1066, 0
        %p1069 = scmp.lt.s32.totalorder %s1068, 1
        %s1070 = scalar_select %p1069, %s1068, 1
        %s1071 = scalar_lea.vmem %s17, %s1070
        %p1072 = pneg %p543
        %p1073 = pneg %p540
        %s1074 = ssub.s32 %s47, 1
        %p1075 = scmp.gt.s32.totalorder %s1074, 0
        %s1076 = scalar_select %p1075, %s1074, 0
        %p1077 = scmp.lt.s32.totalorder %s1076, 1
        %s1078 = scalar_select %p1077, %s1076, 1
        %s1079 = smul.addr %s1078, 8
        %s1080 = smul.addr %s1079, 4
        %s1081 = scalar_lea.vmem %s18, %s1080
        %p1082 = pneg %p575
        %p1083 = pneg %p572
        %s1084 = ssub.s32 %s47, 1
        %p1085 = scmp.gt.s32.totalorder %s1084, 0
        %s1086 = scalar_select %p1085, %s1084, 0
        %p1087 = scmp.lt.s32.totalorder %s1086, 1
        %s1088 = scalar_select %p1087, %s1086, 1
        %s1089 = scalar_lea.vmem %s19, %s1088
        %p1090 = pneg %p607
        %p1091 = pneg %p604
        %s1092 = ssub.s32 %s47, 1
        %p1093 = scmp.gt.s32.totalorder %s1092, 0
        %s1094 = scalar_select %p1093, %s1092, 0
        %p1095 = scmp.lt.s32.totalorder %s1094, 1
        %s1096 = scalar_select %p1095, %s1094, 1
        %s1097 = scalar_lea.vmem %s20, %s1096
        %p1098 = pneg %p639
        %p1099 = pneg %p636
        %s1100 = ssub.s32 %s47, 1
        %p1101 = scmp.gt.s32.totalorder %s1100, 0
        %s1102 = scalar_select %p1101, %s1100, 0
        %p1103 = scmp.lt.s32.totalorder %s1102, 1
        %s1104 = scalar_select %p1103, %s1102, 1
        %s1105 = scalar_lea.vmem %s21, %s1104
        %p1106 = pneg %p671
        %p1107 = pneg %p668
        %p1108 = pneg %p699
        %p1109 = pneg %p696
        %s1110 = sand.u32 %s686, 1
        %s1111 = scalar_lea.sflag [#allocation6], %s1110
        %s1112 = sand.u32 %s686, 1
        %s1113 = smul.addr %s1112, 8
        %s1114 = scalar_lea.vmem [#allocation5], %s1113
        %p1115 = scmp.lt.s32.totalorder %s46, 1
        %s1116 = scalar_select %p1115, %s46, 1
        %s1117 = smul.addr %s1116, 8
        %s1118 = scalar_lea.vmem %s1, %s1117
        %s1119 = ssub.s32 %s47, 1
        %p1120 = scmp.gt.s32.totalorder %s1119, 0
        %s1121 = scalar_select %p1120, %s1119, 0
        %p1122 = scmp.lt.s32.totalorder %s1121, 1
        %s1123 = scalar_select %p1122, %s1121, 1
        %s1124 = smul.addr %s1123, 16
        %s1125 = smul.addr %s1124, 4
        %s1126 = scalar_lea.vmem %s6, %s1125
        %s1127 = ssub.s32 %s47, 1
        %p1128 = scmp.gt.s32.totalorder %s1127, 0
        %s1129 = scalar_select %p1128, %s1127, 0
        %s1130 = ssub.s32 %s47, 1
        %p1131 = scmp.gt.s32.totalorder %s1130, 0
        %s1132 = scalar_select %p1131, %s1130, 0
        %p1133 = scmp.lt.s32.totalorder %s1132, 1
        %s1134 = scalar_select %p1133, %s1132, 1
        %s1135 = smul.addr %s1134, 16
        %s1136 = smul.addr %s1135, 4
        %s1137 = scalar_lea.vmem %s7, %s1136
        %s1138 = ssub.s32 %s47, 1
        %p1139 = scmp.gt.s32.totalorder %s1138, 0
        %s1140 = scalar_select %p1139, %s1138, 0
        %s1141 = ssub.s32 %s47, 1
        %p1142 = scmp.gt.s32.totalorder %s1141, 0
        %s1143 = scalar_select %p1142, %s1141, 0
        %p1144 = scmp.lt.s32.totalorder %s1143, 1
        %s1145 = scalar_select %p1144, %s1143, 1
        %s1146 = smul.addr %s1145, 16
        %s1147 = smul.addr %s1146, 4
        %s1148 = scalar_lea.vmem %s8, %s1147
        %s1149 = ssub.s32 %s47, 1
        %p1150 = scmp.gt.s32.totalorder %s1149, 0
        %s1151 = scalar_select %p1150, %s1149, 0
        %s1152 = ssub.s32 %s47, 1
        %p1153 = scmp.gt.s32.totalorder %s1152, 0
        %s1154 = scalar_select %p1153, %s1152, 0
        %p1155 = scmp.lt.s32.totalorder %s1154, 1
        %s1156 = scalar_select %p1155, %s1154, 1
        %s1157 = smul.addr %s1156, 4
        %s1158 = scalar_lea.vmem %s9, %s1157
        %s1159 = ssub.s32 %s47, 1
        %p1160 = scmp.gt.s32.totalorder %s1159, 0
        %s1161 = scalar_select %p1160, %s1159, 0
        %s1162 = ssub.s32 %s47, 1
        %p1163 = scmp.gt.s32.totalorder %s1162, 0
        %s1164 = scalar_select %p1163, %s1162, 0
        %p1165 = scmp.lt.s32.totalorder %s1164, 1
        %s1166 = scalar_select %p1165, %s1164, 1
        %s1167 = smul.addr %s1166, 4
        %s1168 = scalar_lea.vmem %s10, %s1167
        %s1169 = ssub.s32 %s47, 1
        %p1170 = scmp.gt.s32.totalorder %s1169, 0
        %s1171 = scalar_select %p1170, %s1169, 0
        %s1172 = ssub.s32 %s47, 1
        %p1173 = scmp.gt.s32.totalorder %s1172, 0
        %s1174 = scalar_select %p1173, %s1172, 0
        %p1175 = scmp.lt.s32.totalorder %s1174, 1
        %s1176 = scalar_select %p1175, %s1174, 1
        %s1177 = smul.addr %s1176, 4
        %s1178 = scalar_lea.vmem %s11, %s1177
        %s1179 = ssub.s32 %s47, 1
        %p1180 = scmp.gt.s32.totalorder %s1179, 0
        %s1181 = scalar_select %p1180, %s1179, 0
        %s1182 = ssub.s32 %s47, 1
        %p1183 = scmp.gt.s32.totalorder %s1182, 0
        %s1184 = scalar_select %p1183, %s1182, 0
        %p1185 = scmp.lt.s32.totalorder %s1184, 1
        %s1186 = scalar_select %p1185, %s1184, 1
        %s1187 = smul.addr %s1186, 4
        %s1188 = smul.addr %s1187, 4
        %s1189 = scalar_lea.vmem %s12, %s1188
        %s1190 = ssub.s32 %s47, 1
        %p1191 = scmp.gt.s32.totalorder %s1190, 0
        %s1192 = scalar_select %p1191, %s1190, 0
        %s1193 = ssub.s32 %s47, 1
        %p1194 = scmp.gt.s32.totalorder %s1193, 0
        %s1195 = scalar_select %p1194, %s1193, 0
        %p1196 = scmp.lt.s32.totalorder %s1195, 1
        %s1197 = scalar_select %p1196, %s1195, 1
        %s1198 = scalar_lea.vmem %s13, %s1197
        %s1199 = ssub.s32 %s47, 1
        %p1200 = scmp.gt.s32.totalorder %s1199, 0
        %s1201 = scalar_select %p1200, %s1199, 0
        %s1202 = ssub.s32 %s47, 1
        %p1203 = scmp.gt.s32.totalorder %s1202, 0
        %s1204 = scalar_select %p1203, %s1202, 0
        %p1205 = scmp.lt.s32.totalorder %s1204, 1
        %s1206 = scalar_select %p1205, %s1204, 1
        %s1207 = scalar_lea.vmem %s14, %s1206
        %s1208 = ssub.s32 %s47, 1
        %p1209 = scmp.gt.s32.totalorder %s1208, 0
        %s1210 = scalar_select %p1209, %s1208, 0
        %s1211 = ssub.s32 %s47, 1
        %p1212 = scmp.gt.s32.totalorder %s1211, 0
        %s1213 = scalar_select %p1212, %s1211, 0
        %p1214 = scmp.lt.s32.totalorder %s1213, 1
        %s1215 = scalar_select %p1214, %s1213, 1
        %s1216 = scalar_lea.vmem %s15, %s1215
        %s1217 = ssub.s32 %s47, 1
        %p1218 = scmp.gt.s32.totalorder %s1217, 0
        %s1219 = scalar_select %p1218, %s1217, 0
        %s1220 = ssub.s32 %s47, 1
        %p1221 = scmp.gt.s32.totalorder %s1220, 0
        %s1222 = scalar_select %p1221, %s1220, 0
        %p1223 = scmp.lt.s32.totalorder %s1222, 1
        %s1224 = scalar_select %p1223, %s1222, 1
        %s1225 = smul.addr %s1224, 4
        %s1226 = smul.addr %s1225, 4
        %s1227 = scalar_lea.vmem %s16, %s1226
        %s1228 = ssub.s32 %s47, 1
        %p1229 = scmp.gt.s32.totalorder %s1228, 0
        %s1230 = scalar_select %p1229, %s1228, 0
        %s1231 = ssub.s32 %s47, 1
        %p1232 = scmp.gt.s32.totalorder %s1231, 0
        %s1233 = scalar_select %p1232, %s1231, 0
        %p1234 = scmp.lt.s32.totalorder %s1233, 1
        %s1235 = scalar_select %p1234, %s1233, 1
        %s1236 = scalar_lea.vmem %s17, %s1235
        %s1237 = ssub.s32 %s47, 1
        %p1238 = scmp.gt.s32.totalorder %s1237, 0
        %s1239 = scalar_select %p1238, %s1237, 0
        %s1240 = ssub.s32 %s47, 1
        %p1241 = scmp.gt.s32.totalorder %s1240, 0
        %s1242 = scalar_select %p1241, %s1240, 0
        %p1243 = scmp.lt.s32.totalorder %s1242, 1
        %s1244 = scalar_select %p1243, %s1242, 1
        %s1245 = smul.addr %s1244, 8
        %s1246 = smul.addr %s1245, 4
        %s1247 = scalar_lea.vmem %s18, %s1246
        %s1248 = ssub.s32 %s47, 1
        %p1249 = scmp.gt.s32.totalorder %s1248, 0
        %s1250 = scalar_select %p1249, %s1248, 0
        %s1251 = ssub.s32 %s47, 1
        %p1252 = scmp.gt.s32.totalorder %s1251, 0
        %s1253 = scalar_select %p1252, %s1251, 0
        %p1254 = scmp.lt.s32.totalorder %s1253, 1
        %s1255 = scalar_select %p1254, %s1253, 1
        %s1256 = scalar_lea.vmem %s19, %s1255
        %s1257 = ssub.s32 %s47, 1
        %p1258 = scmp.gt.s32.totalorder %s1257, 0
        %s1259 = scalar_select %p1258, %s1257, 0
        %s1260 = ssub.s32 %s47, 1
        %p1261 = scmp.gt.s32.totalorder %s1260, 0
        %s1262 = scalar_select %p1261, %s1260, 0
        %p1263 = scmp.lt.s32.totalorder %s1262, 1
        %s1264 = scalar_select %p1263, %s1262, 1
        %s1265 = scalar_lea.vmem %s20, %s1264
        %s1266 = ssub.s32 %s47, 1
        %p1267 = scmp.gt.s32.totalorder %s1266, 0
        %s1268 = scalar_select %p1267, %s1266, 0
        %s1269 = ssub.s32 %s47, 1
        %p1270 = scmp.gt.s32.totalorder %s1269, 0
        %s1271 = scalar_select %p1270, %s1269, 0
        %p1272 = scmp.lt.s32.totalorder %s1271, 1
        %s1273 = scalar_select %p1272, %s1271, 1
        %s1274 = scalar_lea.vmem %s21, %s1273
        %s1275 = ssub.s32 %s47, 1
        %p1276 = scmp.gt.s32.totalorder %s1275, 0
        %s1277 = scalar_select %p1276, %s1275, 0
        %p1279 = scmp.eq.s32.totalorder %s47, 0
        // Predicated region
        $region105: #{tpu_custom_call.1} parent=103 // pred_check
          %p1280 = pneg %p1279
        $region106: #{tpu_custom_call.1} parent=103 // pred_check_branch
          %1282 = sbr.rel (%p1280) target = $region108
        $region107: #{tpu_custom_call.1} parent=103 // pred_region
          %v1283 = vld [vmem:[%s1118] sm:$0xff]
          %v1284 = vlaneseq
          %v1285 = vand.u32 %v1284, 127
          %1286 = vset.pattern.permute.xlu0 0
          %1287 = vperm.xlu0 %1286, %v1283
          %v1288 = vpop.permute.xlu0 %1287
          %vm1289 = vcmp.eq.s32.totalorder %v1288, %v1285
          %v1290 = vsel %vm1289, 1, 0
          %v1291 = vcvt.s32.f32 %v1290
          %v1292 = vld [vmem:[%s2] sm:$0xff]
          %v1293 = vld [vmem:[%s2 + $0x8] sm:$0xff]
          %v1294 = vld [vmem:[%s2 + $0x10] sm:$0xff]
          %v1295 = vld [vmem:[%s2 + $0x18] sm:$0xff]
          %v1296 = vld [vmem:[%s2 + $0x20] sm:$0xff]
          %v1297 = vld [vmem:[%s2 + $0x28] sm:$0xff]
          %v1298 = vld [vmem:[%s2 + $0x30] sm:$0xff]
          %v1299 = vld [vmem:[%s3] sm:$0xff]
          %vm1300 = vcmask 457728
          %v1302 = vsel %vm1300, %v1291, 0
          %1304 = vmatprep.subr.mxu0 0.0
          %1305 = vmatpush1.msra.mxu0 %v1292
          %1306 = vmatprep.subr.mxu0 0.0
          %1307 = vmatpush1.msra.mxu0 %v1293
          %1308 = vmatprep.subr.mxu0 0.0
          %1309 = vmatpush1.msra.mxu0 %v1294
          %1310 = vmatprep.subr.mxu0 0.0
          %1311 = vmatpush1.msra.mxu0 %v1295
          %1312 = vmatprep.subr.mxu0 0.0
          %1313 = vmatpush1.msra.mxu0 %v1296
          %1314 = vmatprep.subr.mxu0 0.0
          %1315 = vmatpush1.msra.mxu0 %v1297
          %1316 = vmatprep.subr.mxu0 0.0
          %1317 = vmatpush1.msra.mxu0 %v1298
          %1318 = vmatprep.subr.mxu0 0.0
          %1319 = vmatpush1.msra.mxu0 0.0
          %1320 = vmatprep.subr.mxu0 0.0
          %1321 = vmatpush1.msra.mxu0 0.0
          %1322 = vmatprep.subr.mxu0 0.0
          %1323 = vmatpush1.msra.mxu0 0.0
          %1324 = vmatprep.subr.mxu0 0.0
          %1325 = vmatpush1.msra.mxu0 0.0
          %1326 = vmatprep.subr.mxu0 0.0
          %1327 = vmatpush1.msra.mxu0 0.0
          %1328 = vmatprep.subr.mxu0 0.0
          %1329 = vmatpush1.msra.mxu0 0.0
          %1330 = vmatprep.subr.mxu0 0.0
          %1331 = vmatpush1.msra.mxu0 0.0
          %1332 = vmatprep.subr.mxu0 0.0
          %1333 = vmatpush1.msra.mxu0 0.0
          %1334 = vmatprep.subr.mxu0 0.0
          %1335 = vmatpush1.msra.mxu0 0.0
          %1336 = vmatprep.subr.mxu0 0.0
          %1337 = vmatpush1.msra.mxu0 0.0
          %1338 = vmatprep.subr.mxu0 0.0
          %1339 = vmatpush1.msra.mxu0 0.0
          %1340 = vmatprep.subr.mxu0 0.0
          %1341 = vmatpush1.msra.mxu0 0.0
          %1342 = vmatprep.subr.mxu0 0.0
          %1343 = vmatpush1.msra.mxu0 0.0
          %1344 = vmatprep.subr.mxu0 0.0
          %1345 = vmatpush1.msra.mxu0 0.0
          %1346 = vmatprep.subr.mxu0 0.0
          %1347 = vmatpush1.msra.mxu0 0.0
          %1348 = vmatprep.subr.mxu0 0.0
          %1349 = vmatpush1.msra.mxu0 0.0
          %1350 = vmatprep.subr.mxu0 0.0
          %1351 = vmatpush1.msra.mxu0 0.0
          %1352 = vmatprep.subr.mxu0 0.0
          %1353 = vmatpush1.msra.mxu0 0.0
          %1354 = vmatprep.subr.mxu0 0.0
          %1355 = vmatpush1.msra.mxu0 0.0
          %1356 = vmatprep.subr.mxu0 0.0
          %1357 = vmatpush1.msra.mxu0 0.0
          %1358 = vmatprep.subr.mxu0 0.0
          %1359 = vmatpush1.msra.mxu0 0.0
          %1360 = vmatprep.subr.mxu0 0.0
          %1361 = vmatpush1.msra.mxu0 0.0
          %1362 = vmatprep.subr.mxu0 0.0
          %1363 = vmatpush1.msra.mxu0 0.0
          %1364 = vmatprep.subr.mxu0 0.0
          %1365 = vmatpush1.msra.mxu0 0.0
          %1366 = vmatprep.subr.mxu0 0.0
          %1367 = vmatpush1.msra.mxu0 0.0
          %1368 = vmatprep.mubr.f32.mxu0 0.0
          %1369 = vmatmul.mubr.f32.gmra.mrb[0].mxu0 %v1302
          %v1370 = vpop.f32.mrb[0].mxu0
          %v1371 = vadd.f32 %v1299, %v1370
          %v1372 = vpop.f32.mrb[0].mxu0
          %1373 = vdwg.mxu0
          %v1374 = vld [vmem:[%s4] sm:$0x1]
          %v1375 = vld [vmem:[%s5] sm:$0x1]
          %vm1376 = vcmask 261120
          %v1377 = vsel %vm1376, %v1371, 0.0
          %1378 = vadd.xlane.f32.xlu0 %v1377
          %v1379 = vpop.xlane.xlu0 %1378
          %v1380 = vmul.f32 %v1371, %v1371
          %v1381 = vsel %vm1376, %v1380, 0.0
          %1382 = vadd.xlane.f32.xlu0 %v1381
          %v1383 = vpop.xlane.xlu0 %1382
          %v1384 = vmul.f32 %v1379, 0.03125
          %v1385 = vmul.f32 %v1383, 0.03125
          %v1386 = vmul.f32 %v1384, %v1384
          %v1387 = vsub.f32 %v1385, %v1386
          %v1388 = vsub.f32 %v1371, %v1384
          %v1389 = vadd.f32 %v1387, 1e-05
          %v1390 = vrsqrt.pop %v1389
          %v1391 = vmul.f32 %v1388, %v1390
          %v1393 = vlaneseq
          %v1394 = vshrl.u32 %v1393, 7
          %v1395 = vsub.s32 0, %v1394
          %v1396 = vrot.slane %v1374, %v1395
          %v1398 = vmul.f32 %v1391, %v1396
          %v1400 = vlaneseq
          %v1401 = vshrl.u32 %v1400, 7
          %v1402 = vsub.s32 0, %v1401
          %v1403 = vrot.slane %v1375, %v1402
          %v1405 = vadd.f32 %v1398, %v1403
          %1406 = vst.msk [vmem:[#allocation2] sm:$0xff] %vm1376, %v1405
        $region108: #{tpu_custom_call.1} parent=103 // pred_fallthru
          _
        %p1407 = scmp.gt.s32.totalorder %s47, 0
        // Predicated region
        $region109: #{tpu_custom_call.1} parent=103 // pred_check
          %p1408 = pneg %p1407
        $region110: #{tpu_custom_call.1} parent=103 // pred_check_branch
          %1410 = sbr.rel (%p1408) target = $region112
        $region111: #{tpu_custom_call.1} parent=103 // pred_region
          %v1411 = vld [vmem:[#allocation2] sm:$0xff]
          %v1412 = vpack.c.bf16 %v1411, %v1411
          %v1413 = vld [vmem:[%s1126] sm:$0xf]
          %v1414 = vld [vmem:[%s1126 + $0x4] sm:$0xf]
          %v1415 = vld [vmem:[%s1126 + $0x8] sm:$0xf]
          %v1416 = vld [vmem:[%s1126 + $0xc] sm:$0xf]
          %v1417 = vld [vmem:[%s1126 + $0x10] sm:$0xf]
          %v1418 = vld [vmem:[%s1126 + $0x14] sm:$0xf]
          %v1419 = vld [vmem:[%s1126 + $0x18] sm:$0xf]
          %v1420 = vld [vmem:[%s1126 + $0x1c] sm:$0xf]
          %v1421 = vld [vmem:[%s1126 + $0x20] sm:$0xf]
          %v1422 = vld [vmem:[%s1126 + $0x24] sm:$0xf]
          %v1423 = vld [vmem:[%s1126 + $0x28] sm:$0xf]
          %v1424 = vld [vmem:[%s1126 + $0x2c] sm:$0xf]
          %v1425 = vld [vmem:[%s1126 + $0x30] sm:$0xf]
          %v1426 = vld [vmem:[%s1126 + $0x34] sm:$0xf]
          %v1427 = vld [vmem:[%s1126 + $0x38] sm:$0xf]
          %v1428 = vld [vmem:[%s1126 + $0x3c] sm:$0xf]
          %v1429 = vld [vmem:[%s1158] sm:$0x1]
          %v1430 = vld [vmem:[%s1158 + $0x1] sm:$0x1]
          %v1431 = vld [vmem:[%s1158 + $0x2] sm:$0x1]
          %v1432 = vld [vmem:[%s1158 + $0x3] sm:$0x1]
          %v1437 = vlaneseq
          %v1438 = vshrl.u32 %v1437, 7
          %v1439 = vsub.s32 0, %v1438
          %v1440 = vrot.slane %v1429, %v1439
          %v1441 = vlaneseq
          %v1442 = vshrl.u32 %v1441, 7
          %v1443 = vsub.s32 0, %v1442
          %v1444 = vrot.slane %v1430, %v1443
          %v1445 = vlaneseq
          %v1446 = vshrl.u32 %v1445, 7
          %v1447 = vsub.s32 0, %v1446
          %v1448 = vrot.slane %v1431, %v1447
          %v1449 = vlaneseq
          %v1450 = vshrl.u32 %v1449, 7
          %v1451 = vsub.s32 0, %v1450
          %v1452 = vrot.slane %v1432, %v1451
          %v1461 = vunpack.c.l.b16 %v1413
          %v1462 = vunpack.c.l.b16 %v1414
          %v1463 = vunpack.c.l.b16 %v1415
          %v1464 = vunpack.c.l.b16 %v1416
          %v1465 = vpack.c.b16 %v1462, %v1461
          %v1466 = vpack.c.b16 %v1464, %v1463
          %vm1469 = vcmask 261120
          %v1471 = vsel %vm1469, %v1412, 0
          %1473 = vmatprep.subr.bf16.mxu0 0
          %1474 = vmatpush1.bf16.msra.mxu0 %v1465
          %1475 = vmatprep.subr.bf16.mxu0 0
          %1476 = vmatpush1.bf16.msra.mxu0 %v1466
          %1477 = vmatprep.subr.bf16.mxu0 0
          %1478 = vmatpush1.bf16.msra.mxu0 0
          %1479 = vmatprep.subr.bf16.mxu0 0
          %1480 = vmatpush1.bf16.msra.mxu0 0
          %1481 = vmatprep.subr.bf16.mxu0 0
          %1482 = vmatpush1.bf16.msra.mxu0 0
          %1483 = vmatprep.subr.bf16.mxu0 0
          %1484 = vmatpush1.bf16.msra.mxu0 0
          %1485 = vmatprep.subr.bf16.mxu0 0
          %1486 = vmatpush1.bf16.msra.mxu0 0
          %1487 = vmatprep.subr.bf16.mxu0 0
          %1488 = vmatpush1.bf16.msra.mxu0 0
          %1489 = vmatprep.subr.bf16.mxu0 0
          %1490 = vmatpush1.bf16.msra.mxu0 0
          %1491 = vmatprep.subr.bf16.mxu0 0
          %1492 = vmatpush1.bf16.msra.mxu0 0
          %1493 = vmatprep.subr.bf16.mxu0 0
          %1494 = vmatpush1.bf16.msra.mxu0 0
          %1495 = vmatprep.subr.bf16.mxu0 0
          %1496 = vmatpush1.bf16.msra.mxu0 0
          %1497 = vmatprep.subr.bf16.mxu0 0
          %1498 = vmatpush1.bf16.msra.mxu0 0
          %1499 = vmatprep.subr.bf16.mxu0 0
          %1500 = vmatpush1.bf16.msra.mxu0 0
          %1501 = vmatprep.subr.bf16.mxu0 0
          %1502 = vmatpush1.bf16.msra.mxu0 0
          %1503 = vmatprep.subr.bf16.mxu0 0
          %1504 = vmatpush1.bf16.msra.mxu0 0
          %1505 = vmatprep.mubr.bf16.mxu0 0
          %1506 = vmatmul.mubr.bf16.gmra.mrb[0].mxu0 %v1471
          %v1507 = vpop.f32.mrb[0].mxu0
          %v1508 = vadd.f32 %v1440, %v1507
          %v1509 = vpop.f32.mrb[0].mxu0
          %v1510 = vpop.f32.mrb[0].mxu0
          %v1511 = vpop.f32.mrb[0].mxu0
          %1512 = vdwg.mxu0
          %v1517 = vunpack.c.l.b16 %v1417
          %v1518 = vunpack.c.l.b16 %v1418
          %v1519 = vunpack.c.l.b16 %v1419
          %v1520 = vunpack.c.l.b16 %v1420
          %v1521 = vpack.c.b16 %v1518, %v1517
          %v1522 = vpack.c.b16 %v1520, %v1519
          %1525 = vmatprep.subr.bf16.mxu0 0
          %1526 = vmatpush1.bf16.msra.mxu0 %v1521
          %1527 = vmatprep.subr.bf16.mxu0 0
          %1528 = vmatpush1.bf16.msra.mxu0 %v1522
          %1529 = vmatprep.subr.bf16.mxu0 0
          %1530 = vmatpush1.bf16.msra.mxu0 0
          %1531 = vmatprep.subr.bf16.mxu0 0
          %1532 = vmatpush1.bf16.msra.mxu0 0
          %1533 = vmatprep.subr.bf16.mxu0 0
          %1534 = vmatpush1.bf16.msra.mxu0 0
          %1535 = vmatprep.subr.bf16.mxu0 0
          %1536 = vmatpush1.bf16.msra.mxu0 0
          %1537 = vmatprep.subr.bf16.mxu0 0
          %1538 = vmatpush1.bf16.msra.mxu0 0
          %1539 = vmatprep.subr.bf16.mxu0 0
          %1540 = vmatpush1.bf16.msra.mxu0 0
          %1541 = vmatprep.subr.bf16.mxu0 0
          %1542 = vmatpush1.bf16.msra.mxu0 0
          %1543 = vmatprep.subr.bf16.mxu0 0
          %1544 = vmatpush1.bf16.msra.mxu0 0
          %1545 = vmatprep.subr.bf16.mxu0 0
          %1546 = vmatpush1.bf16.msra.mxu0 0
          %1547 = vmatprep.subr.bf16.mxu0 0
          %1548 = vmatpush1.bf16.msra.mxu0 0
          %1549 = vmatprep.subr.bf16.mxu0 0
          %1550 = vmatpush1.bf16.msra.mxu0 0
          %1551 = vmatprep.subr.bf16.mxu0 0
          %1552 = vmatpush1.bf16.msra.mxu0 0
          %1553 = vmatprep.subr.bf16.mxu0 0
          %1554 = vmatpush1.bf16.msra.mxu0 0
          %1555 = vmatprep.subr.bf16.mxu0 0
          %1556 = vmatpush1.bf16.msra.mxu0 0
          %1557 = vmatprep.mubr.bf16.mxu0 0
          %1558 = vmatmul.mubr.bf16.gmra.mrb[0].mxu0 %v1471
          %v1559 = vpop.f32.mrb[0].mxu0
          %v1560 = vadd.f32 %v1444, %v1559
          %v1561 = vpop.f32.mrb[0].mxu0
          %v1562 = vpop.f32.mrb[0].mxu0
          %v1563 = vpop.f32.mrb[0].mxu0
          %1564 = vdwg.mxu0
          %v1569 = vunpack.c.l.b16 %v1421
          %v1570 = vunpack.c.l.b16 %v1422
          %v1571 = vunpack.c.l.b16 %v1423
          %v1572 = vunpack.c.l.b16 %v1424
          %v1573 = vpack.c.b16 %v1570, %v1569
          %v1574 = vpack.c.b16 %v1572, %v1571
          %1577 = vmatprep.subr.bf16.mxu0 0
          %1578 = vmatpush1.bf16.msra.mxu0 %v1573
          %1579 = vmatprep.subr.bf16.mxu0 0
          %1580 = vmatpush1.bf16.msra.mxu0 %v1574
          %1581 = vmatprep.subr.bf16.mxu0 0
          %1582 = vmatpush1.bf16.msra.mxu0 0
          %1583 = vmatprep.subr.bf16.mxu0 0
          %1584 = vmatpush1.bf16.msra.mxu0 0
          %1585 = vmatprep.subr.bf16.mxu0 0
          %1586 = vmatpush1.bf16.msra.mxu0 0
          %1587 = vmatprep.subr.bf16.mxu0 0
          %1588 = vmatpush1.bf16.msra.mxu0 0
          %1589 = vmatprep.subr.bf16.mxu0 0
          %1590 = vmatpush1.bf16.msra.mxu0 0
          %1591 = vmatprep.subr.bf16.mxu0 0
          %1592 = vmatpush1.bf16.msra.mxu0 0
          %1593 = vmatprep.subr.bf16.mxu0 0
          %1594 = vmatpush1.bf16.msra.mxu0 0
          %1595 = vmatprep.subr.bf16.mxu0 0
          %1596 = vmatpush1.bf16.msra.mxu0 0
          %1597 = vmatprep.subr.bf16.mxu0 0
          %1598 = vmatpush1.bf16.msra.mxu0 0
          %1599 = vmatprep.subr.bf16.mxu0 0
          %1600 = vmatpush1.bf16.msra.mxu0 0
          %1601 = vmatprep.subr.bf16.mxu0 0
          %1602 = vmatpush1.bf16.msra.mxu0 0
          %1603 = vmatprep.subr.bf16.mxu0 0
          %1604 = vmatpush1.bf16.msra.mxu0 0
          %1605 = vmatprep.subr.bf16.mxu0 0
          %1606 = vmatpush1.bf16.msra.mxu0 0
          %1607 = vmatprep.subr.bf16.mxu0 0
          %1608 = vmatpush1.bf16.msra.mxu0 0
          %1609 = vmatprep.mubr.bf16.mxu0 0
          %1610 = vmatmul.mubr.bf16.gmra.mrb[0].mxu0 %v1471
          %v1611 = vpop.f32.mrb[0].mxu0
          %v1612 = vadd.f32 %v1448, %v1611
          %v1613 = vpop.f32.mrb[0].mxu0
          %v1614 = vpop.f32.mrb[0].mxu0
          %v1615 = vpop.f32.mrb[0].mxu0
          %1616 = vdwg.mxu0
          %v1621 = vunpack.c.l.b16 %v1425
          %v1622 = vunpack.c.l.b16 %v1426
          %v1623 = vunpack.c.l.b16 %v1427
          %v1624 = vunpack.c.l.b16 %v1428
          %v1625 = vpack.c.b16 %v1622, %v1621
          %v1626 = vpack.c.b16 %v1624, %v1623
          %1629 = vmatprep.subr.bf16.mxu0 0
          %1630 = vmatpush1.bf16.msra.mxu0 %v1625
          %1631 = vmatprep.subr.bf16.mxu0 0
          %1632 = vmatpush1.bf16.msra.mxu0 %v1626
          %1633 = vmatprep.subr.bf16.mxu0 0
          %1634 = vmatpush1.bf16.msra.mxu0 0
          %1635 = vmatprep.subr.bf16.mxu0 0
          %1636 = vmatpush1.bf16.msra.mxu0 0
          %1637 = vmatprep.subr.bf16.mxu0 0
          %1638 = vmatpush1.bf16.msra.mxu0 0
          %1639 = vmatprep.subr.bf16.mxu0 0
          %1640 = vmatpush1.bf16.msra.mxu0 0
          %1641 = vmatprep.subr.bf16.mxu0 0
          %1642 = vmatpush1.bf16.msra.mxu0 0
          %1643 = vmatprep.subr.bf16.mxu0 0
          %1644 = vmatpush1.bf16.msra.mxu0 0
          %1645 = vmatprep.subr.bf16.mxu0 0
          %1646 = vmatpush1.bf16.msra.mxu0 0
          %1647 = vmatprep.subr.bf16.mxu0 0
          %1648 = vmatpush1.bf16.msra.mxu0 0
          %1649 = vmatprep.subr.bf16.mxu0 0
          %1650 = vmatpush1.bf16.msra.mxu0 0
          %1651 = vmatprep.subr.bf16.mxu0 0
          %1652 = vmatpush1.bf16.msra.mxu0 0
          %1653 = vmatprep.subr.bf16.mxu0 0
          %1654 = vmatpush1.bf16.msra.mxu0 0
          %1655 = vmatprep.subr.bf16.mxu0 0
          %1656 = vmatpush1.bf16.msra.mxu0 0
          %1657 = vmatprep.subr.bf16.mxu0 0
          %1658 = vmatpush1.bf16.msra.mxu0 0
          %1659 = vmatprep.subr.bf16.mxu0 0
          %1660 = vmatpush1.bf16.msra.mxu0 0
          %1661 = vmatprep.mubr.bf16.mxu0 0
          %1662 = vmatmul.mubr.bf16.gmra.mrb[0].mxu0 %v1471
          %v1663 = vpop.f32.mrb[0].mxu0
          %v1664 = vadd.f32 %v1452, %v1663
          %v1665 = vpop.f32.mrb[0].mxu0
          %v1666 = vpop.f32.mrb[0].mxu0
          %v1667 = vpop.f32.mrb[0].mxu0
          %1668 = vdwg.mxu0
          %v1669 = vld [vmem:[%s1137] sm:$0xf]
          %v1670 = vld [vmem:[%s1137 + $0x4] sm:$0xf]
          %v1671 = vld [vmem:[%s1137 + $0x8] sm:$0xf]
          %v1672 = vld [vmem:[%s1137 + $0xc] sm:$0xf]
          %v1673 = vld [vmem:[%s1137 + $0x10] sm:$0xf]
          %v1674 = vld [vmem:[%s1137 + $0x14] sm:$0xf]
          %v1675 = vld [vmem:[%s1137 + $0x18] sm:$0xf]
          %v1676 = vld [vmem:[%s1137 + $0x1c] sm:$0xf]
          %v1677 = vld [vmem:[%s1137 + $0x20] sm:$0xf]
          %v1678 = vld [vmem:[%s1137 + $0x24] sm:$0xf]
          %v1679 = vld [vmem:[%s1137 + $0x28] sm:$0xf]
          %v1680 = vld [vmem:[%s1137 + $0x2c] sm:$0xf]
          %v1681 = vld [vmem:[%s1137 + $0x30] sm:$0xf]
          %v1682 = vld [vmem:[%s1137 + $0x34] sm:$0xf]
          %v1683 = vld [vmem:[%s1137 + $0x38] sm:$0xf]
          %v1684 = vld [vmem:[%s1137 + $0x3c] sm:$0xf]
          %v1685 = vld [vmem:[%s1168] sm:$0x1]
          %v1686 = vld [vmem:[%s1168 + $0x1] sm:$0x1]
          %v1687 = vld [vmem:[%s1168 + $0x2] sm:$0x1]
          %v1688 = vld [vmem:[%s1168 + $0x3] sm:$0x1]
          %v1693 = vlaneseq
          %v1694 = vshrl.u32 %v1693, 7
          %v1695 = vsub.s32 0, %v1694
          %v1696 = vrot.slane %v1685, %v1695
          %v1697 = vlaneseq
          %v1698 = vshrl.u32 %v1697, 7
          %v1699 = vsub.s32 0, %v1698
          %v1700 = vrot.slane %v1686, %v1699
          %v1701 = vlaneseq
          %v1702 = vshrl.u32 %v1701, 7
          %v1703 = vsub.s32 0, %v1702
          %v1704 = vrot.slane %v1687, %v1703
          %v1705 = vlaneseq
          %v1706 = vshrl.u32 %v1705, 7
          %v1707 = vsub.s32 0, %v1706
          %v1708 = vrot.slane %v1688, %v1707
          %v1717 = vunpack.c.l.b16 %v1669
          %v1718 = vunpack.c.l.b16 %v1670
          %v1719 = vunpack.c.l.b16 %v1671
          %v1720 = vunpack.c.l.b16 %v1672
          %v1721 = vpack.c.b16 %v1718, %v1717
          %v1722 = vpack.c.b16 %v1720, %v1719
          %1725 = vmatprep.subr.bf16.mxu0 0
          %1726 = vmatpush1.bf16.msra.mxu0 %v1721
          %1727 = vmatprep.subr.bf16.mxu0 0
          %1728 = vmatpush1.bf16.msra.mxu0 %v1722
          %1729 = vmatprep.subr.bf16.mxu0 0
          %1730 = vmatpush1.bf16.msra.mxu0 0
          %1731 = vmatprep.subr.bf16.mxu0 0
          %1732 = vmatpush1.bf16.msra.mxu0 0
          %1733 = vmatprep.subr.bf16.mxu0 0
          %1734 = vmatpush1.bf16.msra.mxu0 0
          %1735 = vmatprep.subr.bf16.mxu0 0
          %1736 = vmatpush1.bf16.msra.mxu0 0
          %1737 = vmatprep.subr.bf16.mxu0 0
          %1738 = vmatpush1.bf16.msra.mxu0 0
          %1739 = vmatprep.subr.bf16.mxu0 0
          %1740 = vmatpush1.bf16.msra.mxu0 0
          %1741 = vmatprep.subr.bf16.mxu0 0
          %1742 = vmatpush1.bf16.msra.mxu0 0
          %1743 = vmatprep.subr.bf16.mxu0 0
          %1744 = vmatpush1.bf16.msra.mxu0 0
          %1745 = vmatprep.subr.bf16.mxu0 0
          %1746 = vmatpush1.bf16.msra.mxu0 0
          %1747 = vmatprep.subr.bf16.mxu0 0
          %1748 = vmatpush1.bf16.msra.mxu0 0
          %1749 = vmatprep.subr.bf16.mxu0 0
          %1750 = vmatpush1.bf16.msra.mxu0 0
          %1751 = vmatprep.subr.bf16.mxu0 0
          %1752 = vmatpush1.bf16.msra.mxu0 0
          %1753 = vmatprep.subr.bf16.mxu0 0
          %1754 = vmatpush1.bf16.msra.mxu0 0
          %1755 = vmatprep.subr.bf16.mxu0 0
          %1756 = vmatpush1.bf16.msra.mxu0 0
          %1757 = vmatprep.mubr.bf16.mxu0 0
          %1758 = vmatmul.mubr.bf16.gmra.mrb[0].mxu0 %v1471
          %v1759 = vpop.f32.mrb[0].mxu0
          %v1760 = vadd.f32 %v1696, %v1759
          %v1761 = vpop.f32.mrb[0].mxu0
          %v1762 = vpop.f32.mrb[0].mxu0
          %v1763 = vpop.f32.mrb[0].mxu0
          %1764 = vdwg.mxu0
          %v1769 = vunpack.c.l.b16 %v1673
          %v1770 = vunpack.c.l.b16 %v1674
          %v1771 = vunpack.c.l.b16 %v1675
          %v1772 = vunpack.c.l.b16 %v1676
          %v1773 = vpack.c.b16 %v1770, %v1769
          %v1774 = vpack.c.b16 %v1772, %v1771
          %1777 = vmatprep.subr.bf16.mxu0 0
          %1778 = vmatpush1.bf16.msra.mxu0 %v1773
          %1779 = vmatprep.subr.bf16.mxu0 0
          %1780 = vmatpush1.bf16.msra.mxu0 %v1774
          %1781 = vmatprep.subr.bf16.mxu0 0
          %1782 = vmatpush1.bf16.msra.mxu0 0
          %1783 = vmatprep.subr.bf16.mxu0 0
          %1784 = vmatpush1.bf16.msra.mxu0 0
          %1785 = vmatprep.subr.bf16.mxu0 0
          %1786 = vmatpush1.bf16.msra.mxu0 0
          %1787 = vmatprep.subr.bf16.mxu0 0
          %1788 = vmatpush1.bf16.msra.mxu0 0
          %1789 = vmatprep.subr.bf16.mxu0 0
          %1790 = vmatpush1.bf16.msra.mxu0 0
          %1791 = vmatprep.subr.bf16.mxu0 0
          %1792 = vmatpush1.bf16.msra.mxu0 0
          %1793 = vmatprep.subr.bf16.mxu0 0
          %1794 = vmatpush1.bf16.msra.mxu0 0
          %1795 = vmatprep.subr.bf16.mxu0 0
          %1796 = vmatpush1.bf16.msra.mxu0 0
          %1797 = vmatprep.subr.bf16.mxu0 0
          %1798 = vmatpush1.bf16.msra.mxu0 0
          %1799 = vmatprep.subr.bf16.mxu0 0
          %1800 = vmatpush1.bf16.msra.mxu0 0
          %1801 = vmatprep.subr.bf16.mxu0 0
          %1802 = vmatpush1.bf16.msra.mxu0 0
          %1803 = vmatprep.subr.bf16.mxu0 0
          %1804 = vmatpush1.bf16.msra.mxu0 0
          %1805 = vmatprep.subr.bf16.mxu0 0
          %1806 = vmatpush1.bf16.msra.mxu0 0
          %1807 = vmatprep.subr.bf16.mxu0 0
          %1808 = vmatpush1.bf16.msra.mxu0 0
          %1809 = vmatprep.mubr.bf16.mxu0 0
          %1810 = vmatmul.mubr.bf16.gmra.mrb[0].mxu0 %v1471
          %v1811 = vpop.f32.mrb[0].mxu0
          %v1812 = vadd.f32 %v1700, %v1811
          %v1813 = vpop.f32.mrb[0].mxu0
          %v1814 = vpop.f32.mrb[0].mxu0
          %v1815 = vpop.f32.mrb[0].mxu0
          %1816 = vdwg.mxu0
          %v1821 = vunpack.c.l.b16 %v1677
          %v1822 = vunpack.c.l.b16 %v1678
          %v1823 = vunpack.c.l.b16 %v1679
          %v1824 = vunpack.c.l.b16 %v1680
          %v1825 = vpack.c.b16 %v1822, %v1821
          %v1826 = vpack.c.b16 %v1824, %v1823
          %1829 = vmatprep.subr.bf16.mxu0 0
          %1830 = vmatpush1.bf16.msra.mxu0 %v1825
          %1831 = vmatprep.subr.bf16.mxu0 0
          %1832 = vmatpush1.bf16.msra.mxu0 %v1826
          %1833 = vmatprep.subr.bf16.mxu0 0
          %1834 = vmatpush1.bf16.msra.mxu0 0
          %1835 = vmatprep.subr.bf16.mxu0 0
          %1836 = vmatpush1.bf16.msra.mxu0 0
          %1837 = vmatprep.subr.bf16.mxu0 0
          %1838 = vmatpush1.bf16.msra.mxu0 0
          %1839 = vmatprep.subr.bf16.mxu0 0
          %1840 = vmatpush1.bf16.msra.mxu0 0
          %1841 = vmatprep.subr.bf16.mxu0 0
          %1842 = vmatpush1.bf16.msra.mxu0 0
          %1843 = vmatprep.subr.bf16.mxu0 0
          %1844 = vmatpush1.bf16.msra.mxu0 0
          %1845 = vmatprep.subr.bf16.mxu0 0
          %1846 = vmatpush1.bf16.msra.mxu0 0
          %1847 = vmatprep.subr.bf16.mxu0 0
          %1848 = vmatpush1.bf16.msra.mxu0 0
          %1849 = vmatprep.subr.bf16.mxu0 0
          %1850 = vmatpush1.bf16.msra.mxu0 0
          %1851 = vmatprep.subr.bf16.mxu0 0
          %1852 = vmatpush1.bf16.msra.mxu0 0
          %1853 = vmatprep.subr.bf16.mxu0 0
          %1854 = vmatpush1.bf16.msra.mxu0 0
          %1855 = vmatprep.subr.bf16.mxu0 0
          %1856 = vmatpush1.bf16.msra.mxu0 0
          %1857 = vmatprep.subr.bf16.mxu0 0
          %1858 = vmatpush1.bf16.msra.mxu0 0
          %1859 = vmatprep.subr.bf16.mxu0 0
          %1860 = vmatpush1.bf16.msra.mxu0 0
          %1861 = vmatprep.mubr.bf16.mxu0 0
          %1862 = vmatmul.mubr.bf16.gmra.mrb[0].mxu0 %v1471
          %v1863 = vpop.f32.mrb[0].mxu0
          %v1864 = vadd.f32 %v1704, %v1863
          %v1865 = vpop.f32.mrb[0].mxu0
          %v1866 = vpop.f32.mrb[0].mxu0
          %v1867 = vpop.f32.mrb[0].mxu0
          %1868 = vdwg.mxu0
          %v1873 = vunpack.c.l.b16 %v1681
          %v1874 = vunpack.c.l.b16 %v1682
          %v1875 = vunpack.c.l.b16 %v1683
          %v1876 = vunpack.c.l.b16 %v1684
          %v1877 = vpack.c.b16 %v1874, %v1873
          %v1878 = vpack.c.b16 %v1876, %v1875
          %1881 = vmatprep.subr.bf16.mxu0 0
          %1882 = vmatpush1.bf16.msra.mxu0 %v1877
          %1883 = vmatprep.subr.bf16.mxu0 0
          %1884 = vmatpush1.bf16.msra.mxu0 %v1878
          %1885 = vmatprep.subr.bf16.mxu0 0
          %1886 = vmatpush1.bf16.msra.mxu0 0
          %1887 = vmatprep.subr.bf16.mxu0 0
          %1888 = vmatpush1.bf16.msra.mxu0 0
          %1889 = vmatprep.subr.bf16.mxu0 0
          %1890 = vmatpush1.bf16.msra.mxu0 0
          %1891 = vmatprep.subr.bf16.mxu0 0
          %1892 = vmatpush1.bf16.msra.mxu0 0
          %1893 = vmatprep.subr.bf16.mxu0 0
          %1894 = vmatpush1.bf16.msra.mxu0 0
          %1895 = vmatprep.subr.bf16.mxu0 0
          %1896 = vmatpush1.bf16.msra.mxu0 0
          %1897 = vmatprep.subr.bf16.mxu0 0
          %1898 = vmatpush1.bf16.msra.mxu0 0
          %1899 = vmatprep.subr.bf16.mxu0 0
          %1900 = vmatpush1.bf16.msra.mxu0 0
          %1901 = vmatprep.subr.bf16.mxu0 0
          %1902 = vmatpush1.bf16.msra.mxu0 0
          %1903 = vmatprep.subr.bf16.mxu0 0
          %1904 = vmatpush1.bf16.msra.mxu0 0
          %1905 = vmatprep.subr.bf16.mxu0 0
          %1906 = vmatpush1.bf16.msra.mxu0 0
          %1907 = vmatprep.subr.bf16.mxu0 0
          %1908 = vmatpush1.bf16.msra.mxu0 0
          %1909 = vmatprep.subr.bf16.mxu0 0
          %1910 = vmatpush1.bf16.msra.mxu0 0
          %1911 = vmatprep.subr.bf16.mxu0 0
          %1912 = vmatpush1.bf16.msra.mxu0 0
          %1913 = vmatprep.mubr.bf16.mxu0 0
          %1914 = vmatmul.mubr.bf16.gmra.mrb[0].mxu0 %v1471
          %v1915 = vpop.f32.mrb[0].mxu0
          %v1916 = vadd.f32 %v1708, %v1915
          %v1917 = vpop.f32.mrb[0].mxu0
          %v1918 = vpop.f32.mrb[0].mxu0
          %v1919 = vpop.f32.mrb[0].mxu0
          %1920 = vdwg.mxu0
          %v1921 = vld [vmem:[%s1148] sm:$0xf]
          %v1922 = vld [vmem:[%s1148 + $0x4] sm:$0xf]
          %v1923 = vld [vmem:[%s1148 + $0x8] sm:$0xf]
          %v1924 = vld [vmem:[%s1148 + $0xc] sm:$0xf]
          %v1925 = vld [vmem:[%s1148 + $0x10] sm:$0xf]
          %v1926 = vld [vmem:[%s1148 + $0x14] sm:$0xf]
          %v1927 = vld [vmem:[%s1148 + $0x18] sm:$0xf]
          %v1928 = vld [vmem:[%s1148 + $0x1c] sm:$0xf]
          %v1929 = vld [vmem:[%s1148 + $0x20] sm:$0xf]
          %v1930 = vld [vmem:[%s1148 + $0x24] sm:$0xf]
          %v1931 = vld [vmem:[%s1148 + $0x28] sm:$0xf]
          %v1932 = vld [vmem:[%s1148 + $0x2c] sm:$0xf]
          %v1933 = vld [vmem:[%s1148 + $0x30] sm:$0xf]
          %v1934 = vld [vmem:[%s1148 + $0x34] sm:$0xf]
          %v1935 = vld [vmem:[%s1148 + $0x38] sm:$0xf]
          %v1936 = vld [vmem:[%s1148 + $0x3c] sm:$0xf]
          %v1937 = vld [vmem:[%s1178] sm:$0x1]
          %v1938 = vld [vmem:[%s1178 + $0x1] sm:$0x1]
          %v1939 = vld [vmem:[%s1178 + $0x2] sm:$0x1]
          %v1940 = vld [vmem:[%s1178 + $0x3] sm:$0x1]
          %v1945 = vlaneseq
          %v1946 = vshrl.u32 %v1945, 7
          %v1947 = vsub.s32 0, %v1946
          %v1948 = vrot.slane %v1937, %v1947
          %v1949 = vlaneseq
          %v1950 = vshrl.u32 %v1949, 7
          %v1951 = vsub.s32 0, %v1950
          %v1952 = vrot.slane %v1938, %v1951
          %v1953 = vlaneseq
          %v1954 = vshrl.u32 %v1953, 7
          %v1955 = vsub.s32 0, %v1954
          %v1956 = vrot.slane %v1939, %v1955
          %v1957 = vlaneseq
          %v1958 = vshrl.u32 %v1957, 7
          %v1959 = vsub.s32 0, %v1958
          %v1960 = vrot.slane %v1940, %v1959
          %v1969 = vunpack.c.l.b16 %v1921
          %v1970 = vunpack.c.l.b16 %v1922
          %v1971 = vunpack.c.l.b16 %v1923
          %v1972 = vunpack.c.l.b16 %v1924
          %v1973 = vpack.c.b16 %v1970, %v1969
          %v1974 = vpack.c.b16 %v1972, %v1971
          %1977 = vmatprep.subr.bf16.mxu0 0
          %1978 = vmatpush1.bf16.msra.mxu0 %v1973
          %1979 = vmatprep.subr.bf16.mxu0 0
          %1980 = vmatpush1.bf16.msra.mxu0 %v1974
          %1981 = vmatprep.subr.bf16.mxu0 0
          %1982 = vmatpush1.bf16.msra.mxu0 0
          %1983 = vmatprep.subr.bf16.mxu0 0
          %1984 = vmatpush1.bf16.msra.mxu0 0
          %1985 = vmatprep.subr.bf16.mxu0 0
          %1986 = vmatpush1.bf16.msra.mxu0 0
          %1987 = vmatprep.subr.bf16.mxu0 0
          %1988 = vmatpush1.bf16.msra.mxu0 0
          %1989 = vmatprep.subr.bf16.mxu0 0
          %1990 = vmatpush1.bf16.msra.mxu0 0
          %1991 = vmatprep.subr.bf16.mxu0 0
          %1992 = vmatpush1.bf16.msra.mxu0 0
          %1993 = vmatprep.subr.bf16.mxu0 0
          %1994 = vmatpush1.bf16.msra.mxu0 0
          %1995 = vmatprep.subr.bf16.mxu0 0
          %1996 = vmatpush1.bf16.msra.mxu0 0
          %1997 = vmatprep.subr.bf16.mxu0 0
          %1998 = vmatpush1.bf16.msra.mxu0 0
          %1999 = vmatprep.subr.bf16.mxu0 0
          %2000 = vmatpush1.bf16.msra.mxu0 0
          %2001 = vmatprep.subr.bf16.mxu0 0
          %2002 = vmatpush1.bf16.msra.mxu0 0
          %2003 = vmatprep.subr.bf16.mxu0 0
          %2004 = vmatpush1.bf16.msra.mxu0 0
          %2005 = vmatprep.subr.bf16.mxu0 0
          %2006 = vmatpush1.bf16.msra.mxu0 0
          %2007 = vmatprep.subr.bf16.mxu0 0
          %2008 = vmatpush1.bf16.msra.mxu0 0
          %2009 = vmatprep.mubr.bf16.mxu0 0
          %2010 = vmatmul.mubr.bf16.gmra.mrb[0].mxu0 %v1471
          %v2011 = vpop.f32.mrb[0].mxu0
          %v2012 = vadd.f32 %v1948, %v2011
          %v2013 = vpop.f32.mrb[0].mxu0
          %v2014 = vpop.f32.mrb[0].mxu0
          %v2015 = vpop.f32.mrb[0].mxu0
          %2016 = vdwg.mxu0
          %v2021 = vunpack.c.l.b16 %v1925
          %v2022 = vunpack.c.l.b16 %v1926
          %v2023 = vunpack.c.l.b16 %v1927
          %v2024 = vunpack.c.l.b16 %v1928
          %v2025 = vpack.c.b16 %v2022, %v2021
          %v2026 = vpack.c.b16 %v2024, %v2023
          %2029 = vmatprep.subr.bf16.mxu0 0
          %2030 = vmatpush1.bf16.msra.mxu0 %v2025
          %2031 = vmatprep.subr.bf16.mxu0 0
          %2032 = vmatpush1.bf16.msra.mxu0 %v2026
          %2033 = vmatprep.subr.bf16.mxu0 0
          %2034 = vmatpush1.bf16.msra.mxu0 0
          %2035 = vmatprep.subr.bf16.mxu0 0
          %2036 = vmatpush1.bf16.msra.mxu0 0
          %2037 = vmatprep.subr.bf16.mxu0 0
          %2038 = vmatpush1.bf16.msra.mxu0 0
          %2039 = vmatprep.subr.bf16.mxu0 0
          %2040 = vmatpush1.bf16.msra.mxu0 0
          %2041 = vmatprep.subr.bf16.mxu0 0
          %2042 = vmatpush1.bf16.msra.mxu0 0
          %2043 = vmatprep.subr.bf16.mxu0 0
          %2044 = vmatpush1.bf16.msra.mxu0 0
          %2045 = vmatprep.subr.bf16.mxu0 0
          %2046 = vmatpush1.bf16.msra.mxu0 0
          %2047 = vmatprep.subr.bf16.mxu0 0
          %2048 = vmatpush1.bf16.msra.mxu0 0
          %2049 = vmatprep.subr.bf16.mxu0 0
          %2050 = vmatpush1.bf16.msra.mxu0 0
          %2051 = vmatprep.subr.bf16.mxu0 0
          %2052 = vmatpush1.bf16.msra.mxu0 0
          %2053 = vmatprep.subr.bf16.mxu0 0
          %2054 = vmatpush1.bf16.msra.mxu0 0
          %2055 = vmatprep.subr.bf16.mxu0 0
          %2056 = vmatpush1.bf16.msra.mxu0 0
          %2057 = vmatprep.subr.bf16.mxu0 0
          %2058 = vmatpush1.bf16.msra.mxu0 0
          %2059 = vmatprep.subr.bf16.mxu0 0
          %2060 = vmatpush1.bf16.msra.mxu0 0
          %2061 = vmatprep.mubr.bf16.mxu0 0
          %2062 = vmatmul.mubr.bf16.gmra.mrb[0].mxu0 %v1471
          %v2063 = vpop.f32.mrb[0].mxu0
          %v2064 = vadd.f32 %v1952, %v2063
          %v2065 = vpop.f32.mrb[0].mxu0
          %v2066 = vpop.f32.mrb[0].mxu0
          %v2067 = vpop.f32.mrb[0].mxu0
          %2068 = vdwg.mxu0
          %v2073 = vunpack.c.l.b16 %v1929
          %v2074 = vunpack.c.l.b16 %v1930
          %v2075 = vunpack.c.l.b16 %v1931
          %v2076 = vunpack.c.l.b16 %v1932
          %v2077 = vpack.c.b16 %v2074, %v2073
          %v2078 = vpack.c.b16 %v2076, %v2075
          %2081 = vmatprep.subr.bf16.mxu0 0
          %2082 = vmatpush1.bf16.msra.mxu0 %v2077
          %2083 = vmatprep.subr.bf16.mxu0 0
          %2084 = vmatpush1.bf16.msra.mxu0 %v2078
          %2085 = vmatprep.subr.bf16.mxu0 0
          %2086 = vmatpush1.bf16.msra.mxu0 0
          %2087 = vmatprep.subr.bf16.mxu0 0
          %2088 = vmatpush1.bf16.msra.mxu0 0
          %2089 = vmatprep.subr.bf16.mxu0 0
          %2090 = vmatpush1.bf16.msra.mxu0 0
          %2091 = vmatprep.subr.bf16.mxu0 0
          %2092 = vmatpush1.bf16.msra.mxu0 0
          %2093 = vmatprep.subr.bf16.mxu0 0
          %2094 = vmatpush1.bf16.msra.mxu0 0
          %2095 = vmatprep.subr.bf16.mxu0 0
          %2096 = vmatpush1.bf16.msra.mxu0 0
          %2097 = vmatprep.subr.bf16.mxu0 0
          %2098 = vmatpush1.bf16.msra.mxu0 0
          %2099 = vmatprep.subr.bf16.mxu0 0
          %2100 = vmatpush1.bf16.msra.mxu0 0
          %2101 = vmatprep.subr.bf16.mxu0 0
          %2102 = vmatpush1.bf16.msra.mxu0 0
          %2103 = vmatprep.subr.bf16.mxu0 0
          %2104 = vmatpush1.bf16.msra.mxu0 0
          %2105 = vmatprep.subr.bf16.mxu0 0
          %2106 = vmatpush1.bf16.msra.mxu0 0
          %2107 = vmatprep.subr.bf16.mxu0 0
          %2108 = vmatpush1.bf16.msra.mxu0 0
          %2109 = vmatprep.subr.bf16.mxu0 0
          %2110 = vmatpush1.bf16.msra.mxu0 0
          %2111 = vmatprep.subr.bf16.mxu0 0
          %2112 = vmatpush1.bf16.msra.mxu0 0
          %2113 = vmatprep.mubr.bf16.mxu0 0
          %2114 = vmatmul.mubr.bf16.gmra.mrb[0].mxu0 %v1471
          %v2115 = vpop.f32.mrb[0].mxu0
          %v2116 = vadd.f32 %v1956, %v2115
          %v2117 = vpop.f32.mrb[0].mxu0
          %v2118 = vpop.f32.mrb[0].mxu0
          %v2119 = vpop.f32.mrb[0].mxu0
          %2120 = vdwg.mxu0
          %v2125 = vunpack.c.l.b16 %v1933
          %v2126 = vunpack.c.l.b16 %v1934
          %v2127 = vunpack.c.l.b16 %v1935
          %v2128 = vunpack.c.l.b16 %v1936
          %v2129 = vpack.c.b16 %v2126, %v2125
          %v2130 = vpack.c.b16 %v2128, %v2127
          %2133 = vmatprep.subr.bf16.mxu0 0
          %2134 = vmatpush1.bf16.msra.mxu0 %v2129
          %2135 = vmatprep.subr.bf16.mxu0 0
          %2136 = vmatpush1.bf16.msra.mxu0 %v2130
          %2137 = vmatprep.subr.bf16.mxu0 0
          %2138 = vmatpush1.bf16.msra.mxu0 0
          %2139 = vmatprep.subr.bf16.mxu0 0
          %2140 = vmatpush1.bf16.msra.mxu0 0
          %2141 = vmatprep.subr.bf16.mxu0 0
          %2142 = vmatpush1.bf16.msra.mxu0 0
          %2143 = vmatprep.subr.bf16.mxu0 0
          %2144 = vmatpush1.bf16.msra.mxu0 0
          %2145 = vmatprep.subr.bf16.mxu0 0
          %2146 = vmatpush1.bf16.msra.mxu0 0
          %2147 = vmatprep.subr.bf16.mxu0 0
          %2148 = vmatpush1.bf16.msra.mxu0 0
          %2149 = vmatprep.subr.bf16.mxu0 0
          %2150 = vmatpush1.bf16.msra.mxu0 0
          %2151 = vmatprep.subr.bf16.mxu0 0
          %2152 = vmatpush1.bf16.msra.mxu0 0
          %2153 = vmatprep.subr.bf16.mxu0 0
          %2154 = vmatpush1.bf16.msra.mxu0 0
          %2155 = vmatprep.subr.bf16.mxu0 0
          %2156 = vmatpush1.bf16.msra.mxu0 0
          %2157 = vmatprep.subr.bf16.mxu0 0
          %2158 = vmatpush1.bf16.msra.mxu0 0
          %2159 = vmatprep.subr.bf16.mxu0 0
          %2160 = vmatpush1.bf16.msra.mxu0 0
          %2161 = vmatprep.subr.bf16.mxu0 0
          %2162 = vmatpush1.bf16.msra.mxu0 0
          %2163 = vmatprep.subr.bf16.mxu0 0
          %2164 = vmatpush1.bf16.msra.mxu0 0
          %2165 = vmatprep.mubr.bf16.mxu0 0
          %2166 = vmatmul.mubr.bf16.gmra.mrb[0].mxu0 %v1471
          %v2167 = vpop.f32.mrb[0].mxu0
          %v2168 = vadd.f32 %v1960, %v2167
          %v2169 = vpop.f32.mrb[0].mxu0
          %v2170 = vpop.f32.mrb[0].mxu0
          %v2171 = vpop.f32.mrb[0].mxu0
          %2172 = vdwg.mxu0
          %v2173 = vlaneseq
          %v2174 = vand.u32 %v2173, 127
          %s2175 = sld [smem:[#allocation4 + %s46]]
          %v2176 = vstv %s2175
          %vm2177 = vcmp.lt.s32.totalorder %v2174, %v2176
          %v2178 = vsel %vm2177, 0.0, -1e+09
          %v2179 = vpack.c.bf16 %v1508, %v1508
          %v2180 = vpack.c.bf16 %v1560, %v1560
          %v2181 = vpack.c.bf16 %v1612, %v1612
          %v2182 = vpack.c.bf16 %v1664, %v1664
          %v2183 = vpack.c.bf16 %v1760, %v1760
          %v2184 = vpack.c.bf16 %v1812, %v1812
          %v2185 = vpack.c.bf16 %v1864, %v1864
          %v2186 = vpack.c.bf16 %v1916, %v1916
          %vm2187 = vcmask 64512
          %v2189 = vsel %vm2187, %v2179, 0
          %v2192 = vsel %vm2187, %v2183, 0
          %2194 = vmatprep.subr.bf16.mxu0 0
          %2195 = vmatpush1.bf16.xpose.msra.mxu0 %v2192
          %2196 = vmatprep.subr.bf16.mxu0 0
          %2197 = vmatpush1.bf16.xpose.msra.mxu0 0
          %2198 = vmatprep.subr.bf16.mxu0 0
          %2199 = vmatpush1.bf16.xpose.msra.mxu0 0
          %2200 = vmatprep.subr.bf16.mxu0 0
          %2201 = vmatpush1.bf16.xpose.msra.mxu0 0
          %2202 = vmatprep.subr.bf16.mxu0 0
          %2203 = vmatpush1.bf16.xpose.msra.mxu0 0
          %2204 = vmatprep.subr.bf16.mxu0 0
          %2205 = vmatpush1.bf16.xpose.msra.mxu0 0
          %2206 = vmatprep.subr.bf16.mxu0 0
          %2207 = vmatpush1.bf16.xpose.msra.mxu0 0
          %2208 = vmatprep.subr.bf16.mxu0 0
          %2209 = vmatpush1.bf16.xpose.msra.mxu0 0
          %2210 = vmatprep.subr.bf16.mxu0 0
          %2211 = vmatpush1.bf16.xpose.msra.mxu0 0
          %2212 = vmatprep.subr.bf16.mxu0 0
          %2213 = vmatpush1.bf16.xpose.msra.mxu0 0
          %2214 = vmatprep.subr.bf16.mxu0 0
          %2215 = vmatpush1.bf16.xpose.msra.mxu0 0
          %2216 = vmatprep.subr.bf16.mxu0 0
          %2217 = vmatpush1.bf16.xpose.msra.mxu0 0
          %2218 = vmatprep.subr.bf16.mxu0 0
          %2219 = vmatpush1.bf16.xpose.msra.mxu0 0
          %2220 = vmatprep.subr.bf16.mxu0 0
          %2221 = vmatpush1.bf16.xpose.msra.mxu0 0
          %2222 = vmatprep.subr.bf16.mxu0 0
          %2223 = vmatpush1.bf16.xpose.msra.mxu0 0
          %2224 = vmatprep.subr.bf16.mxu0 0
          %2225 = vmatpush1.bf16.xpose.msra.mxu0 0
          %2226 = vmatprep.mubr.bf16.mxu0 0
          %2227 = vmatmul.mubr.bf16.gmra.mrb[0].mxu0 %v2189
          %v2228 = vpop.f32.mrb[0].mxu0
          %v2229 = vadd.f32 %v2178, %v2228
          %v2230 = vpop.f32.mrb[0].mxu0
          %v2231 = vpop.f32.mrb[0].mxu0
          %v2232 = vpop.f32.mrb[0].mxu0
          %2233 = vdwg.mxu0
          %v2235 = vsel %vm2187, %v2180, 0
          %v2238 = vsel %vm2187, %v2184, 0
          %2240 = vmatprep.subr.bf16.mxu0 0
          %2241 = vmatpush1.bf16.xpose.msra.mxu0 %v2238
          %2242 = vmatprep.subr.bf16.mxu0 0
          %2243 = vmatpush1.bf16.xpose.msra.mxu0 0
          %2244 = vmatprep.subr.bf16.mxu0 0
          %2245 = vmatpush1.bf16.xpose.msra.mxu0 0
          %2246 = vmatprep.subr.bf16.mxu0 0
          %2247 = vmatpush1.bf16.xpose.msra.mxu0 0
          %2248 = vmatprep.subr.bf16.mxu0 0
          %2249 = vmatpush1.bf16.xpose.msra.mxu0 0
          %2250 = vmatprep.subr.bf16.mxu0 0
          %2251 = vmatpush1.bf16.xpose.msra.mxu0 0
          %2252 = vmatprep.subr.bf16.mxu0 0
          %2253 = vmatpush1.bf16.xpose.msra.mxu0 0
          %2254 = vmatprep.subr.bf16.mxu0 0
          %2255 = vmatpush1.bf16.xpose.msra.mxu0 0
          %2256 = vmatprep.subr.bf16.mxu0 0
          %2257 = vmatpush1.bf16.xpose.msra.mxu0 0
          %2258 = vmatprep.subr.bf16.mxu0 0
          %2259 = vmatpush1.bf16.xpose.msra.mxu0 0
          %2260 = vmatprep.subr.bf16.mxu0 0
          %2261 = vmatpush1.bf16.xpose.msra.mxu0 0
          %2262 = vmatprep.subr.bf16.mxu0 0
          %2263 = vmatpush1.bf16.xpose.msra.mxu0 0
          %2264 = vmatprep.subr.bf16.mxu0 0
          %2265 = vmatpush1.bf16.xpose.msra.mxu0 0
          %2266 = vmatprep.subr.bf16.mxu0 0
          %2267 = vmatpush1.bf16.xpose.msra.mxu0 0
          %2268 = vmatprep.subr.bf16.mxu0 0
          %2269 = vmatpush1.bf16.xpose.msra.mxu0 0
          %2270 = vmatprep.subr.bf16.mxu0 0
          %2271 = vmatpush1.bf16.xpose.msra.mxu0 0
          %2272 = vmatprep.mubr.bf16.mxu0 0
          %2273 = vmatmul.mubr.bf16.gmra.mrb[0].mxu0 %v2235
          %v2274 = vpop.f32.mrb[0].mxu0
          %v2275 = vadd.f32 %v2178, %v2274
          %v2276 = vpop.f32.mrb[0].mxu0
          %v2277 = vpop.f32.mrb[0].mxu0
          %v2278 = vpop.f32.mrb[0].mxu0
          %2279 = vdwg.mxu0
          %v2281 = vsel %vm2187, %v2181, 0
          %v2284 = vsel %vm2187, %v2185, 0
          %2286 = vmatprep.subr.bf16.mxu0 0
          %2287 = vmatpush1.bf16.xpose.msra.mxu0 %v2284
          %2288 = vmatprep.subr.bf16.mxu0 0
          %2289 = vmatpush1.bf16.xpose.msra.mxu0 0
          %2290 = vmatprep.subr.bf16.mxu0 0
          %2291 = vmatpush1.bf16.xpose.msra.mxu0 0
          %2292 = vmatprep.subr.bf16.mxu0 0
          %2293 = vmatpush1.bf16.xpose.msra.mxu0 0
          %2294 = vmatprep.subr.bf16.mxu0 0
          %2295 = vmatpush1.bf16.xpose.msra.mxu0 0
          %2296 = vmatprep.subr.bf16.mxu0 0
          %2297 = vmatpush1.bf16.xpose.msra.mxu0 0
          %2298 = vmatprep.subr.bf16.mxu0 0
          %2299 = vmatpush1.bf16.xpose.msra.mxu0 0
          %2300 = vmatprep.subr.bf16.mxu0 0
          %2301 = vmatpush1.bf16.xpose.msra.mxu0 0
          %2302 = vmatprep.subr.bf16.mxu0 0
          %2303 = vmatpush1.bf16.xpose.msra.mxu0 0
          %2304 = vmatprep.subr.bf16.mxu0 0
          %2305 = vmatpush1.bf16.xpose.msra.mxu0 0
          %2306 = vmatprep.subr.bf16.mxu0 0
          %2307 = vmatpush1.bf16.xpose.msra.mxu0 0
          %2308 = vmatprep.subr.bf16.mxu0 0
          %2309 = vmatpush1.bf16.xpose.msra.mxu0 0
          %2310 = vmatprep.subr.bf16.mxu0 0
          %2311 = vmatpush1.bf16.xpose.msra.mxu0 0
          %2312 = vmatprep.subr.bf16.mxu0 0
          %2313 = vmatpush1.bf16.xpose.msra.mxu0 0
          %2314 = vmatprep.subr.bf16.mxu0 0
          %2315 = vmatpush1.bf16.xpose.msra.mxu0 0
          %2316 = vmatprep.subr.bf16.mxu0 0
          %2317 = vmatpush1.bf16.xpose.msra.mxu0 0
          %2318 = vmatprep.mubr.bf16.mxu0 0
          %2319 = vmatmul.mubr.bf16.gmra.mrb[0].mxu0 %v2281
          %v2320 = vpop.f32.mrb[0].mxu0
          %v2321 = vadd.f32 %v2178, %v2320
          %v2322 = vpop.f32.mrb[0].mxu0
          %v2323 = vpop.f32.mrb[0].mxu0
          %v2324 = vpop.f32.mrb[0].mxu0
          %2325 = vdwg.mxu0
          %v2327 = vsel %vm2187, %v2182, 0
          %v2330 = vsel %vm2187, %v2186, 0
          %2332 = vmatprep.subr.bf16.mxu0 0
          %2333 = vmatpush1.bf16.xpose.msra.mxu0 %v2330
          %2334 = vmatprep.subr.bf16.mxu0 0
          %2335 = vmatpush1.bf16.xpose.msra.mxu0 0
          %2336 = vmatprep.subr.bf16.mxu0 0
          %2337 = vmatpush1.bf16.xpose.msra.mxu0 0
          %2338 = vmatprep.subr.bf16.mxu0 0
          %2339 = vmatpush1.bf16.xpose.msra.mxu0 0
          %2340 = vmatprep.subr.bf16.mxu0 0
          %2341 = vmatpush1.bf16.xpose.msra.mxu0 0
          %2342 = vmatprep.subr.bf16.mxu0 0
          %2343 = vmatpush1.bf16.xpose.msra.mxu0 0
          %2344 = vmatprep.subr.bf16.mxu0 0
          %2345 = vmatpush1.bf16.xpose.msra.mxu0 0
          %2346 = vmatprep.subr.bf16.mxu0 0
          %2347 = vmatpush1.bf16.xpose.msra.mxu0 0
          %2348 = vmatprep.subr.bf16.mxu0 0
          %2349 = vmatpush1.bf16.xpose.msra.mxu0 0
          %2350 = vmatprep.subr.bf16.mxu0 0
          %2351 = vmatpush1.bf16.xpose.msra.mxu0 0
          %2352 = vmatprep.subr.bf16.mxu0 0
          %2353 = vmatpush1.bf16.xpose.msra.mxu0 0
          %2354 = vmatprep.subr.bf16.mxu0 0
          %2355 = vmatpush1.bf16.xpose.msra.mxu0 0
          %2356 = vmatprep.subr.bf16.mxu0 0
          %2357 = vmatpush1.bf16.xpose.msra.mxu0 0
          %2358 = vmatprep.subr.bf16.mxu0 0
          %2359 = vmatpush1.bf16.xpose.msra.mxu0 0
          %2360 = vmatprep.subr.bf16.mxu0 0
          %2361 = vmatpush1.bf16.xpose.msra.mxu0 0
          %2362 = vmatprep.subr.bf16.mxu0 0
          %2363 = vmatpush1.bf16.xpose.msra.mxu0 0
          %2364 = vmatprep.mubr.bf16.mxu0 0
          %2365 = vmatmul.mubr.bf16.gmra.mrb[0].mxu0 %v2327
          %v2366 = vpop.f32.mrb[0].mxu0
          %v2367 = vadd.f32 %v2178, %v2366
          %v2368 = vpop.f32.mrb[0].mxu0
          %v2369 = vpop.f32.mrb[0].mxu0
          %v2370 = vpop.f32.mrb[0].mxu0
          %2371 = vdwg.mxu0
          %v2372 = vsel %vm2187, %v2229, -inf
          %2373 = vmax.xlane.f32.xlu0 %v2372
          %v2374 = vpop.xlane.xlu0 %2373
          %v2375 = vsel %vm2187, %v2275, -inf
          %2376 = vmax.xlane.f32.xlu0 %v2375
          %v2377 = vpop.xlane.xlu0 %2376
          %v2378 = vsel %vm2187, %v2321, -inf
          %2379 = vmax.xlane.f32.xlu0 %v2378
          %v2380 = vpop.xlane.xlu0 %2379
          %v2381 = vsel %vm2187, %v2367, -inf
          %2382 = vmax.xlane.f32.xlu0 %v2381
          %v2383 = vpop.xlane.xlu0 %2382
          %v2384 = vsub.f32 %v2229, %v2374
          %v2385 = vsub.f32 %v2275, %v2377
          %v2386 = vsub.f32 %v2321, %v2380
          %v2387 = vsub.f32 %v2367, %v2383
          %v2388 = vmul.f32 %v2384, 1.442695
          %v2389 = vpow.pop %v2388
          %v2390 = vmul.f32 %v2385, 1.442695
          %v2391 = vpow.pop %v2390
          %v2392 = vmul.f32 %v2386, 1.442695
          %v2393 = vpow.pop %v2392
          %v2394 = vmul.f32 %v2387, 1.442695
          %v2395 = vpow.pop %v2394
          %v2396 = vsel %vm2187, %v2389, 0.0
          %2397 = vadd.xlane.f32.xlu0 %v2396
          %v2398 = vpop.xlane.xlu0 %2397
          %v2399 = vsel %vm2187, %v2391, 0.0
          %2400 = vadd.xlane.f32.xlu0 %v2399
          %v2401 = vpop.xlane.xlu0 %2400
          %v2402 = vsel %vm2187, %v2393, 0.0
          %2403 = vadd.xlane.f32.xlu0 %v2402
          %v2404 = vpop.xlane.xlu0 %2403
          %v2405 = vsel %vm2187, %v2395, 0.0
          %2406 = vadd.xlane.f32.xlu0 %v2405
          %v2407 = vpop.xlane.xlu0 %2406
          %v2408 = vrcp.pop %v2398
          %v2409 = vrcp.pop %v2401
          %v2410 = vrcp.pop %v2404
          %v2411 = vrcp.pop %v2407
          %v2412 = vmul.f32 %v2389, %v2408
          %v2413 = vmul.f32 %v2391, %v2409
          %v2414 = vmul.f32 %v2393, %v2410
          %v2415 = vmul.f32 %v2395, %v2411
          %v2416 = vpack.c.bf16 %v2412, %v2412
          %v2417 = vpack.c.bf16 %v2413, %v2413
          %v2418 = vpack.c.bf16 %v2414, %v2414
          %v2419 = vpack.c.bf16 %v2415, %v2415
          %v2420 = vpack.c.bf16 %v2012, %v2012
          %v2421 = vpack.c.bf16 %v2064, %v2064
          %v2422 = vpack.c.bf16 %v2116, %v2116
          %v2423 = vpack.c.bf16 %v2168, %v2168
          %v2425 = vsel %vm2187, %v2416, 0
          %vm2427 = vcmask 1043456
          %v2429 = vsel %vm2427, %v2420, 0
          %2431 = vmatprep.subr.bf16.mxu0 0
          %2432 = vmatpush1.bf16.msra.mxu0 %v2429
          %2433 = vmatprep.subr.bf16.mxu0 0
          %2434 = vmatpush1.bf16.msra.mxu0 0
          %2435 = vmatprep.subr.bf16.mxu0 0
          %2436 = vmatpush1.bf16.msra.mxu0 0
          %2437 = vmatprep.subr.bf16.mxu0 0
          %2438 = vmatpush1.bf16.msra.mxu0 0
          %2439 = vmatprep.subr.bf16.mxu0 0
          %2440 = vmatpush1.bf16.msra.mxu0 0
          %2441 = vmatprep.subr.bf16.mxu0 0
          %2442 = vmatpush1.bf16.msra.mxu0 0
          %2443 = vmatprep.subr.bf16.mxu0 0
          %2444 = vmatpush1.bf16.msra.mxu0 0
          %2445 = vmatprep.subr.bf16.mxu0 0
          %2446 = vmatpush1.bf16.msra.mxu0 0
          %2447 = vmatprep.subr.bf16.mxu0 0
          %2448 = vmatpush1.bf16.msra.mxu0 0
          %2449 = vmatprep.subr.bf16.mxu0 0
          %2450 = vmatpush1.bf16.msra.mxu0 0
          %2451 = vmatprep.subr.bf16.mxu0 0
          %2452 = vmatpush1.bf16.msra.mxu0 0
          %2453 = vmatprep.subr.bf16.mxu0 0
          %2454 = vmatpush1.bf16.msra.mxu0 0
          %2455 = vmatprep.subr.bf16.mxu0 0
          %2456 = vmatpush1.bf16.msra.mxu0 0
          %2457 = vmatprep.subr.bf16.mxu0 0
          %2458 = vmatpush1.bf16.msra.mxu0 0
          %2459 = vmatprep.subr.bf16.mxu0 0
          %2460 = vmatpush1.bf16.msra.mxu0 0
          %2461 = vmatprep.subr.bf16.mxu0 0
          %2462 = vmatpush1.bf16.msra.mxu0 0
          %2463 = vmatprep.mubr.bf16.mxu0 0
          %2464 = vmatmul.mubr.bf16.gmra.mrb[0].mxu0 %v2425
          %v2465 = vpop.f32.mrb[0].mxu0
          %v2466 = vadd.f32 0.0, %v2465
          %v2467 = vpop.f32.mrb[0].mxu0
          %v2468 = vpop.f32.mrb[0].mxu0
          %v2469 = vpop.f32.mrb[0].mxu0
          %2470 = vdwg.mxu0
          %v2472 = vsel %vm2187, %v2417, 0
          %v2475 = vsel %vm2427, %v2421, 0
          %2477 = vmatprep.subr.bf16.mxu0 0
          %2478 = vmatpush1.bf16.msra.mxu0 %v2475
          %2479 = vmatprep.subr.bf16.mxu0 0
          %2480 = vmatpush1.bf16.msra.mxu0 0
          %2481 = vmatprep.subr.bf16.mxu0 0
          %2482 = vmatpush1.bf16.msra.mxu0 0
          %2483 = vmatprep.subr.bf16.mxu0 0
          %2484 = vmatpush1.bf16.msra.mxu0 0
          %2485 = vmatprep.subr.bf16.mxu0 0
          %2486 = vmatpush1.bf16.msra.mxu0 0
          %2487 = vmatprep.subr.bf16.mxu0 0
          %2488 = vmatpush1.bf16.msra.mxu0 0
          %2489 = vmatprep.subr.bf16.mxu0 0
          %2490 = vmatpush1.bf16.msra.mxu0 0
          %2491 = vmatprep.subr.bf16.mxu0 0
          %2492 = vmatpush1.bf16.msra.mxu0 0
          %2493 = vmatprep.subr.bf16.mxu0 0
          %2494 = vmatpush1.bf16.msra.mxu0 0
          %2495 = vmatprep.subr.bf16.mxu0 0
          %2496 = vmatpush1.bf16.msra.mxu0 0
          %2497 = vmatprep.subr.bf16.mxu0 0
          %2498 = vmatpush1.bf16.msra.mxu0 0
          %2499 = vmatprep.subr.bf16.mxu0 0
          %2500 = vmatpush1.bf16.msra.mxu0 0
          %2501 = vmatprep.subr.bf16.mxu0 0
          %2502 = vmatpush1.bf16.msra.mxu0 0
          %2503 = vmatprep.subr.bf16.mxu0 0
          %2504 = vmatpush1.bf16.msra.mxu0 0
          %2505 = vmatprep.subr.bf16.mxu0 0
          %2506 = vmatpush1.bf16.msra.mxu0 0
          %2507 = vmatprep.subr.bf16.mxu0 0
          %2508 = vmatpush1.bf16.msra.mxu0 0
          %2509 = vmatprep.mubr.bf16.mxu0 0
          %2510 = vmatmul.mubr.bf16.gmra.mrb[0].mxu0 %v2472
          %v2511 = vpop.f32.mrb[0].mxu0
          %v2512 = vadd.f32 0.0, %v2511
          %v2513 = vpop.f32.mrb[0].mxu0
          %v2514 = vpop.f32.mrb[0].mxu0
          %v2515 = vpop.f32.mrb[0].mxu0
          %2516 = vdwg.mxu0
          %v2518 = vsel %vm2187, %v2418, 0
          %v2521 = vsel %vm2427, %v2422, 0
          %2523 = vmatprep.subr.bf16.mxu0 0
          %2524 = vmatpush1.bf16.msra.mxu0 %v2521
          %2525 = vmatprep.subr.bf16.mxu0 0
          %2526 = vmatpush1.bf16.msra.mxu0 0
          %2527 = vmatprep.subr.bf16.mxu0 0
          %2528 = vmatpush1.bf16.msra.mxu0 0
          %2529 = vmatprep.subr.bf16.mxu0 0
          %2530 = vmatpush1.bf16.msra.mxu0 0
          %2531 = vmatprep.subr.bf16.mxu0 0
          %2532 = vmatpush1.bf16.msra.mxu0 0
          %2533 = vmatprep.subr.bf16.mxu0 0
          %2534 = vmatpush1.bf16.msra.mxu0 0
          %2535 = vmatprep.subr.bf16.mxu0 0
          %2536 = vmatpush1.bf16.msra.mxu0 0
          %2537 = vmatprep.subr.bf16.mxu0 0
          %2538 = vmatpush1.bf16.msra.mxu0 0
          %2539 = vmatprep.subr.bf16.mxu0 0
          %2540 = vmatpush1.bf16.msra.mxu0 0
          %2541 = vmatprep.subr.bf16.mxu0 0
          %2542 = vmatpush1.bf16.msra.mxu0 0
          %2543 = vmatprep.subr.bf16.mxu0 0
          %2544 = vmatpush1.bf16.msra.mxu0 0
          %2545 = vmatprep.subr.bf16.mxu0 0
          %2546 = vmatpush1.bf16.msra.mxu0 0
          %2547 = vmatprep.subr.bf16.mxu0 0
          %2548 = vmatpush1.bf16.msra.mxu0 0
          %2549 = vmatprep.subr.bf16.mxu0 0
          %2550 = vmatpush1.bf16.msra.mxu0 0
          %2551 = vmatprep.subr.bf16.mxu0 0
          %2552 = vmatpush1.bf16.msra.mxu0 0
          %2553 = vmatprep.subr.bf16.mxu0 0
          %2554 = vmatpush1.bf16.msra.mxu0 0
          %2555 = vmatprep.mubr.bf16.mxu0 0
          %2556 = vmatmul.mubr.bf16.gmra.mrb[0].mxu0 %v2518
          %v2557 = vpop.f32.mrb[0].mxu0
          %v2558 = vadd.f32 0.0, %v2557
          %v2559 = vpop.f32.mrb[0].mxu0
          %v2560 = vpop.f32.mrb[0].mxu0
          %v2561 = vpop.f32.mrb[0].mxu0
          %2562 = vdwg.mxu0
          %v2564 = vsel %vm2187, %v2419, 0
          %v2567 = vsel %vm2427, %v2423, 0
          %2569 = vmatprep.subr.bf16.mxu0 0
          %2570 = vmatpush1.bf16.msra.mxu0 %v2567
          %2571 = vmatprep.subr.bf16.mxu0 0
          %2572 = vmatpush1.bf16.msra.mxu0 0
          %2573 = vmatprep.subr.bf16.mxu0 0
          %2574 = vmatpush1.bf16.msra.mxu0 0
          %2575 = vmatprep.subr.bf16.mxu0 0
          %2576 = vmatpush1.bf16.msra.mxu0 0
          %2577 = vmatprep.subr.bf16.mxu0 0
          %2578 = vmatpush1.bf16.msra.mxu0 0
          %2579 = vmatprep.subr.bf16.mxu0 0
          %2580 = vmatpush1.bf16.msra.mxu0 0
          %2581 = vmatprep.subr.bf16.mxu0 0
          %2582 = vmatpush1.bf16.msra.mxu0 0
          %2583 = vmatprep.subr.bf16.mxu0 0
          %2584 = vmatpush1.bf16.msra.mxu0 0
          %2585 = vmatprep.subr.bf16.mxu0 0
          %2586 = vmatpush1.bf16.msra.mxu0 0
          %2587 = vmatprep.subr.bf16.mxu0 0
          %2588 = vmatpush1.bf16.msra.mxu0 0
          %2589 = vmatprep.subr.bf16.mxu0 0
          %2590 = vmatpush1.bf16.msra.mxu0 0
          %2591 = vmatprep.subr.bf16.mxu0 0
          %2592 = vmatpush1.bf16.msra.mxu0 0
          %2593 = vmatprep.subr.bf16.mxu0 0
          %2594 = vmatpush1.bf16.msra.mxu0 0
          %2595 = vmatprep.subr.bf16.mxu0 0
          %2596 = vmatpush1.bf16.msra.mxu0 0
          %2597 = vmatprep.subr.bf16.mxu0 0
          %2598 = vmatpush1.bf16.msra.mxu0 0
          %2599 = vmatprep.subr.bf16.mxu0 0
          %2600 = vmatpush1.bf16.msra.mxu0 0
          %2601 = vmatprep.mubr.bf16.mxu0 0
          %2602 = vmatmul.mubr.bf16.gmra.mrb[0].mxu0 %v2564
          %v2603 = vpop.f32.mrb[0].mxu0
          %v2604 = vadd.f32 0.0, %v2603
          %v2605 = vpop.f32.mrb[0].mxu0
          %v2606 = vpop.f32.mrb[0].mxu0
          %v2607 = vpop.f32.mrb[0].mxu0
          %2608 = vdwg.mxu0
          %v2609 = vpack.c.bf16 %v2466, %v2466
          %v2610 = vpack.c.bf16 %v2512, %v2512
          %v2611 = vpack.c.bf16 %v2558, %v2558
          %v2612 = vpack.c.bf16 %v2604, %v2604
          %v2613 = vld [vmem:[%s1189] sm:$0xf]
          %v2614 = vld [vmem:[%s1189 + $0x4] sm:$0xf]
          %v2615 = vld [vmem:[%s1189 + $0x8] sm:$0xf]
          %v2616 = vld [vmem:[%s1189 + $0xc] sm:$0xf]
          %v2618 = vsel %vm2187, %v2609, 0
          %v2621 = vsel %vm2427, %v2613, 0
          %2623 = vmatprep.subr.bf16.mxu0 0
          %2624 = vmatpush1.bf16.msra.mxu0 %v2621
          %2625 = vmatprep.subr.bf16.mxu0 0
          %2626 = vmatpush1.bf16.msra.mxu0 0
          %2627 = vmatprep.subr.bf16.mxu0 0
          %2628 = vmatpush1.bf16.msra.mxu0 0
          %2629 = vmatprep.subr.bf16.mxu0 0
          %2630 = vmatpush1.bf16.msra.mxu0 0
          %2631 = vmatprep.subr.bf16.mxu0 0
          %2632 = vmatpush1.bf16.msra.mxu0 0
          %2633 = vmatprep.subr.bf16.mxu0 0
          %2634 = vmatpush1.bf16.msra.mxu0 0
          %2635 = vmatprep.subr.bf16.mxu0 0
          %2636 = vmatpush1.bf16.msra.mxu0 0
          %2637 = vmatprep.subr.bf16.mxu0 0
          %2638 = vmatpush1.bf16.msra.mxu0 0
          %2639 = vmatprep.subr.bf16.mxu0 0
          %2640 = vmatpush1.bf16.msra.mxu0 0
          %2641 = vmatprep.subr.bf16.mxu0 0
          %2642 = vmatpush1.bf16.msra.mxu0 0
          %2643 = vmatprep.subr.bf16.mxu0 0
          %2644 = vmatpush1.bf16.msra.mxu0 0
          %2645 = vmatprep.subr.bf16.mxu0 0
          %2646 = vmatpush1.bf16.msra.mxu0 0
          %2647 = vmatprep.subr.bf16.mxu0 0
          %2648 = vmatpush1.bf16.msra.mxu0 0
          %2649 = vmatprep.subr.bf16.mxu0 0
          %2650 = vmatpush1.bf16.msra.mxu0 0
          %2651 = vmatprep.subr.bf16.mxu0 0
          %2652 = vmatpush1.bf16.msra.mxu0 0
          %2653 = vmatprep.subr.bf16.mxu0 0
          %2654 = vmatpush1.bf16.msra.mxu0 0
          %2655 = vmatprep.mubr.bf16.mxu0 0
          %2656 = vmatmul.mubr.bf16.gmra.mrb[0].mxu0 %v2618
          %v2657 = vpop.f32.mrb[0].mxu0
          %v2658 = vadd.f32 0.0, %v2657
          %v2659 = vpop.f32.mrb[0].mxu0
          %v2660 = vpop.f32.mrb[0].mxu0
          %v2661 = vpop.f32.mrb[0].mxu0
          %2662 = vdwg.mxu0
          %v2664 = vsel %vm2187, %v2610, 0
          %v2667 = vsel %vm2427, %v2614, 0
          %2669 = vmatprep.subr.bf16.mxu0 0
          %2670 = vmatpush1.bf16.msra.mxu0 %v2667
          %2671 = vmatprep.subr.bf16.mxu0 0
          %2672 = vmatpush1.bf16.msra.mxu0 0
          %2673 = vmatprep.subr.bf16.mxu0 0
          %2674 = vmatpush1.bf16.msra.mxu0 0
          %2675 = vmatprep.subr.bf16.mxu0 0
          %2676 = vmatpush1.bf16.msra.mxu0 0
          %2677 = vmatprep.subr.bf16.mxu0 0
          %2678 = vmatpush1.bf16.msra.mxu0 0
          %2679 = vmatprep.subr.bf16.mxu0 0
          %2680 = vmatpush1.bf16.msra.mxu0 0
          %2681 = vmatprep.subr.bf16.mxu0 0
          %2682 = vmatpush1.bf16.msra.mxu0 0
          %2683 = vmatprep.subr.bf16.mxu0 0
          %2684 = vmatpush1.bf16.msra.mxu0 0
          %2685 = vmatprep.subr.bf16.mxu0 0
          %2686 = vmatpush1.bf16.msra.mxu0 0
          %2687 = vmatprep.subr.bf16.mxu0 0
          %2688 = vmatpush1.bf16.msra.mxu0 0
          %2689 = vmatprep.subr.bf16.mxu0 0
          %2690 = vmatpush1.bf16.msra.mxu0 0
          %2691 = vmatprep.subr.bf16.mxu0 0
          %2692 = vmatpush1.bf16.msra.mxu0 0
          %2693 = vmatprep.subr.bf16.mxu0 0
          %2694 = vmatpush1.bf16.msra.mxu0 0
          %2695 = vmatprep.subr.bf16.mxu0 0
          %2696 = vmatpush1.bf16.msra.mxu0 0
          %2697 = vmatprep.subr.bf16.mxu0 0
          %2698 = vmatpush1.bf16.msra.mxu0 0
          %2699 = vmatprep.subr.bf16.mxu0 0
          %2700 = vmatpush1.bf16.msra.mxu0 0
          %2701 = vmatprep.mubr.bf16.mxu0 0
          %2702 = vmatmul.mubr.bf16.gmra.mrb[0].mxu0 %v2664
          %v2703 = vpop.f32.mrb[0].mxu0
          %v2704 = vadd.f32 0.0, %v2703
          %v2705 = vpop.f32.mrb[0].mxu0
          %v2706 = vpop.f32.mrb[0].mxu0
          %v2707 = vpop.f32.mrb[0].mxu0
          %2708 = vdwg.mxu0
          %v2710 = vsel %vm2187, %v2611, 0
          %v2713 = vsel %vm2427, %v2615, 0
          %2715 = vmatprep.subr.bf16.mxu0 0
          %2716 = vmatpush1.bf16.msra.mxu0 %v2713
          %2717 = vmatprep.subr.bf16.mxu0 0
          %2718 = vmatpush1.bf16.msra.mxu0 0
          %2719 = vmatprep.subr.bf16.mxu0 0
          %2720 = vmatpush1.bf16.msra.mxu0 0
          %2721 = vmatprep.subr.bf16.mxu0 0
          %2722 = vmatpush1.bf16.msra.mxu0 0
          %2723 = vmatprep.subr.bf16.mxu0 0
          %2724 = vmatpush1.bf16.msra.mxu0 0
          %2725 = vmatprep.subr.bf16.mxu0 0
          %2726 = vmatpush1.bf16.msra.mxu0 0
          %2727 = vmatprep.subr.bf16.mxu0 0
          %2728 = vmatpush1.bf16.msra.mxu0 0
          %2729 = vmatprep.subr.bf16.mxu0 0
          %2730 = vmatpush1.bf16.msra.mxu0 0
          %2731 = vmatprep.subr.bf16.mxu0 0
          %2732 = vmatpush1.bf16.msra.mxu0 0
          %2733 = vmatprep.subr.bf16.mxu0 0
          %2734 = vmatpush1.bf16.msra.mxu0 0
          %2735 = vmatprep.subr.bf16.mxu0 0
          %2736 = vmatpush1.bf16.msra.mxu0 0
          %2737 = vmatprep.subr.bf16.mxu0 0
          %2738 = vmatpush1.bf16.msra.mxu0 0
          %2739 = vmatprep.subr.bf16.mxu0 0
          %2740 = vmatpush1.bf16.msra.mxu0 0
          %2741 = vmatprep.subr.bf16.mxu0 0
          %2742 = vmatpush1.bf16.msra.mxu0 0
          %2743 = vmatprep.subr.bf16.mxu0 0
          %2744 = vmatpush1.bf16.msra.mxu0 0
          %2745 = vmatprep.subr.bf16.mxu0 0
          %2746 = vmatpush1.bf16.msra.mxu0 0
          %2747 = vmatprep.mubr.bf16.mxu0 0
          %2748 = vmatmul.mubr.bf16.gmra.mrb[0].mxu0 %v2710
          %v2749 = vpop.f32.mrb[0].mxu0
          %v2750 = vadd.f32 0.0, %v2749
          %v2751 = vpop.f32.mrb[0].mxu0
          %v2752 = vpop.f32.mrb[0].mxu0
          %v2753 = vpop.f32.mrb[0].mxu0
          %2754 = vdwg.mxu0
          %v2756 = vsel %vm2187, %v2612, 0
          %v2759 = vsel %vm2427, %v2616, 0
          %2761 = vmatprep.subr.bf16.mxu0 0
          %2762 = vmatpush1.bf16.msra.mxu0 %v2759
          %2763 = vmatprep.subr.bf16.mxu0 0
          %2764 = vmatpush1.bf16.msra.mxu0 0
          %2765 = vmatprep.subr.bf16.mxu0 0
          %2766 = vmatpush1.bf16.msra.mxu0 0
          %2767 = vmatprep.subr.bf16.mxu0 0
          %2768 = vmatpush1.bf16.msra.mxu0 0
          %2769 = vmatprep.subr.bf16.mxu0 0
          %2770 = vmatpush1.bf16.msra.mxu0 0
          %2771 = vmatprep.subr.bf16.mxu0 0
          %2772 = vmatpush1.bf16.msra.mxu0 0
          %2773 = vmatprep.subr.bf16.mxu0 0
          %2774 = vmatpush1.bf16.msra.mxu0 0
          %2775 = vmatprep.subr.bf16.mxu0 0
          %2776 = vmatpush1.bf16.msra.mxu0 0
          %2777 = vmatprep.subr.bf16.mxu0 0
          %2778 = vmatpush1.bf16.msra.mxu0 0
          %2779 = vmatprep.subr.bf16.mxu0 0
          %2780 = vmatpush1.bf16.msra.mxu0 0
          %2781 = vmatprep.subr.bf16.mxu0 0
          %2782 = vmatpush1.bf16.msra.mxu0 0
          %2783 = vmatprep.subr.bf16.mxu0 0
          %2784 = vmatpush1.bf16.msra.mxu0 0
          %2785 = vmatprep.subr.bf16.mxu0 0
          %2786 = vmatpush1.bf16.msra.mxu0 0
          %2787 = vmatprep.subr.bf16.mxu0 0
          %2788 = vmatpush1.bf16.msra.mxu0 0
          %2789 = vmatprep.subr.bf16.mxu0 0
          %2790 = vmatpush1.bf16.msra.mxu0 0
          %2791 = vmatprep.subr.bf16.mxu0 0
          %2792 = vmatpush1.bf16.msra.mxu0 0
          %2793 = vmatprep.mubr.bf16.mxu0 0
          %2794 = vmatmul.mubr.bf16.gmra.mrb[0].mxu0 %v2756
          %v2795 = vpop.f32.mrb[0].mxu0
          %v2796 = vadd.f32 0.0, %v2795
          %v2797 = vpop.f32.mrb[0].mxu0
          %v2798 = vpop.f32.mrb[0].mxu0
          %v2799 = vpop.f32.mrb[0].mxu0
          %2800 = vdwg.mxu0
          %v2801 = vsel %vm1469, %v2658, 0.0
          %v2802 = vsel %vm1469, %v2704, 0.0
          %v2803 = vadd.f32 %v2801, %v2802
          %v2804 = vsel %vm1469, %v2750, 0.0
          %v2805 = vadd.f32 %v2803, %v2804
          %v2806 = vsel %vm1469, %v2796, 0.0
          %v2807 = vadd.f32 %v2805, %v2806
          %v2808 = vld [vmem:[%s1198] sm:$0x1]
          %v2810 = vlaneseq
          %v2811 = vshrl.u32 %v2810, 7
          %v2812 = vsub.s32 0, %v2811
          %v2813 = vrot.slane %v2808, %v2812
          %v2815 = vadd.f32 %v2807, %v2813
          %v2816 = vadd.f32 %v1411, %v2815
          %v2817 = vld [vmem:[%s1207] sm:$0x1]
          %v2818 = vld [vmem:[%s1216] sm:$0x1]
          %v2819 = vsel %vm1469, %v2816, 0.0
          %2820 = vadd.xlane.f32.xlu0 %v2819
          %v2821 = vpop.xlane.xlu0 %2820
          %v2822 = vmul.f32 %v2816, %v2816
          %v2823 = vsel %vm1469, %v2822, 0.0
          %2824 = vadd.xlane.f32.xlu0 %v2823
          %v2825 = vpop.xlane.xlu0 %2824
          %v2826 = vmul.f32 %v2821, 0.03125
          %v2827 = vmul.f32 %v2825, 0.03125
          %v2828 = vmul.f32 %v2826, %v2826
          %v2829 = vsub.f32 %v2827, %v2828
          %v2830 = vsub.f32 %v2816, %v2826
          %v2831 = vadd.f32 %v2829, 1e-05
          %v2832 = vrsqrt.pop %v2831
          %v2833 = vmul.f32 %v2830, %v2832
          %v2835 = vlaneseq
          %v2836 = vshrl.u32 %v2835, 7
          %v2837 = vsub.s32 0, %v2836
          %v2838 = vrot.slane %v2817, %v2837
          %v2840 = vmul.f32 %v2833, %v2838
          %v2842 = vlaneseq
          %v2843 = vshrl.u32 %v2842, 7
          %v2844 = vsub.s32 0, %v2843
          %v2845 = vrot.slane %v2818, %v2844
          %v2847 = vadd.f32 %v2840, %v2845
          %v2848 = vpack.c.bf16 %v2847, %v2847
          %v2849 = vld [vmem:[%s1227] sm:$0xf]
          %v2850 = vld [vmem:[%s1227 + $0x4] sm:$0xf]
          %v2851 = vld [vmem:[%s1227 + $0x8] sm:$0xf]
          %v2852 = vld [vmem:[%s1227 + $0xc] sm:$0xf]
          %v2853 = vld [vmem:[%s1236] sm:$0x1]
          %v2855 = vlaneseq
          %v2856 = vshrl.u32 %v2855, 7
          %v2857 = vsub.s32 0, %v2856
          %v2858 = vrot.slane %v2853, %v2857
          %v2864 = vunpack.c.l.b16 %v2849
          %v2865 = vunpack.c.l.b16 %v2850
          %v2866 = vunpack.c.l.b16 %v2851
          %v2867 = vunpack.c.l.b16 %v2852
          %v2868 = vpack.c.b16 %v2865, %v2864
          %v2869 = vpack.c.b16 %v2867, %v2866
          %v2873 = vsel %vm1469, %v2848, 0
          %2875 = vmatprep.subr.bf16.mxu0 0
          %2876 = vmatpush1.bf16.msra.mxu0 %v2868
          %2877 = vmatprep.subr.bf16.mxu0 0
          %2878 = vmatpush1.bf16.msra.mxu0 %v2869
          %2879 = vmatprep.subr.bf16.mxu0 0
          %2880 = vmatpush1.bf16.msra.mxu0 0
          %2881 = vmatprep.subr.bf16.mxu0 0
          %2882 = vmatpush1.bf16.msra.mxu0 0
          %2883 = vmatprep.subr.bf16.mxu0 0
          %2884 = vmatpush1.bf16.msra.mxu0 0
          %2885 = vmatprep.subr.bf16.mxu0 0
          %2886 = vmatpush1.bf16.msra.mxu0 0
          %2887 = vmatprep.subr.bf16.mxu0 0
          %2888 = vmatpush1.bf16.msra.mxu0 0
          %2889 = vmatprep.subr.bf16.mxu0 0
          %2890 = vmatpush1.bf16.msra.mxu0 0
          %2891 = vmatprep.subr.bf16.mxu0 0
          %2892 = vmatpush1.bf16.msra.mxu0 0
          %2893 = vmatprep.subr.bf16.mxu0 0
          %2894 = vmatpush1.bf16.msra.mxu0 0
          %2895 = vmatprep.subr.bf16.mxu0 0
          %2896 = vmatpush1.bf16.msra.mxu0 0
          %2897 = vmatprep.subr.bf16.mxu0 0
          %2898 = vmatpush1.bf16.msra.mxu0 0
          %2899 = vmatprep.subr.bf16.mxu0 0
          %2900 = vmatpush1.bf16.msra.mxu0 0
          %2901 = vmatprep.subr.bf16.mxu0 0
          %2902 = vmatpush1.bf16.msra.mxu0 0
          %2903 = vmatprep.subr.bf16.mxu0 0
          %2904 = vmatpush1.bf16.msra.mxu0 0
          %2905 = vmatprep.subr.bf16.mxu0 0
          %2906 = vmatpush1.bf16.msra.mxu0 0
          %2907 = vmatprep.mubr.bf16.mxu0 0
          %2908 = vmatmul.mubr.bf16.gmra.mrb[0].mxu0 %v2873
          %v2909 = vpop.f32.mrb[0].mxu0
          %v2910 = vadd.f32 %v2858, %v2909
          %v2911 = vpop.f32.mrb[0].mxu0
          %v2912 = vpop.f32.mrb[0].mxu0
          %v2913 = vpop.f32.mrb[0].mxu0
          %2914 = vdwg.mxu0
          %v2915 = vmul.f32 %v2910, 0.5
          %v2916 = vmul.f32 %v2910, 0.044715
          %v2917 = vmul.f32 %v2916, %v2910
          %v2918 = vmul.f32 %v2917, %v2910
          %v2919 = vadd.f32 %v2910, %v2918
          %v2920 = vmul.f32 %v2919, 0.7978846
          %v2921 = vtanh.pop %v2920
          %v2922 = vadd.f32 %v2921, 1.0
          %v2923 = vmul.f32 %v2915, %v2922
          %v2924 = vpack.c.bf16 %v2923, %v2923
          %v2925 = vld [vmem:[%s1247] sm:$0xf]
          %v2926 = vld [vmem:[%s1247 + $0x4] sm:$0xf]
          %v2927 = vld [vmem:[%s1247 + $0x8] sm:$0xf]
          %v2928 = vld [vmem:[%s1247 + $0xc] sm:$0xf]
          %v2929 = vld [vmem:[%s1247 + $0x10] sm:$0xf]
          %v2930 = vld [vmem:[%s1247 + $0x14] sm:$0xf]
          %v2931 = vld [vmem:[%s1247 + $0x18] sm:$0xf]
          %v2932 = vld [vmem:[%s1247 + $0x1c] sm:$0xf]
          %v2933 = vld [vmem:[%s1256] sm:$0x1]
          %v2935 = vlaneseq
          %v2936 = vshrl.u32 %v2935, 7
          %v2937 = vsub.s32 0, %v2936
          %v2938 = vrot.slane %v2933, %v2937
          %v2948 = vunpack.c.l.b16 %v2925
          %v2949 = vunpack.c.l.b16 %v2926
          %v2950 = vunpack.c.l.b16 %v2927
          %v2951 = vunpack.c.l.b16 %v2928
          %v2952 = vunpack.c.l.b16 %v2929
          %v2953 = vunpack.c.l.b16 %v2930
          %v2954 = vunpack.c.l.b16 %v2931
          %v2955 = vunpack.c.l.b16 %v2932
          %v2956 = vpack.c.b16 %v2949, %v2948
          %v2957 = vpack.c.b16 %v2951, %v2950
          %v2958 = vpack.c.b16 %v2953, %v2952
          %v2959 = vpack.c.b16 %v2955, %v2954
          %vm2964 = vcmask 523264
          %v2966 = vsel %vm2964, %v2924, 0
          %2968 = vmatprep.subr.bf16.mxu0 0
          %2969 = vmatpush1.bf16.msra.mxu0 %v2956
          %2970 = vmatprep.subr.bf16.mxu0 0
          %2971 = vmatpush1.bf16.msra.mxu0 %v2957
          %2972 = vmatprep.subr.bf16.mxu0 0
          %2973 = vmatpush1.bf16.msra.mxu0 %v2958
          %2974 = vmatprep.subr.bf16.mxu0 0
          %2975 = vmatpush1.bf16.msra.mxu0 %v2959
          %2976 = vmatprep.subr.bf16.mxu0 0
          %2977 = vmatpush1.bf16.msra.mxu0 0
          %2978 = vmatprep.subr.bf16.mxu0 0
          %2979 = vmatpush1.bf16.msra.mxu0 0
          %2980 = vmatprep.subr.bf16.mxu0 0
          %2981 = vmatpush1.bf16.msra.mxu0 0
          %2982 = vmatprep.subr.bf16.mxu0 0
          %2983 = vmatpush1.bf16.msra.mxu0 0
          %2984 = vmatprep.subr.bf16.mxu0 0
          %2985 = vmatpush1.bf16.msra.mxu0 0
          %2986 = vmatprep.subr.bf16.mxu0 0
          %2987 = vmatpush1.bf16.msra.mxu0 0
          %2988 = vmatprep.subr.bf16.mxu0 0
          %2989 = vmatpush1.bf16.msra.mxu0 0
          %2990 = vmatprep.subr.bf16.mxu0 0
          %2991 = vmatpush1.bf16.msra.mxu0 0
          %2992 = vmatprep.subr.bf16.mxu0 0
          %2993 = vmatpush1.bf16.msra.mxu0 0
          %2994 = vmatprep.subr.bf16.mxu0 0
          %2995 = vmatpush1.bf16.msra.mxu0 0
          %2996 = vmatprep.subr.bf16.mxu0 0
          %2997 = vmatpush1.bf16.msra.mxu0 0
          %2998 = vmatprep.subr.bf16.mxu0 0
          %2999 = vmatpush1.bf16.msra.mxu0 0
          %3000 = vmatprep.mubr.bf16.mxu0 0
          %3001 = vmatmul.mubr.bf16.gmra.mrb[0].mxu0 %v2966
          %v3002 = vpop.f32.mrb[0].mxu0
          %v3003 = vadd.f32 %v2938, %v3002
          %v3004 = vpop.f32.mrb[0].mxu0
          %v3005 = vpop.f32.mrb[0].mxu0
          %v3006 = vpop.f32.mrb[0].mxu0
          %3007 = vdwg.mxu0
          %v3008 = vadd.f32 %v2847, %v3003
          %v3009 = vld [vmem:[%s1265] sm:$0x1]
          %v3010 = vld [vmem:[%s1274] sm:$0x1]
          %v3011 = vsel %vm1469, %v3008, 0.0
          %3012 = vadd.xlane.f32.xlu0 %v3011
          %v3013 = vpop.xlane.xlu0 %3012
          %v3014 = vmul.f32 %v3008, %v3008
          %v3015 = vsel %vm1469, %v3014, 0.0
          %3016 = vadd.xlane.f32.xlu0 %v3015
          %v3017 = vpop.xlane.xlu0 %3016
          %v3018 = vmul.f32 %v3013, 0.03125
          %v3019 = vmul.f32 %v3017, 0.03125
          %v3020 = vmul.f32 %v3018, %v3018
          %v3021 = vsub.f32 %v3019, %v3020
          %v3022 = vsub.f32 %v3008, %v3018
          %v3023 = vadd.f32 %v3021, 1e-05
          %v3024 = vrsqrt.pop %v3023
          %v3025 = vmul.f32 %v3022, %v3024
          %v3027 = vlaneseq
          %v3028 = vshrl.u32 %v3027, 7
          %v3029 = vsub.s32 0, %v3028
          %v3030 = vrot.slane %v3009, %v3029
          %v3032 = vmul.f32 %v3025, %v3030
          %v3034 = vlaneseq
          %v3035 = vshrl.u32 %v3034, 7
          %v3036 = vsub.s32 0, %v3035
          %v3037 = vrot.slane %v3010, %v3036
          %v3039 = vadd.f32 %v3032, %v3037
          %3040 = vst.msk [vmem:[#allocation2] sm:$0xff] %vm1469, %v3039
        $region112: #{tpu_custom_call.1} parent=103 // pred_fallthru
          _
        %v3041 = vld [vmem:[#allocation2] sm:$0xff]
        %vm3042 = vcmask 261120
        %3043 = vst.msk [vmem:[%s1114] sm:$0xff] %vm3042, %v3041
        %s3044 = sand.u32 %s686, 1
        %s3045 = scalar_lea.sflag [#allocation6], %s3044
        %s3046 = sand.u32 %s686, 1
        %s3047 = smul.addr %s3046, 8
        %s3048 = scalar_lea.vmem [#allocation5], %s3047
        // Predicated region
        $region113: #{tpu_custom_call.1} parent=103 // pred_check
          %p3049 = pneg %p696
        $region114: #{tpu_custom_call.1} parent=103 // pred_check_branch
          %3051 = sbr.rel (%p3049) target = $region116
        $region115: #{tpu_custom_call.1} parent=103 // pred_region
          %s3053 = ssub.s32 128, 128
          %3054 = vsyncadd %s3045, %s3053
          %s3055 = smul.addr %s47, 2
          %s3056 = sadd.s32 %s46, %s3055
          %s3057 = smul.addr %s3056, 128
          %s3058 = scalar_lea.hbm %s22, %s3057
          %s3060 = sshll.u32 %s3048, 4
          %s3061 = int_to_ptr.vmem [resolvable:$true] %s3060
          %3063 = dma.vmem_to_hbm [thread:$0]  %s3061, 128, %s3058, %s3045
        $region116: #{tpu_custom_call.1} parent=103 // pred_fallthru
          _
      $region104: #{tpu_custom_call.1} parent=5 // pred_fallthru
        _
      %p3064 = scmp.le.s32.totalorder 2, %s37
      // Predicated region
      $region117: #{tpu_custom_call.1} parent=5 // pred_check
        %p3065 = pneg %p3064
      $region118: #{tpu_custom_call.1} parent=5 // pred_check_branch
        %3067 = sbr.rel (%p3065) target = $region120
      $region119: #{tpu_custom_call.1} parent=5 // pred_region
        %s3068 = ssub.s32 %s37, 2
        // Predicated region
        $region121: #{tpu_custom_call.1} parent=119 // pred_check
          %p3069 = pneg %p702
        $region122: #{tpu_custom_call.1} parent=119 // pred_check_branch
          %3071 = sbr.rel (%p3069) target = $region124
        $region123: #{tpu_custom_call.1} parent=119 // pred_region
          %s3072 = sand.u32 %s687, 1
          %s3073 = scalar_lea.sflag [#allocation6], %s3072
          %s3074 = sand.u32 %s687, 1
          %s3075 = smul.addr %s3074, 8
          %s3076 = scalar_lea.vmem [#allocation5], %s3075
          %3077 = dma.done %s3073, 128
        $region124: #{tpu_custom_call.1} parent=119 // pred_fallthru
          _
      $region120: #{tpu_custom_call.1} parent=5 // pred_fallthru
        _
    $region6: #{tpu_custom_call.1} parent=1 // loop_footer
      %s41 = sadd.s32 1, %s37
    $region7: #{tpu_custom_call.1} parent=1 // loop_footer_branch
      %36 = sbr.rel target = $region3
    $region8: #{tpu_custom_call.1} parent=1 // loop_exit
      _
    %3078 = vsyncpa [#allocation6], 1
    %s3079 = scalar_lea.sflag [#allocation6], 1
    %3080 = vsyncpa %s3079, 1

</llo_original>
